<compile_context>
chip_gen: v7x
topology: tpu7x:2x2x1
jax: 0.10.0
libtpu: 0.0.40
codegen_flags: <defaults>
</compile_context>

<pallas_src>
import jax
import jax.numpy as jnp
import numpy as np
from jax.experimental import pallas as pl
from jax.experimental.pallas import tpu as pltpu

# ----------------------- problem configuration -----------------------
EMBEDDING_SIZES = ((5, 2), (7, 3))    # (nb_category, rank) per categorical feature
N_CAT = len(EMBEDDING_SIZES)
NCP = 8                               # padded category count (sublane-aligned)
FRACTION_DIAGONAL = 0.9
assert max(nc for nc, _ in EMBEDDING_SIZES) <= NCP, \
    "nb_category exceeds padded table size NCP; raise NCP (keep a multiple of 8)."


# ----------------------------- Pallas kernel --------------------------------
def _index_kernel(xy_ref, ctab_ref, out_ref):
    """One batch (lane) tile of IndexKernel.forward.

    xy_ref  : (2*N_CAT, TILE_B) int32   rows [0, N_CAT) = x features,
                                        rows [N_CAT, 2*N_CAT) = y features
    ctab_ref: (N_CAT, NCP, NCP) float32 zero-padded per-feature covariance tables
    out_ref : (N_CAT, TILE_B)  float32  out[f, i] = C_f[x_f[i], y_f[i]]
    """
    tile_b = xy_ref.shape[1]
    # Category ids along the sublane axis, shared by every feature's one-hots.
    cat_ids = jax.lax.broadcasted_iota(jnp.int32, (NCP, tile_b), 0)

    for f in range(N_CAT):                        # N_CAT tiny & static: unrolled
        x = xy_ref[f:f + 1, :]                    # (1, TILE_B) i32
        y = xy_ref[N_CAT + f:N_CAT + f + 1, :]    # (1, TILE_B) i32

        # Full-vreg (NCP, TILE_B) one-hot tiles (VPU compares + casts).
        onehot_y = (cat_ids == y).astype(jnp.float32)
        onehot_x = (cat_ids == x).astype(jnp.float32)

        # T[a, i] = C_f[a, y_i]  -- tiny matmul on the otherwise idle MXU.
        t = jnp.dot(ctab_ref[f], onehot_y,
                    preferred_element_type=jnp.float32,
                    precision=jax.lax.Precision.HIGHEST)   # (NCP, TILE_B)

        # out[f, i] = T[x_i, i] = sum_a onehot_x[a, i] * T[a, i]
        # (VPU multiply + cross-sublane reduce on the XLU; lane-dense store.)
        out_ref[f:f + 1, :] = jnp.sum(onehot_x * t, axis=0, keepdims=True)


# ------------------------------ wrapper --------------------------------------
def index_kernel_forward(x_cat, y_cat, params, *, tile_b=None):
    """IndexKernel.forward: (B, N_CAT) categorical index pairs -> (B, N_CAT) covariances."""
    batch = x_cat.shape[0]
    if len(params) == 0:
        return jnp.zeros((batch, 0), jnp.float32)
    assert len(params) == N_CAT
    assert x_cat.shape == (batch, N_CAT) and y_cat.shape == (batch, N_CAT)
    if tile_b is None:
        tile_b = batch            # single maximal block (best on 1-TC v5e/v6e)
    assert batch % tile_b == 0
    assert tile_b == batch or tile_b % 128 == 0, "batch tiles must be lane-aligned"

    # --- parameter plumbing (tiny; stays in plain JAX) -----------------------
    # IndexKernelSingle.forward table construction, zero-padded to (NCP, NCP).
    tables = []
    for sqrt_covar_factor, std in params:
        nb = sqrt_covar_factor.shape[0]
        covar_factor = sqrt_covar_factor * sqrt_covar_factor
        cmat = covar_factor @ covar_factor.T + jnp.diag(std * std)
        tables.append(jnp.zeros((NCP, NCP), jnp.float32).at[:nb, :nb].set(cmat))
    ctab = jnp.stack(tables, axis=0)                         # (N_CAT, NCP, NCP)

    # --- input plumbing: feature-major, batch on lanes, x/y merged -----------
    nb_cats = jnp.asarray([nc for nc, _ in EMBEDDING_SIZES], jnp.int32)
    x_c = jnp.clip(x_cat.astype(jnp.int32), 0, nb_cats - 1)  # fancy-index clamp
    y_c = jnp.clip(y_cat.astype(jnp.int32), 0, nb_cats - 1)
    xy = jnp.concatenate([x_c.T, y_c.T], axis=0)             # (2*N_CAT, B) i32

    grid = (batch // tile_b,)
    out = pl.pallas_call(
        _index_kernel,
        out_shape=jax.ShapeDtypeStruct((N_CAT, batch), jnp.float32),
        grid_spec=pltpu.PrefetchScalarGridSpec(
            num_scalar_prefetch=0,
            grid=grid,
            in_specs=[
                # merged x/y indices, blocked over the lane (batch) axis
                pl.BlockSpec((2 * N_CAT, tile_b), lambda i: (0, i)),
                # covariance tables: tiny, whole-array VMEM block every step
                pl.BlockSpec((N_CAT, NCP, NCP), lambda i: (0, 0, 0)),
            ],
            out_specs=pl.BlockSpec((N_CAT, tile_b), lambda i: (0, i)),
        ),
        compiler_params=pltpu.CompilerParams(
            # batch axis is embarrassingly parallel -> v7x's 2 TCs split it;
            # on v5e/v6e (1 TC) the default tile_b=batch makes this a single step.
            dimension_semantics=("parallel",)),
    )(xy, ctab)
    return out.T                                             # (B, N_CAT)


# -------------------- deterministic parameter construction -------------------
def init_index_kernel_params(key):
    """IndexKernelSingle parameters.  The module initializes them to constants;
    a small deterministic perturbation is added so the numerical check actually
    discriminates between different table entries."""
    params = []
    keys = jax.random.split(key, 2 * N_CAT)
    for i, (nb_category, rank) in enumerate(EMBEDDING_SIZES):
        w = np.sqrt((1.0 - FRACTION_DIAGONAL) / np.sqrt(rank))
        scf = w * (1.0 + 0.25 * jax.random.normal(keys[2 * i],
                                                  (nb_category, rank), jnp.float32))
        std = FRACTION_DIAGONAL * (1.0 + 0.25 * jax.random.normal(keys[2 * i + 1],
                                                                  (nb_category,),
                                                                  jnp.float32))
        params.append((scf.astype(jnp.float32), std.astype(jnp.float32)))
    return params


# ------------------------------ pure-JAX reference ---------------------------
def reference_forward(x_cat, y_cat, params):
    covs = []
    for i, (sqrt_covar_factor, std) in enumerate(params):
        covar_factor = sqrt_covar_factor * sqrt_covar_factor
        covariance = covar_factor @ covar_factor.T + jnp.diag(std * std)
        covs.append(covariance[x_cat[:, i], y_cat[:, i]])
    return jnp.stack(covs, axis=-1)


# ----------------------------------- main ------------------------------------
if __name__ == "__main__":
    B = 1024   # batch of (x, y) pairs -> each (NCP, B) working tile = 8 full vregs
    key = jax.random.PRNGKey(0)
    k_params, k_x, k_y = jax.random.split(key, 3)
    params = init_index_kernel_params(k_params)

    kxs = jax.random.split(k_x, N_CAT)
    kys = jax.random.split(k_y, N_CAT)
    x_cat = jnp.concatenate(
        [jax.random.randint(kxs[i], (B, 1), 0, nc, jnp.int32)
         for i, (nc, _) in enumerate(EMBEDDING_SIZES)], axis=1)
    y_cat = jnp.concatenate(
        [jax.random.randint(kys[i], (B, 1), 0, nc, jnp.int32)
         for i, (nc, _) in enumerate(EMBEDDING_SIZES)], axis=1)

    out = index_kernel_forward(x_cat, y_cat, params)
    out = jax.block_until_ready(out)

    ref = reference_forward(x_cat, y_cat, params)
    np.testing.assert_allclose(np.asarray(out), np.asarray(ref),
                               rtol=1e-4, atol=1e-5)
    print("KERNEL_OK")
</pallas_src>

<mosaic_0001>
module attributes {stable_mosaic.version = 11 : i64} {
  func.func @_index_kernel(%arg0: i32, %arg1: memref<4x1024xi32, #tpu.memory_space<vmem>>, %arg2: memref<2x8x8xf32, #tpu.memory_space<vmem>>, %arg3: memref<2x1024xf32, #tpu.memory_space<vmem>>) attributes {dimension_semantics = [#tpu.dimension_semantics<parallel>], iteration_bounds = array<i64: 1>, scalar_prefetch = 0 : i64, scratch_operands = 0 : i64, tpu.core_type = #tpu.core_type<tc>, window_params = [{transform_indices = @transform_0, window_bounds = array<i64: 4, 1024>}, {pipeline_mode = #tpu.pipeline_mode<synchronous>, transform_indices = @transform_1, window_bounds = array<i64: 2, 8, 8>}, {transform_indices = @transform_2, window_bounds = array<i64: 2, 1024>}]} {
    %0 = tpu.iota {dimensions = array<i32: 0>} : vector<8x1024xi32>
    %c0 = arith.constant 0 : index
    %c0_0 = arith.constant 0 : index
    %1 = vector.load %arg1[%c0, %c0_0] : memref<4x1024xi32, #tpu.memory_space<vmem>>, vector<1x1024xi32>
    %c2 = arith.constant 2 : index
    %c0_1 = arith.constant 0 : index
    %2 = vector.load %arg1[%c2, %c0_1] : memref<4x1024xi32, #tpu.memory_space<vmem>>, vector<1x1024xi32>
    %3 = vector.broadcast %2 : vector<1x1024xi32> to vector<8x1024xi32>
    %4 = arith.cmpi eq, %0, %3 : vector<8x1024xi32>
    %5 = arith.extui %4 : vector<8x1024xi1> to vector<8x1024xi32>
    %6 = arith.sitofp %5 : vector<8x1024xi32> to vector<8x1024xf32>
    %7 = vector.broadcast %1 : vector<1x1024xi32> to vector<8x1024xi32>
    %8 = arith.cmpi eq, %0, %7 : vector<8x1024xi32>
    %9 = arith.extui %8 : vector<8x1024xi1> to vector<8x1024xi32>
    %10 = arith.sitofp %9 : vector<8x1024xi32> to vector<8x1024xf32>
    %c0_2 = arith.constant 0 : index
    %c0_3 = arith.constant 0 : index
    %c0_4 = arith.constant 0 : index
    %11 = vector.load %arg2[%c0_2, %c0_3, %c0_4] : memref<2x8x8xf32, #tpu.memory_space<vmem>>, vector<1x8x8xf32>
    %12 = vector.shape_cast %11 : vector<1x8x8xf32> to vector<8x8xf32>
    %cst = arith.constant dense<0.000000e+00> : vector<8x1024xf32>
    %13 = tpu.matmul %12, %6, %cst {dimension_numbers = #tpu.dot_dimension_numbers<[1], [0], [0], [1], [0, 0, 1, 1], [], []>, precision = #tpu.contract_precision<fp32>} : vector<8x8xf32>, vector<8x1024xf32>, vector<8x1024xf32> -> vector<8x1024xf32>
    %14 = arith.mulf %10, %13 : vector<8x1024xf32>
    %cst_5 = arith.constant dense<0.000000e+00> : vector<1024xf32>
    %15 = vector.multi_reduction <add>, %14, %cst_5 [0] : vector<8x1024xf32> to vector<1024xf32>
    %16 = vector.shape_cast %15 : vector<1024xf32> to vector<1x1024xf32>
    %c0_6 = arith.constant 0 : index
    %c0_7 = arith.constant 0 : index
    %17 = vector.load %arg3[%c0_6, %c0_7] : memref<2x1024xf32, #tpu.memory_space<vmem>>, vector<1x1024xf32>
    tpu.vector_store %arg3[%c0_6, %c0_7], %16 {strides = array<i32>} : memref<2x1024xf32, #tpu.memory_space<vmem>>, vector<1x1024xf32>,
    %c1 = arith.constant 1 : index
    %c0_8 = arith.constant 0 : index
    %18 = vector.load %arg1[%c1, %c0_8] : memref<4x1024xi32, #tpu.memory_space<vmem>>, vector<1x1024xi32>
    %c3 = arith.constant 3 : index
    %c0_9 = arith.constant 0 : index
    %19 = vector.load %arg1[%c3, %c0_9] : memref<4x1024xi32, #tpu.memory_space<vmem>>, vector<1x1024xi32>
    %20 = vector.broadcast %19 : vector<1x1024xi32> to vector<8x1024xi32>
    %21 = arith.cmpi eq, %0, %20 : vector<8x1024xi32>
    %22 = arith.extui %21 : vector<8x1024xi1> to vector<8x1024xi32>
    %23 = arith.sitofp %22 : vector<8x1024xi32> to vector<8x1024xf32>
    %24 = vector.broadcast %18 : vector<1x1024xi32> to vector<8x1024xi32>
    %25 = arith.cmpi eq, %0, %24 : vector<8x1024xi32>
    %26 = arith.extui %25 : vector<8x1024xi1> to vector<8x1024xi32>
    %27 = arith.sitofp %26 : vector<8x1024xi32> to vector<8x1024xf32>
    %c1_10 = arith.constant 1 : index
    %c0_11 = arith.constant 0 : index
    %c0_12 = arith.constant 0 : index
    %28 = vector.load %arg2[%c1_10, %c0_11, %c0_12] : memref<2x8x8xf32, #tpu.memory_space<vmem>>, vector<1x8x8xf32>
    %29 = vector.shape_cast %28 : vector<1x8x8xf32> to vector<8x8xf32>
    %cst_13 = arith.constant dense<0.000000e+00> : vector<8x1024xf32>
    %30 = tpu.matmul %29, %23, %cst_13 {dimension_numbers = #tpu.dot_dimension_numbers<[1], [0], [0], [1], [0, 0, 1, 1], [], []>, precision = #tpu.contract_precision<fp32>} : vector<8x8xf32>, vector<8x1024xf32>, vector<8x1024xf32> -> vector<8x1024xf32>
    %31 = arith.mulf %27, %30 : vector<8x1024xf32>
    %cst_14 = arith.constant dense<0.000000e+00> : vector<1024xf32>
    %32 = vector.multi_reduction <add>, %31, %cst_14 [0] : vector<8x1024xf32> to vector<1024xf32>
    %33 = vector.shape_cast %32 : vector<1024xf32> to vector<1x1024xf32>
    %c1_15 = arith.constant 1 : index
    %c0_16 = arith.constant 0 : index
    %34 = vector.load %arg3[%c1_15, %c0_16] : memref<2x1024xf32, #tpu.memory_space<vmem>>, vector<1x1024xf32>
    tpu.vector_store %arg3[%c1_15, %c0_16], %33 {strides = array<i32>} : memref<2x1024xf32, #tpu.memory_space<vmem>>, vector<1x1024xf32>,
    return
  }
  func.func @transform_0(%arg0: i32) -> (i32, i32) {
    %c0_i32 = arith.constant 0 : i32
    %c0_i32_0 = arith.constant 0 : i32
    return %c0_i32, %arg0 : i32, i32
  }
  func.func @transform_1(%arg0: i32) -> (i32, i32, i32) {
    %c0_i32 = arith.constant 0 : i32
    %c0_i32_0 = arith.constant 0 : i32
    %c0_i32_1 = arith.constant 0 : i32
    %c0_i32_2 = arith.constant 0 : i32
    return %c0_i32, %c0_i32_0, %c0_i32_1 : i32, i32, i32
  }
  func.func @transform_2(%arg0: i32) -> (i32, i32) {
    %c0_i32 = arith.constant 0 : i32
    %c0_i32_0 = arith.constant 0 : i32
    return %c0_i32, %arg0 : i32, i32
  }
}

</mosaic_0001>

<llo_original>
// kernel: tpu_custom_call.1
$region0: #{tpu_custom_call.1}
  #allocation0 [shape = 'u32[]', space=smem, size = 0x4, offset = 0x4, fixed_abs, tag = 'smem constant byte address 0x4 - core index']
  #allocation1 [shape = 'u32[144,128]{1,0:T(1,128)}', space=vmem, size = 0x12000, scoped, tag = 'internal scratch']
  %s0 = inlined_call_operand.hbm [shape: s32[4,1024], index: 0, kind: input, shape index: {}]
  %s1 = inlined_call_operand.hbm [shape: f32[2,8,8], index: 1, kind: input, shape index: {}]
  %s2 = inlined_call_operand.hbm [shape: f32[2,1024], index: 2, kind: output, shape index: {}]
  %s3 = sld [smem:[#allocation0]]
  $region26: #{tpu_custom_call.1} parent=0
    _
  %s5 = ssub.s32 1, %s3
  %s6 = scalar_select 0, %s5, %s3
  $region1: #{tpu_custom_call.1} parent=0
    #allocation2 [shape = 'u8[16384]{0}', space=vmem, size = 0x4000, scoped, tag = 'input window, operand 0, single buffered']
    #allocation3 [shape = 's32[1]{0}', space=sflag, size = 0x4, scoped, tag = 'scoped memory for tpu_custom_call.1']
    #allocation4 [shape = 's32[1]{0}', space=sflag, size = 0x4, scoped, tag = 'scoped memory for tpu_custom_call.1']
    #allocation5 [shape = 'u8[8192]{0}', space=vmem, size = 0x2000, scoped, tag = 'input window, operand 1, single buffered']
    #allocation6 [shape = 's32[1]{0}', space=sflag, size = 0x4, scoped, tag = 'scoped memory for tpu_custom_call.1']
    #allocation7 [shape = 'u8[8192]{0}', space=vmem, size = 0x2000, scoped, tag = 'output window, operand 0, single buffered']
    %7 = vsyncpa [#allocation3], 0
    %8 = vsyncpa [#allocation6], 0
    %9 = vsyncpa [#allocation4], 0
    // Predicated region
    $region2: #{tpu_custom_call.1} parent=1 // pred_check
      _
    $region3: #{tpu_custom_call.1} parent=1 // pred_check_branch
      %11 = sbr.rel (0) target = $region5
    $region4: #{tpu_custom_call.1} parent=1 // pred_region
      %s13 = ssub.s32 512, 512
      %14 = vsyncadd [#allocation3], %s13
      %s16 = sshll.u32 [#allocation2], 4
      %s17 = int_to_ptr.vmem [resolvable:$true] %s16
      %19 = dma.hbm_to_vmem [thread:$0]  %s0, 512, %s17, [#allocation3]
    $region5: #{tpu_custom_call.1} parent=1 // pred_fallthru
      _
    // Predicated region
    $region6: #{tpu_custom_call.1} parent=1 // pred_check
      _
    $region7: #{tpu_custom_call.1} parent=1 // pred_check_branch
      %21 = sbr.rel (0) target = $region9
    $region8: #{tpu_custom_call.1} parent=1 // pred_region
      %s23 = ssub.s32 256, 256
      %24 = vsyncadd [#allocation6], %s23
      %s25 = sshll.u32 [#allocation5], 4
      %s26 = int_to_ptr.vmem [resolvable:$true] %s25
      %31 = dma.hbm_to_vmem [thread:$0]  %s1, 256, %s26, [#allocation6], 128, 128, 8
    $region9: #{tpu_custom_call.1} parent=1 // pred_fallthru
      _
    // Predicated region
    $region10: #{tpu_custom_call.1} parent=1 // pred_check
      _
    $region11: #{tpu_custom_call.1} parent=1 // pred_check_branch
      %33 = sbr.rel (0) target = $region13
    $region12: #{tpu_custom_call.1} parent=1 // pred_region
      %34 = dma.done [#allocation3], 512
    $region13: #{tpu_custom_call.1} parent=1 // pred_fallthru
      _
    // Predicated region
    $region14: #{tpu_custom_call.1} parent=1 // pred_check
      _
    $region15: #{tpu_custom_call.1} parent=1 // pred_check_branch
      %36 = sbr.rel (0) target = $region17
    $region16: #{tpu_custom_call.1} parent=1 // pred_region
      %37 = dma.done [#allocation6], 256
    $region17: #{tpu_custom_call.1} parent=1 // pred_fallthru
      _
    %v38 = vlaneseq
    %v39 = vshrl.u32 %v38, 7
    %v40 = vld [vmem:[#allocation2] ss:$4 sm:$0xff]
    %s41 = scalar_lea.vmem [#allocation2], 2
    %v42 = vld [vmem:[%s41] ss:$4 sm:$0xff]
    %v43 = vlaneseq
    %v44 = vshrl.u32 %v43, 7
    %v45 = vsub.s32 0, %v44
    %v46 = vrot.slane %v42, %v45
    %v47 = vlaneseq
    %v48 = vshrl.u32 %v47, 7
    %v49 = vsub.s32 1, %v48
    %v50 = vrot.slane %v42, %v49
    %v51 = vlaneseq
    %v52 = vshrl.u32 %v51, 7
    %v53 = vsub.s32 2, %v52
    %v54 = vrot.slane %v42, %v53
    %v55 = vlaneseq
    %v56 = vshrl.u32 %v55, 7
    %v57 = vsub.s32 3, %v56
    %v58 = vrot.slane %v42, %v57
    %v59 = vlaneseq
    %v60 = vshrl.u32 %v59, 7
    %v61 = vsub.s32 4, %v60
    %v62 = vrot.slane %v42, %v61
    %v63 = vlaneseq
    %v64 = vshrl.u32 %v63, 7
    %v65 = vsub.s32 5, %v64
    %v66 = vrot.slane %v42, %v65
    %v67 = vlaneseq
    %v68 = vshrl.u32 %v67, 7
    %v69 = vsub.s32 6, %v68
    %v70 = vrot.slane %v42, %v69
    %v71 = vlaneseq
    %v72 = vshrl.u32 %v71, 7
    %v73 = vsub.s32 7, %v72
    %v74 = vrot.slane %v42, %v73
    %vm75 = vcmp.eq.s32.totalorder %v39, %v46
    %vm76 = vcmp.eq.s32.totalorder %v39, %v50
    %vm77 = vcmp.eq.s32.totalorder %v39, %v54
    %vm78 = vcmp.eq.s32.totalorder %v39, %v58
    %vm79 = vcmp.eq.s32.totalorder %v39, %v62
    %vm80 = vcmp.eq.s32.totalorder %v39, %v66
    %vm81 = vcmp.eq.s32.totalorder %v39, %v70
    %vm82 = vcmp.eq.s32.totalorder %v39, %v74
    %v83 = vsel %vm75, 1, 0
    %v84 = vsel %vm76, 1, 0
    %v85 = vsel %vm77, 1, 0
    %v86 = vsel %vm78, 1, 0
    %v87 = vsel %vm79, 1, 0
    %v88 = vsel %vm80, 1, 0
    %v89 = vsel %vm81, 1, 0
    %v90 = vsel %vm82, 1, 0
    %v91 = vcvt.s32.f32 %v83
    %v92 = vcvt.s32.f32 %v84
    %v93 = vcvt.s32.f32 %v85
    %v94 = vcvt.s32.f32 %v86
    %v95 = vcvt.s32.f32 %v87
    %v96 = vcvt.s32.f32 %v88
    %v97 = vcvt.s32.f32 %v89
    %v98 = vcvt.s32.f32 %v90
    %v99 = vlaneseq
    %v100 = vshrl.u32 %v99, 7
    %v101 = vsub.s32 0, %v100
    %v102 = vrot.slane %v40, %v101
    %v103 = vlaneseq
    %v104 = vshrl.u32 %v103, 7
    %v105 = vsub.s32 1, %v104
    %v106 = vrot.slane %v40, %v105
    %v107 = vlaneseq
    %v108 = vshrl.u32 %v107, 7
    %v109 = vsub.s32 2, %v108
    %v110 = vrot.slane %v40, %v109
    %v111 = vlaneseq
    %v112 = vshrl.u32 %v111, 7
    %v113 = vsub.s32 3, %v112
    %v114 = vrot.slane %v40, %v113
    %v115 = vlaneseq
    %v116 = vshrl.u32 %v115, 7
    %v117 = vsub.s32 4, %v116
    %v118 = vrot.slane %v40, %v117
    %v119 = vlaneseq
    %v120 = vshrl.u32 %v119, 7
    %v121 = vsub.s32 5, %v120
    %v122 = vrot.slane %v40, %v121
    %v123 = vlaneseq
    %v124 = vshrl.u32 %v123, 7
    %v125 = vsub.s32 6, %v124
    %v126 = vrot.slane %v40, %v125
    %v127 = vlaneseq
    %v128 = vshrl.u32 %v127, 7
    %v129 = vsub.s32 7, %v128
    %v130 = vrot.slane %v40, %v129
    %vm131 = vcmp.eq.s32.totalorder %v39, %v102
    %vm132 = vcmp.eq.s32.totalorder %v39, %v106
    %vm133 = vcmp.eq.s32.totalorder %v39, %v110
    %vm134 = vcmp.eq.s32.totalorder %v39, %v114
    %vm135 = vcmp.eq.s32.totalorder %v39, %v118
    %vm136 = vcmp.eq.s32.totalorder %v39, %v122
    %vm137 = vcmp.eq.s32.totalorder %v39, %v126
    %vm138 = vcmp.eq.s32.totalorder %v39, %v130
    %v139 = vsel %vm131, 1, 0
    %v140 = vsel %vm132, 1, 0
    %v141 = vsel %vm133, 1, 0
    %v142 = vsel %vm134, 1, 0
    %v143 = vsel %vm135, 1, 0
    %v144 = vsel %vm136, 1, 0
    %v145 = vsel %vm137, 1, 0
    %v146 = vsel %vm138, 1, 0
    %v147 = vcvt.s32.f32 %v139
    %v148 = vcvt.s32.f32 %v140
    %v149 = vcvt.s32.f32 %v141
    %v150 = vcvt.s32.f32 %v142
    %v151 = vcvt.s32.f32 %v143
    %v152 = vcvt.s32.f32 %v144
    %v153 = vcvt.s32.f32 %v145
    %v154 = vcvt.s32.f32 %v146
    %v155 = vld [vmem:[#allocation5] sm:$0xff]
    %vm156 = vcmask 64512
    %v158 = vsel %vm156, %v155, 0
    %v160 = vand.u32 %v92, 4294901760
    %161 = vmatprep.subr.mxu0 %v160
    %v162 = vand.u32 %v91, 4294901760
    %163 = vmatpush1.msra.mxu0 %v162
    %164 = vmatprep.subr.mxu0 0.0
    %165 = vmatpush1.msra.mxu0 0.0
    %166 = vmatprep.subr.mxu0 0.0
    %167 = vmatpush1.msra.mxu0 0.0
    %168 = vmatprep.subr.mxu0 0.0
    %169 = vmatpush1.msra.mxu0 0.0
    %170 = vmatprep.subr.mxu0 0.0
    %171 = vmatpush1.msra.mxu0 0.0
    %172 = vmatprep.subr.mxu0 0.0
    %173 = vmatpush1.msra.mxu0 0.0
    %174 = vmatprep.subr.mxu0 0.0
    %175 = vmatpush1.msra.mxu0 0.0
    %176 = vmatprep.subr.mxu0 0.0
    %177 = vmatpush1.msra.mxu0 0.0
    %178 = vmatprep.subr.mxu0 0.0
    %179 = vmatpush1.msra.mxu0 0.0
    %180 = vmatprep.subr.mxu0 0.0
    %181 = vmatpush1.msra.mxu0 0.0
    %182 = vmatprep.subr.mxu0 0.0
    %183 = vmatpush1.msra.mxu0 0.0
    %184 = vmatprep.subr.mxu0 0.0
    %185 = vmatpush1.msra.mxu0 0.0
    %186 = vmatprep.subr.mxu0 0.0
    %187 = vmatpush1.msra.mxu0 0.0
    %188 = vmatprep.subr.mxu0 0.0
    %189 = vmatpush1.msra.mxu0 0.0
    %190 = vmatprep.subr.mxu0 0.0
    %191 = vmatpush1.msra.mxu0 0.0
    %192 = vmatprep.subr.mxu0 0.0
    %193 = vmatpush1.msra.mxu0 0.0
    %194 = vmatprep.subr.mxu0 0.0
    %195 = vmatpush1.msra.mxu0 0.0
    %196 = vmatprep.subr.mxu0 0.0
    %197 = vmatpush1.msra.mxu0 0.0
    %198 = vmatprep.subr.mxu0 0.0
    %199 = vmatpush1.msra.mxu0 0.0
    %200 = vmatprep.subr.mxu0 0.0
    %201 = vmatpush1.msra.mxu0 0.0
    %202 = vmatprep.subr.mxu0 0.0
    %203 = vmatpush1.msra.mxu0 0.0
    %204 = vmatprep.subr.mxu0 0.0
    %205 = vmatpush1.msra.mxu0 0.0
    %206 = vmatprep.subr.mxu0 0.0
    %207 = vmatpush1.msra.mxu0 0.0
    %208 = vmatprep.subr.mxu0 0.0
    %209 = vmatpush1.msra.mxu0 0.0
    %210 = vmatprep.subr.mxu0 0.0
    %211 = vmatpush1.msra.mxu0 0.0
    %212 = vmatprep.subr.mxu0 0.0
    %213 = vmatpush1.msra.mxu0 0.0
    %214 = vmatprep.subr.mxu0 0.0
    %215 = vmatpush1.msra.mxu0 0.0
    %216 = vmatprep.subr.mxu0 0.0
    %217 = vmatpush1.msra.mxu0 0.0
    %218 = vmatprep.subr.mxu0 0.0
    %219 = vmatpush1.msra.mxu0 0.0
    %220 = vmatprep.subr.mxu0 0.0
    %221 = vmatpush1.msra.mxu0 0.0
    %222 = vmatprep.subr.mxu0 0.0
    %223 = vmatpush1.msra.mxu0 0.0
    %224 = vmatprep.subr.mxu0 0.0
    %225 = vmatpush1.msra.mxu0 0.0
    %226 = vmatprep.mubr.f32.mxu0 0.0
    %v227 = vand.u32 %v158, 4294901760
    %v228 = vsub.f32 %v158, %v227
    %v229 = vand.u32 %v228, 4294901760
    %v230 = vsub.f32 %v228, %v229
    %v231 = vand.u32 %v230, 4294901760
    %232 = vmatmul.mubr.f32.gmra.mrb[0].mxu0 %v231
    %v233 = vpop.f32.mrb[0].mxu0
    %v234 = vadd.f32 0.0, %v233
    %v235 = vpop.f32.mrb[0].mxu0
    %v236 = vadd.f32 0.0, %v235
    %237 = vdwg.mxu0
    %v238 = vand.u32 %v92, 4294901760
    %v239 = vsub.f32 %v92, %v238
    %v240 = vand.u32 %v239, 4294901760
    %v241 = vsub.f32 %v239, %v240
    %v242 = vand.u32 %v241, 4294901760
    %243 = vmatprep.subr.mxu0 %v242
    %v244 = vand.u32 %v91, 4294901760
    %v245 = vsub.f32 %v91, %v244
    %v246 = vand.u32 %v245, 4294901760
    %v247 = vsub.f32 %v245, %v246
    %v248 = vand.u32 %v247, 4294901760
    %249 = vmatpush1.msra.mxu0 %v248
    %250 = vmatprep.subr.mxu0 0.0
    %251 = vmatpush1.msra.mxu0 0.0
    %252 = vmatprep.subr.mxu0 0.0
    %253 = vmatpush1.msra.mxu0 0.0
    %254 = vmatprep.subr.mxu0 0.0
    %255 = vmatpush1.msra.mxu0 0.0
    %256 = vmatprep.subr.mxu0 0.0
    %257 = vmatpush1.msra.mxu0 0.0
    %258 = vmatprep.subr.mxu0 0.0
    %259 = vmatpush1.msra.mxu0 0.0
    %260 = vmatprep.subr.mxu0 0.0
    %261 = vmatpush1.msra.mxu0 0.0
    %262 = vmatprep.subr.mxu0 0.0
    %263 = vmatpush1.msra.mxu0 0.0
    %264 = vmatprep.subr.mxu0 0.0
    %265 = vmatpush1.msra.mxu0 0.0
    %266 = vmatprep.subr.mxu0 0.0
    %267 = vmatpush1.msra.mxu0 0.0
    %268 = vmatprep.subr.mxu0 0.0
    %269 = vmatpush1.msra.mxu0 0.0
    %270 = vmatprep.subr.mxu0 0.0
    %271 = vmatpush1.msra.mxu0 0.0
    %272 = vmatprep.subr.mxu0 0.0
    %273 = vmatpush1.msra.mxu0 0.0
    %274 = vmatprep.subr.mxu0 0.0
    %275 = vmatpush1.msra.mxu0 0.0
    %276 = vmatprep.subr.mxu0 0.0
    %277 = vmatpush1.msra.mxu0 0.0
    %278 = vmatprep.subr.mxu0 0.0
    %279 = vmatpush1.msra.mxu0 0.0
    %280 = vmatprep.subr.mxu0 0.0
    %281 = vmatpush1.msra.mxu0 0.0
    %282 = vmatprep.subr.mxu0 0.0
    %283 = vmatpush1.msra.mxu0 0.0
    %284 = vmatprep.subr.mxu0 0.0
    %285 = vmatpush1.msra.mxu0 0.0
    %286 = vmatprep.subr.mxu0 0.0
    %287 = vmatpush1.msra.mxu0 0.0
    %288 = vmatprep.subr.mxu0 0.0
    %289 = vmatpush1.msra.mxu0 0.0
    %290 = vmatprep.subr.mxu0 0.0
    %291 = vmatpush1.msra.mxu0 0.0
    %292 = vmatprep.subr.mxu0 0.0
    %293 = vmatpush1.msra.mxu0 0.0
    %294 = vmatprep.subr.mxu0 0.0
    %295 = vmatpush1.msra.mxu0 0.0
    %296 = vmatprep.subr.mxu0 0.0
    %297 = vmatpush1.msra.mxu0 0.0
    %298 = vmatprep.subr.mxu0 0.0
    %299 = vmatpush1.msra.mxu0 0.0
    %300 = vmatprep.subr.mxu0 0.0
    %301 = vmatpush1.msra.mxu0 0.0
    %302 = vmatprep.subr.mxu0 0.0
    %303 = vmatpush1.msra.mxu0 0.0
    %304 = vmatprep.subr.mxu0 0.0
    %305 = vmatpush1.msra.mxu0 0.0
    %306 = vmatprep.subr.mxu0 0.0
    %307 = vmatpush1.msra.mxu0 0.0
    %308 = vmatprep.subr.mxu0 0.0
    %309 = vmatpush1.msra.mxu0 0.0
    %310 = vmatprep.subr.mxu0 0.0
    %311 = vmatpush1.msra.mxu0 0.0
    %312 = vmatprep.mubr.f32.mxu0 0.0
    %v313 = vand.u32 %v158, 4294901760
    %314 = vmatmul.mubr.f32.gmra.mrb[0].mxu0 %v313
    %v315 = vpop.f32.mrb[0].mxu0
    %v316 = vadd.f32 %v234, %v315
    %v317 = vpop.f32.mrb[0].mxu0
    %v318 = vadd.f32 %v236, %v317
    %319 = vdwg.mxu0
    %v320 = vand.u32 %v92, 4294901760
    %v321 = vsub.f32 %v92, %v320
    %322 = vmatprep.subr.mxu0 %v321
    %v323 = vand.u32 %v91, 4294901760
    %v324 = vsub.f32 %v91, %v323
    %325 = vmatpush1.msra.mxu0 %v324
    %326 = vmatprep.subr.mxu0 0.0
    %327 = vmatpush1.msra.mxu0 0.0
    %328 = vmatprep.subr.mxu0 0.0
    %329 = vmatpush1.msra.mxu0 0.0
    %330 = vmatprep.subr.mxu0 0.0
    %331 = vmatpush1.msra.mxu0 0.0
    %332 = vmatprep.subr.mxu0 0.0
    %333 = vmatpush1.msra.mxu0 0.0
    %334 = vmatprep.subr.mxu0 0.0
    %335 = vmatpush1.msra.mxu0 0.0
    %336 = vmatprep.subr.mxu0 0.0
    %337 = vmatpush1.msra.mxu0 0.0
    %338 = vmatprep.subr.mxu0 0.0
    %339 = vmatpush1.msra.mxu0 0.0
    %340 = vmatprep.subr.mxu0 0.0
    %341 = vmatpush1.msra.mxu0 0.0
    %342 = vmatprep.subr.mxu0 0.0
    %343 = vmatpush1.msra.mxu0 0.0
    %344 = vmatprep.subr.mxu0 0.0
    %345 = vmatpush1.msra.mxu0 0.0
    %346 = vmatprep.subr.mxu0 0.0
    %347 = vmatpush1.msra.mxu0 0.0
    %348 = vmatprep.subr.mxu0 0.0
    %349 = vmatpush1.msra.mxu0 0.0
    %350 = vmatprep.subr.mxu0 0.0
    %351 = vmatpush1.msra.mxu0 0.0
    %352 = vmatprep.subr.mxu0 0.0
    %353 = vmatpush1.msra.mxu0 0.0
    %354 = vmatprep.subr.mxu0 0.0
    %355 = vmatpush1.msra.mxu0 0.0
    %356 = vmatprep.subr.mxu0 0.0
    %357 = vmatpush1.msra.mxu0 0.0
    %358 = vmatprep.subr.mxu0 0.0
    %359 = vmatpush1.msra.mxu0 0.0
    %360 = vmatprep.subr.mxu0 0.0
    %361 = vmatpush1.msra.mxu0 0.0
    %362 = vmatprep.subr.mxu0 0.0
    %363 = vmatpush1.msra.mxu0 0.0
    %364 = vmatprep.subr.mxu0 0.0
    %365 = vmatpush1.msra.mxu0 0.0
    %366 = vmatprep.subr.mxu0 0.0
    %367 = vmatpush1.msra.mxu0 0.0
    %368 = vmatprep.subr.mxu0 0.0
    %369 = vmatpush1.msra.mxu0 0.0
    %370 = vmatprep.subr.mxu0 0.0
    %371 = vmatpush1.msra.mxu0 0.0
    %372 = vmatprep.subr.mxu0 0.0
    %373 = vmatpush1.msra.mxu0 0.0
    %374 = vmatprep.subr.mxu0 0.0
    %375 = vmatpush1.msra.mxu0 0.0
    %376 = vmatprep.subr.mxu0 0.0
    %377 = vmatpush1.msra.mxu0 0.0
    %378 = vmatprep.subr.mxu0 0.0
    %379 = vmatpush1.msra.mxu0 0.0
    %380 = vmatprep.subr.mxu0 0.0
    %381 = vmatpush1.msra.mxu0 0.0
    %382 = vmatprep.subr.mxu0 0.0
    %383 = vmatpush1.msra.mxu0 0.0
    %384 = vmatprep.subr.mxu0 0.0
    %385 = vmatpush1.msra.mxu0 0.0
    %386 = vmatprep.subr.mxu0 0.0
    %387 = vmatpush1.msra.mxu0 0.0
    %388 = vmatprep.mubr.f32.mxu0 0.0
    %v389 = vand.u32 %v158, 4294901760
    %v390 = vsub.f32 %v158, %v389
    %391 = vmatmul.mubr.f32.gmra.mrb[0].mxu0 %v390
    %v392 = vpop.f32.mrb[0].mxu0
    %v393 = vadd.f32 %v316, %v392
    %v394 = vpop.f32.mrb[0].mxu0
    %v395 = vadd.f32 %v318, %v394
    %396 = vdwg.mxu0
    %v397 = vand.u32 %v92, 4294901760
    %398 = vmatprep.subr.mxu0 %v397
    %v399 = vand.u32 %v91, 4294901760
    %400 = vmatpush1.msra.mxu0 %v399
    %401 = vmatprep.subr.mxu0 0.0
    %402 = vmatpush1.msra.mxu0 0.0
    %403 = vmatprep.subr.mxu0 0.0
    %404 = vmatpush1.msra.mxu0 0.0
    %405 = vmatprep.subr.mxu0 0.0
    %406 = vmatpush1.msra.mxu0 0.0
    %407 = vmatprep.subr.mxu0 0.0
    %408 = vmatpush1.msra.mxu0 0.0
    %409 = vmatprep.subr.mxu0 0.0
    %410 = vmatpush1.msra.mxu0 0.0
    %411 = vmatprep.subr.mxu0 0.0
    %412 = vmatpush1.msra.mxu0 0.0
    %413 = vmatprep.subr.mxu0 0.0
    %414 = vmatpush1.msra.mxu0 0.0
    %415 = vmatprep.subr.mxu0 0.0
    %416 = vmatpush1.msra.mxu0 0.0
    %417 = vmatprep.subr.mxu0 0.0
    %418 = vmatpush1.msra.mxu0 0.0
    %419 = vmatprep.subr.mxu0 0.0
    %420 = vmatpush1.msra.mxu0 0.0
    %421 = vmatprep.subr.mxu0 0.0
    %422 = vmatpush1.msra.mxu0 0.0
    %423 = vmatprep.subr.mxu0 0.0
    %424 = vmatpush1.msra.mxu0 0.0
    %425 = vmatprep.subr.mxu0 0.0
    %426 = vmatpush1.msra.mxu0 0.0
    %427 = vmatprep.subr.mxu0 0.0
    %428 = vmatpush1.msra.mxu0 0.0
    %429 = vmatprep.subr.mxu0 0.0
    %430 = vmatpush1.msra.mxu0 0.0
    %431 = vmatprep.subr.mxu0 0.0
    %432 = vmatpush1.msra.mxu0 0.0
    %433 = vmatprep.subr.mxu0 0.0
    %434 = vmatpush1.msra.mxu0 0.0
    %435 = vmatprep.subr.mxu0 0.0
    %436 = vmatpush1.msra.mxu0 0.0
    %437 = vmatprep.subr.mxu0 0.0
    %438 = vmatpush1.msra.mxu0 0.0
    %439 = vmatprep.subr.mxu0 0.0
    %440 = vmatpush1.msra.mxu0 0.0
    %441 = vmatprep.subr.mxu0 0.0
    %442 = vmatpush1.msra.mxu0 0.0
    %443 = vmatprep.subr.mxu0 0.0
    %444 = vmatpush1.msra.mxu0 0.0
    %445 = vmatprep.subr.mxu0 0.0
    %446 = vmatpush1.msra.mxu0 0.0
    %447 = vmatprep.subr.mxu0 0.0
    %448 = vmatpush1.msra.mxu0 0.0
    %449 = vmatprep.subr.mxu0 0.0
    %450 = vmatpush1.msra.mxu0 0.0
    %451 = vmatprep.subr.mxu0 0.0
    %452 = vmatpush1.msra.mxu0 0.0
    %453 = vmatprep.subr.mxu0 0.0
    %454 = vmatpush1.msra.mxu0 0.0
    %455 = vmatprep.subr.mxu0 0.0
    %456 = vmatpush1.msra.mxu0 0.0
    %457 = vmatprep.subr.mxu0 0.0
    %458 = vmatpush1.msra.mxu0 0.0
    %459 = vmatprep.subr.mxu0 0.0
    %460 = vmatpush1.msra.mxu0 0.0
    %461 = vmatprep.subr.mxu0 0.0
    %462 = vmatpush1.msra.mxu0 0.0
    %463 = vmatprep.mubr.f32.mxu0 0.0
    %v464 = vand.u32 %v158, 4294901760
    %v465 = vsub.f32 %v158, %v464
    %v466 = vand.u32 %v465, 4294901760
    %467 = vmatmul.mubr.f32.gmra.mrb[0].mxu0 %v466
    %v468 = vpop.f32.mrb[0].mxu0
    %v469 = vadd.f32 %v393, %v468
    %v470 = vpop.f32.mrb[0].mxu0
    %v471 = vadd.f32 %v395, %v470
    %472 = vdwg.mxu0
    %v473 = vand.u32 %v92, 4294901760
    %v474 = vsub.f32 %v92, %v473
    %v475 = vand.u32 %v474, 4294901760
    %476 = vmatprep.subr.mxu0 %v475
    %v477 = vand.u32 %v91, 4294901760
    %v478 = vsub.f32 %v91, %v477
    %v479 = vand.u32 %v478, 4294901760
    %480 = vmatpush1.msra.mxu0 %v479
    %481 = vmatprep.subr.mxu0 0.0
    %482 = vmatpush1.msra.mxu0 0.0
    %483 = vmatprep.subr.mxu0 0.0
    %484 = vmatpush1.msra.mxu0 0.0
    %485 = vmatprep.subr.mxu0 0.0
    %486 = vmatpush1.msra.mxu0 0.0
    %487 = vmatprep.subr.mxu0 0.0
    %488 = vmatpush1.msra.mxu0 0.0
    %489 = vmatprep.subr.mxu0 0.0
    %490 = vmatpush1.msra.mxu0 0.0
    %491 = vmatprep.subr.mxu0 0.0
    %492 = vmatpush1.msra.mxu0 0.0
    %493 = vmatprep.subr.mxu0 0.0
    %494 = vmatpush1.msra.mxu0 0.0
    %495 = vmatprep.subr.mxu0 0.0
    %496 = vmatpush1.msra.mxu0 0.0
    %497 = vmatprep.subr.mxu0 0.0
    %498 = vmatpush1.msra.mxu0 0.0
    %499 = vmatprep.subr.mxu0 0.0
    %500 = vmatpush1.msra.mxu0 0.0
    %501 = vmatprep.subr.mxu0 0.0
    %502 = vmatpush1.msra.mxu0 0.0
    %503 = vmatprep.subr.mxu0 0.0
    %504 = vmatpush1.msra.mxu0 0.0
    %505 = vmatprep.subr.mxu0 0.0
    %506 = vmatpush1.msra.mxu0 0.0
    %507 = vmatprep.subr.mxu0 0.0
    %508 = vmatpush1.msra.mxu0 0.0
    %509 = vmatprep.subr.mxu0 0.0
    %510 = vmatpush1.msra.mxu0 0.0
    %511 = vmatprep.subr.mxu0 0.0
    %512 = vmatpush1.msra.mxu0 0.0
    %513 = vmatprep.subr.mxu0 0.0
    %514 = vmatpush1.msra.mxu0 0.0
    %515 = vmatprep.subr.mxu0 0.0
    %516 = vmatpush1.msra.mxu0 0.0
    %517 = vmatprep.subr.mxu0 0.0
    %518 = vmatpush1.msra.mxu0 0.0
    %519 = vmatprep.subr.mxu0 0.0
    %520 = vmatpush1.msra.mxu0 0.0
    %521 = vmatprep.subr.mxu0 0.0
    %522 = vmatpush1.msra.mxu0 0.0
    %523 = vmatprep.subr.mxu0 0.0
    %524 = vmatpush1.msra.mxu0 0.0
    %525 = vmatprep.subr.mxu0 0.0
    %526 = vmatpush1.msra.mxu0 0.0
    %527 = vmatprep.subr.mxu0 0.0
    %528 = vmatpush1.msra.mxu0 0.0
    %529 = vmatprep.subr.mxu0 0.0
    %530 = vmatpush1.msra.mxu0 0.0
    %531 = vmatprep.subr.mxu0 0.0
    %532 = vmatpush1.msra.mxu0 0.0
    %533 = vmatprep.subr.mxu0 0.0
    %534 = vmatpush1.msra.mxu0 0.0
    %535 = vmatprep.subr.mxu0 0.0
    %536 = vmatpush1.msra.mxu0 0.0
    %537 = vmatprep.subr.mxu0 0.0
    %538 = vmatpush1.msra.mxu0 0.0
    %539 = vmatprep.subr.mxu0 0.0
    %540 = vmatpush1.msra.mxu0 0.0
    %541 = vmatprep.subr.mxu0 0.0
    %542 = vmatpush1.msra.mxu0 0.0
    %543 = vmatprep.mubr.f32.mxu0 0.0
    %v544 = vand.u32 %v158, 4294901760
    %545 = vmatmul.mubr.f32.gmra.mrb[0].mxu0 %v544
    %v546 = vpop.f32.mrb[0].mxu0
    %v547 = vadd.f32 %v469, %v546
    %v548 = vpop.f32.mrb[0].mxu0
    %v549 = vadd.f32 %v471, %v548
    %550 = vdwg.mxu0
    %v551 = vand.u32 %v92, 4294901760
    %552 = vmatprep.subr.mxu0 %v551
    %v553 = vand.u32 %v91, 4294901760
    %554 = vmatpush1.msra.mxu0 %v553
    %555 = vmatprep.subr.mxu0 0.0
    %556 = vmatpush1.msra.mxu0 0.0
    %557 = vmatprep.subr.mxu0 0.0
    %558 = vmatpush1.msra.mxu0 0.0
    %559 = vmatprep.subr.mxu0 0.0
    %560 = vmatpush1.msra.mxu0 0.0
    %561 = vmatprep.subr.mxu0 0.0
    %562 = vmatpush1.msra.mxu0 0.0
    %563 = vmatprep.subr.mxu0 0.0
    %564 = vmatpush1.msra.mxu0 0.0
    %565 = vmatprep.subr.mxu0 0.0
    %566 = vmatpush1.msra.mxu0 0.0
    %567 = vmatprep.subr.mxu0 0.0
    %568 = vmatpush1.msra.mxu0 0.0
    %569 = vmatprep.subr.mxu0 0.0
    %570 = vmatpush1.msra.mxu0 0.0
    %571 = vmatprep.subr.mxu0 0.0
    %572 = vmatpush1.msra.mxu0 0.0
    %573 = vmatprep.subr.mxu0 0.0
    %574 = vmatpush1.msra.mxu0 0.0
    %575 = vmatprep.subr.mxu0 0.0
    %576 = vmatpush1.msra.mxu0 0.0
    %577 = vmatprep.subr.mxu0 0.0
    %578 = vmatpush1.msra.mxu0 0.0
    %579 = vmatprep.subr.mxu0 0.0
    %580 = vmatpush1.msra.mxu0 0.0
    %581 = vmatprep.subr.mxu0 0.0
    %582 = vmatpush1.msra.mxu0 0.0
    %583 = vmatprep.subr.mxu0 0.0
    %584 = vmatpush1.msra.mxu0 0.0
    %585 = vmatprep.subr.mxu0 0.0
    %586 = vmatpush1.msra.mxu0 0.0
    %587 = vmatprep.subr.mxu0 0.0
    %588 = vmatpush1.msra.mxu0 0.0
    %589 = vmatprep.subr.mxu0 0.0
    %590 = vmatpush1.msra.mxu0 0.0
    %591 = vmatprep.subr.mxu0 0.0
    %592 = vmatpush1.msra.mxu0 0.0
    %593 = vmatprep.subr.mxu0 0.0
    %594 = vmatpush1.msra.mxu0 0.0
    %595 = vmatprep.subr.mxu0 0.0
    %596 = vmatpush1.msra.mxu0 0.0
    %597 = vmatprep.subr.mxu0 0.0
    %598 = vmatpush1.msra.mxu0 0.0
    %599 = vmatprep.subr.mxu0 0.0
    %600 = vmatpush1.msra.mxu0 0.0
    %601 = vmatprep.subr.mxu0 0.0
    %602 = vmatpush1.msra.mxu0 0.0
    %603 = vmatprep.subr.mxu0 0.0
    %604 = vmatpush1.msra.mxu0 0.0
    %605 = vmatprep.subr.mxu0 0.0
    %606 = vmatpush1.msra.mxu0 0.0
    %607 = vmatprep.subr.mxu0 0.0
    %608 = vmatpush1.msra.mxu0 0.0
    %609 = vmatprep.subr.mxu0 0.0
    %610 = vmatpush1.msra.mxu0 0.0
    %611 = vmatprep.subr.mxu0 0.0
    %612 = vmatpush1.msra.mxu0 0.0
    %613 = vmatprep.subr.mxu0 0.0
    %614 = vmatpush1.msra.mxu0 0.0
    %615 = vmatprep.subr.mxu0 0.0
    %616 = vmatpush1.msra.mxu0 0.0
    %617 = vmatprep.mubr.f32.mxu0 0.0
    %v618 = vand.u32 %v158, 4294901760
    %619 = vmatmul.mubr.f32.gmra.mrb[0].mxu0 %v618
    %v620 = vpop.f32.mrb[0].mxu0
    %v621 = vadd.f32 %v547, %v620
    %v622 = vpop.f32.mrb[0].mxu0
    %v623 = vadd.f32 %v549, %v622
    %624 = vdwg.mxu0
    %v625 = vand.u32 %v94, 4294901760
    %626 = vmatprep.subr.mxu0 %v625
    %v627 = vand.u32 %v93, 4294901760
    %628 = vmatpush1.msra.mxu0 %v627
    %629 = vmatprep.subr.mxu0 0.0
    %630 = vmatpush1.msra.mxu0 0.0
    %631 = vmatprep.subr.mxu0 0.0
    %632 = vmatpush1.msra.mxu0 0.0
    %633 = vmatprep.subr.mxu0 0.0
    %634 = vmatpush1.msra.mxu0 0.0
    %635 = vmatprep.subr.mxu0 0.0
    %636 = vmatpush1.msra.mxu0 0.0
    %637 = vmatprep.subr.mxu0 0.0
    %638 = vmatpush1.msra.mxu0 0.0
    %639 = vmatprep.subr.mxu0 0.0
    %640 = vmatpush1.msra.mxu0 0.0
    %641 = vmatprep.subr.mxu0 0.0
    %642 = vmatpush1.msra.mxu0 0.0
    %643 = vmatprep.subr.mxu0 0.0
    %644 = vmatpush1.msra.mxu0 0.0
    %645 = vmatprep.subr.mxu0 0.0
    %646 = vmatpush1.msra.mxu0 0.0
    %647 = vmatprep.subr.mxu0 0.0
    %648 = vmatpush1.msra.mxu0 0.0
    %649 = vmatprep.subr.mxu0 0.0
    %650 = vmatpush1.msra.mxu0 0.0
    %651 = vmatprep.subr.mxu0 0.0
    %652 = vmatpush1.msra.mxu0 0.0
    %653 = vmatprep.subr.mxu0 0.0
    %654 = vmatpush1.msra.mxu0 0.0
    %655 = vmatprep.subr.mxu0 0.0
    %656 = vmatpush1.msra.mxu0 0.0
    %657 = vmatprep.subr.mxu0 0.0
    %658 = vmatpush1.msra.mxu0 0.0
    %659 = vmatprep.subr.mxu0 0.0
    %660 = vmatpush1.msra.mxu0 0.0
    %661 = vmatprep.subr.mxu0 0.0
    %662 = vmatpush1.msra.mxu0 0.0
    %663 = vmatprep.subr.mxu0 0.0
    %664 = vmatpush1.msra.mxu0 0.0
    %665 = vmatprep.subr.mxu0 0.0
    %666 = vmatpush1.msra.mxu0 0.0
    %667 = vmatprep.subr.mxu0 0.0
    %668 = vmatpush1.msra.mxu0 0.0
    %669 = vmatprep.subr.mxu0 0.0
    %670 = vmatpush1.msra.mxu0 0.0
    %671 = vmatprep.subr.mxu0 0.0
    %672 = vmatpush1.msra.mxu0 0.0
    %673 = vmatprep.subr.mxu0 0.0
    %674 = vmatpush1.msra.mxu0 0.0
    %675 = vmatprep.subr.mxu0 0.0
    %676 = vmatpush1.msra.mxu0 0.0
    %677 = vmatprep.subr.mxu0 0.0
    %678 = vmatpush1.msra.mxu0 0.0
    %679 = vmatprep.subr.mxu0 0.0
    %680 = vmatpush1.msra.mxu0 0.0
    %681 = vmatprep.subr.mxu0 0.0
    %682 = vmatpush1.msra.mxu0 0.0
    %683 = vmatprep.subr.mxu0 0.0
    %684 = vmatpush1.msra.mxu0 0.0
    %685 = vmatprep.subr.mxu0 0.0
    %686 = vmatpush1.msra.mxu0 0.0
    %687 = vmatprep.subr.mxu0 0.0
    %688 = vmatpush1.msra.mxu0 0.0
    %689 = vmatprep.subr.mxu0 0.0
    %690 = vmatpush1.msra.mxu0 0.0
    %691 = vmatprep.mubr.f32.mxu0 0.0
    %v692 = vand.u32 %v158, 4294901760
    %v693 = vsub.f32 %v158, %v692
    %v694 = vand.u32 %v693, 4294901760
    %v695 = vsub.f32 %v693, %v694
    %v696 = vand.u32 %v695, 4294901760
    %697 = vmatmul.mubr.f32.gmra.mrb[0].mxu0 %v696
    %v698 = vpop.f32.mrb[0].mxu0
    %v699 = vadd.f32 0.0, %v698
    %v700 = vpop.f32.mrb[0].mxu0
    %v701 = vadd.f32 0.0, %v700
    %702 = vdwg.mxu0
    %v703 = vand.u32 %v94, 4294901760
    %v704 = vsub.f32 %v94, %v703
    %v705 = vand.u32 %v704, 4294901760
    %v706 = vsub.f32 %v704, %v705
    %v707 = vand.u32 %v706, 4294901760
    %708 = vmatprep.subr.mxu0 %v707
    %v709 = vand.u32 %v93, 4294901760
    %v710 = vsub.f32 %v93, %v709
    %v711 = vand.u32 %v710, 4294901760
    %v712 = vsub.f32 %v710, %v711
    %v713 = vand.u32 %v712, 4294901760
    %714 = vmatpush1.msra.mxu0 %v713
    %715 = vmatprep.subr.mxu0 0.0
    %716 = vmatpush1.msra.mxu0 0.0
    %717 = vmatprep.subr.mxu0 0.0
    %718 = vmatpush1.msra.mxu0 0.0
    %719 = vmatprep.subr.mxu0 0.0
    %720 = vmatpush1.msra.mxu0 0.0
    %721 = vmatprep.subr.mxu0 0.0
    %722 = vmatpush1.msra.mxu0 0.0
    %723 = vmatprep.subr.mxu0 0.0
    %724 = vmatpush1.msra.mxu0 0.0
    %725 = vmatprep.subr.mxu0 0.0
    %726 = vmatpush1.msra.mxu0 0.0
    %727 = vmatprep.subr.mxu0 0.0
    %728 = vmatpush1.msra.mxu0 0.0
    %729 = vmatprep.subr.mxu0 0.0
    %730 = vmatpush1.msra.mxu0 0.0
    %731 = vmatprep.subr.mxu0 0.0
    %732 = vmatpush1.msra.mxu0 0.0
    %733 = vmatprep.subr.mxu0 0.0
    %734 = vmatpush1.msra.mxu0 0.0
    %735 = vmatprep.subr.mxu0 0.0
    %736 = vmatpush1.msra.mxu0 0.0
    %737 = vmatprep.subr.mxu0 0.0
    %738 = vmatpush1.msra.mxu0 0.0
    %739 = vmatprep.subr.mxu0 0.0
    %740 = vmatpush1.msra.mxu0 0.0
    %741 = vmatprep.subr.mxu0 0.0
    %742 = vmatpush1.msra.mxu0 0.0
    %743 = vmatprep.subr.mxu0 0.0
    %744 = vmatpush1.msra.mxu0 0.0
    %745 = vmatprep.subr.mxu0 0.0
    %746 = vmatpush1.msra.mxu0 0.0
    %747 = vmatprep.subr.mxu0 0.0
    %748 = vmatpush1.msra.mxu0 0.0
    %749 = vmatprep.subr.mxu0 0.0
    %750 = vmatpush1.msra.mxu0 0.0
    %751 = vmatprep.subr.mxu0 0.0
    %752 = vmatpush1.msra.mxu0 0.0
    %753 = vmatprep.subr.mxu0 0.0
    %754 = vmatpush1.msra.mxu0 0.0
    %755 = vmatprep.subr.mxu0 0.0
    %756 = vmatpush1.msra.mxu0 0.0
    %757 = vmatprep.subr.mxu0 0.0
    %758 = vmatpush1.msra.mxu0 0.0
    %759 = vmatprep.subr.mxu0 0.0
    %760 = vmatpush1.msra.mxu0 0.0
    %761 = vmatprep.subr.mxu0 0.0
    %762 = vmatpush1.msra.mxu0 0.0
    %763 = vmatprep.subr.mxu0 0.0
    %764 = vmatpush1.msra.mxu0 0.0
    %765 = vmatprep.subr.mxu0 0.0
    %766 = vmatpush1.msra.mxu0 0.0
    %767 = vmatprep.subr.mxu0 0.0
    %768 = vmatpush1.msra.mxu0 0.0
    %769 = vmatprep.subr.mxu0 0.0
    %770 = vmatpush1.msra.mxu0 0.0
    %771 = vmatprep.subr.mxu0 0.0
    %772 = vmatpush1.msra.mxu0 0.0
    %773 = vmatprep.subr.mxu0 0.0
    %774 = vmatpush1.msra.mxu0 0.0
    %775 = vmatprep.subr.mxu0 0.0
    %776 = vmatpush1.msra.mxu0 0.0
    %777 = vmatprep.mubr.f32.mxu0 0.0
    %v778 = vand.u32 %v158, 4294901760
    %779 = vmatmul.mubr.f32.gmra.mrb[0].mxu0 %v778
    %v780 = vpop.f32.mrb[0].mxu0
    %v781 = vadd.f32 %v699, %v780
    %v782 = vpop.f32.mrb[0].mxu0
    %v783 = vadd.f32 %v701, %v782
    %784 = vdwg.mxu0
    %v785 = vand.u32 %v94, 4294901760
    %v786 = vsub.f32 %v94, %v785
    %787 = vmatprep.subr.mxu0 %v786
    %v788 = vand.u32 %v93, 4294901760
    %v789 = vsub.f32 %v93, %v788
    %790 = vmatpush1.msra.mxu0 %v789
    %791 = vmatprep.subr.mxu0 0.0
    %792 = vmatpush1.msra.mxu0 0.0
    %793 = vmatprep.subr.mxu0 0.0
    %794 = vmatpush1.msra.mxu0 0.0
    %795 = vmatprep.subr.mxu0 0.0
    %796 = vmatpush1.msra.mxu0 0.0
    %797 = vmatprep.subr.mxu0 0.0
    %798 = vmatpush1.msra.mxu0 0.0
    %799 = vmatprep.subr.mxu0 0.0
    %800 = vmatpush1.msra.mxu0 0.0
    %801 = vmatprep.subr.mxu0 0.0
    %802 = vmatpush1.msra.mxu0 0.0
    %803 = vmatprep.subr.mxu0 0.0
    %804 = vmatpush1.msra.mxu0 0.0
    %805 = vmatprep.subr.mxu0 0.0
    %806 = vmatpush1.msra.mxu0 0.0
    %807 = vmatprep.subr.mxu0 0.0
    %808 = vmatpush1.msra.mxu0 0.0
    %809 = vmatprep.subr.mxu0 0.0
    %810 = vmatpush1.msra.mxu0 0.0
    %811 = vmatprep.subr.mxu0 0.0
    %812 = vmatpush1.msra.mxu0 0.0
    %813 = vmatprep.subr.mxu0 0.0
    %814 = vmatpush1.msra.mxu0 0.0
    %815 = vmatprep.subr.mxu0 0.0
    %816 = vmatpush1.msra.mxu0 0.0
    %817 = vmatprep.subr.mxu0 0.0
    %818 = vmatpush1.msra.mxu0 0.0
    %819 = vmatprep.subr.mxu0 0.0
    %820 = vmatpush1.msra.mxu0 0.0
    %821 = vmatprep.subr.mxu0 0.0
    %822 = vmatpush1.msra.mxu0 0.0
    %823 = vmatprep.subr.mxu0 0.0
    %824 = vmatpush1.msra.mxu0 0.0
    %825 = vmatprep.subr.mxu0 0.0
    %826 = vmatpush1.msra.mxu0 0.0
    %827 = vmatprep.subr.mxu0 0.0
    %828 = vmatpush1.msra.mxu0 0.0
    %829 = vmatprep.subr.mxu0 0.0
    %830 = vmatpush1.msra.mxu0 0.0
    %831 = vmatprep.subr.mxu0 0.0
    %832 = vmatpush1.msra.mxu0 0.0
    %833 = vmatprep.subr.mxu0 0.0
    %834 = vmatpush1.msra.mxu0 0.0
    %835 = vmatprep.subr.mxu0 0.0
    %836 = vmatpush1.msra.mxu0 0.0
    %837 = vmatprep.subr.mxu0 0.0
    %838 = vmatpush1.msra.mxu0 0.0
    %839 = vmatprep.subr.mxu0 0.0
    %840 = vmatpush1.msra.mxu0 0.0
    %841 = vmatprep.subr.mxu0 0.0
    %842 = vmatpush1.msra.mxu0 0.0
    %843 = vmatprep.subr.mxu0 0.0
    %844 = vmatpush1.msra.mxu0 0.0
    %845 = vmatprep.subr.mxu0 0.0
    %846 = vmatpush1.msra.mxu0 0.0
    %847 = vmatprep.subr.mxu0 0.0
    %848 = vmatpush1.msra.mxu0 0.0
    %849 = vmatprep.subr.mxu0 0.0
    %850 = vmatpush1.msra.mxu0 0.0
    %851 = vmatprep.subr.mxu0 0.0
    %852 = vmatpush1.msra.mxu0 0.0
    %853 = vmatprep.mubr.f32.mxu0 0.0
    %v854 = vand.u32 %v158, 4294901760
    %v855 = vsub.f32 %v158, %v854
    %856 = vmatmul.mubr.f32.gmra.mrb[0].mxu0 %v855
    %v857 = vpop.f32.mrb[0].mxu0
    %v858 = vadd.f32 %v781, %v857
    %v859 = vpop.f32.mrb[0].mxu0
    %v860 = vadd.f32 %v783, %v859
    %861 = vdwg.mxu0
    %v862 = vand.u32 %v94, 4294901760
    %863 = vmatprep.subr.mxu0 %v862
    %v864 = vand.u32 %v93, 4294901760
    %865 = vmatpush1.msra.mxu0 %v864
    %866 = vmatprep.subr.mxu0 0.0
    %867 = vmatpush1.msra.mxu0 0.0
    %868 = vmatprep.subr.mxu0 0.0
    %869 = vmatpush1.msra.mxu0 0.0
    %870 = vmatprep.subr.mxu0 0.0
    %871 = vmatpush1.msra.mxu0 0.0
    %872 = vmatprep.subr.mxu0 0.0
    %873 = vmatpush1.msra.mxu0 0.0
    %874 = vmatprep.subr.mxu0 0.0
    %875 = vmatpush1.msra.mxu0 0.0
    %876 = vmatprep.subr.mxu0 0.0
    %877 = vmatpush1.msra.mxu0 0.0
    %878 = vmatprep.subr.mxu0 0.0
    %879 = vmatpush1.msra.mxu0 0.0
    %880 = vmatprep.subr.mxu0 0.0
    %881 = vmatpush1.msra.mxu0 0.0
    %882 = vmatprep.subr.mxu0 0.0
    %883 = vmatpush1.msra.mxu0 0.0
    %884 = vmatprep.subr.mxu0 0.0
    %885 = vmatpush1.msra.mxu0 0.0
    %886 = vmatprep.subr.mxu0 0.0
    %887 = vmatpush1.msra.mxu0 0.0
    %888 = vmatprep.subr.mxu0 0.0
    %889 = vmatpush1.msra.mxu0 0.0
    %890 = vmatprep.subr.mxu0 0.0
    %891 = vmatpush1.msra.mxu0 0.0
    %892 = vmatprep.subr.mxu0 0.0
    %893 = vmatpush1.msra.mxu0 0.0
    %894 = vmatprep.subr.mxu0 0.0
    %895 = vmatpush1.msra.mxu0 0.0
    %896 = vmatprep.subr.mxu0 0.0
    %897 = vmatpush1.msra.mxu0 0.0
    %898 = vmatprep.subr.mxu0 0.0
    %899 = vmatpush1.msra.mxu0 0.0
    %900 = vmatprep.subr.mxu0 0.0
    %901 = vmatpush1.msra.mxu0 0.0
    %902 = vmatprep.subr.mxu0 0.0
    %903 = vmatpush1.msra.mxu0 0.0
    %904 = vmatprep.subr.mxu0 0.0
    %905 = vmatpush1.msra.mxu0 0.0
    %906 = vmatprep.subr.mxu0 0.0
    %907 = vmatpush1.msra.mxu0 0.0
    %908 = vmatprep.subr.mxu0 0.0
    %909 = vmatpush1.msra.mxu0 0.0
    %910 = vmatprep.subr.mxu0 0.0
    %911 = vmatpush1.msra.mxu0 0.0
    %912 = vmatprep.subr.mxu0 0.0
    %913 = vmatpush1.msra.mxu0 0.0
    %914 = vmatprep.subr.mxu0 0.0
    %915 = vmatpush1.msra.mxu0 0.0
    %916 = vmatprep.subr.mxu0 0.0
    %917 = vmatpush1.msra.mxu0 0.0
    %918 = vmatprep.subr.mxu0 0.0
    %919 = vmatpush1.msra.mxu0 0.0
    %920 = vmatprep.subr.mxu0 0.0
    %921 = vmatpush1.msra.mxu0 0.0
    %922 = vmatprep.subr.mxu0 0.0
    %923 = vmatpush1.msra.mxu0 0.0
    %924 = vmatprep.subr.mxu0 0.0
    %925 = vmatpush1.msra.mxu0 0.0
    %926 = vmatprep.subr.mxu0 0.0
    %927 = vmatpush1.msra.mxu0 0.0
    %928 = vmatprep.mubr.f32.mxu0 0.0
    %v929 = vand.u32 %v158, 4294901760
    %v930 = vsub.f32 %v158, %v929
    %v931 = vand.u32 %v930, 4294901760
    %932 = vmatmul.mubr.f32.gmra.mrb[0].mxu0 %v931
    %v933 = vpop.f32.mrb[0].mxu0
    %v934 = vadd.f32 %v858, %v933
    %v935 = vpop.f32.mrb[0].mxu0
    %v936 = vadd.f32 %v860, %v935
    %937 = vdwg.mxu0
    %v938 = vand.u32 %v94, 4294901760
    %v939 = vsub.f32 %v94, %v938
    %v940 = vand.u32 %v939, 4294901760
    %941 = vmatprep.subr.mxu0 %v940
    %v942 = vand.u32 %v93, 4294901760
    %v943 = vsub.f32 %v93, %v942
    %v944 = vand.u32 %v943, 4294901760
    %945 = vmatpush1.msra.mxu0 %v944
    %946 = vmatprep.subr.mxu0 0.0
    %947 = vmatpush1.msra.mxu0 0.0
    %948 = vmatprep.subr.mxu0 0.0
    %949 = vmatpush1.msra.mxu0 0.0
    %950 = vmatprep.subr.mxu0 0.0
    %951 = vmatpush1.msra.mxu0 0.0
    %952 = vmatprep.subr.mxu0 0.0
    %953 = vmatpush1.msra.mxu0 0.0
    %954 = vmatprep.subr.mxu0 0.0
    %955 = vmatpush1.msra.mxu0 0.0
    %956 = vmatprep.subr.mxu0 0.0
    %957 = vmatpush1.msra.mxu0 0.0
    %958 = vmatprep.subr.mxu0 0.0
    %959 = vmatpush1.msra.mxu0 0.0
    %960 = vmatprep.subr.mxu0 0.0
    %961 = vmatpush1.msra.mxu0 0.0
    %962 = vmatprep.subr.mxu0 0.0
    %963 = vmatpush1.msra.mxu0 0.0
    %964 = vmatprep.subr.mxu0 0.0
    %965 = vmatpush1.msra.mxu0 0.0
    %966 = vmatprep.subr.mxu0 0.0
    %967 = vmatpush1.msra.mxu0 0.0
    %968 = vmatprep.subr.mxu0 0.0
    %969 = vmatpush1.msra.mxu0 0.0
    %970 = vmatprep.subr.mxu0 0.0
    %971 = vmatpush1.msra.mxu0 0.0
    %972 = vmatprep.subr.mxu0 0.0
    %973 = vmatpush1.msra.mxu0 0.0
    %974 = vmatprep.subr.mxu0 0.0
    %975 = vmatpush1.msra.mxu0 0.0
    %976 = vmatprep.subr.mxu0 0.0
    %977 = vmatpush1.msra.mxu0 0.0
    %978 = vmatprep.subr.mxu0 0.0
    %979 = vmatpush1.msra.mxu0 0.0
    %980 = vmatprep.subr.mxu0 0.0
    %981 = vmatpush1.msra.mxu0 0.0
    %982 = vmatprep.subr.mxu0 0.0
    %983 = vmatpush1.msra.mxu0 0.0
    %984 = vmatprep.subr.mxu0 0.0
    %985 = vmatpush1.msra.mxu0 0.0
    %986 = vmatprep.subr.mxu0 0.0
    %987 = vmatpush1.msra.mxu0 0.0
    %988 = vmatprep.subr.mxu0 0.0
    %989 = vmatpush1.msra.mxu0 0.0
    %990 = vmatprep.subr.mxu0 0.0
    %991 = vmatpush1.msra.mxu0 0.0
    %992 = vmatprep.subr.mxu0 0.0
    %993 = vmatpush1.msra.mxu0 0.0
    %994 = vmatprep.subr.mxu0 0.0
    %995 = vmatpush1.msra.mxu0 0.0
    %996 = vmatprep.subr.mxu0 0.0
    %997 = vmatpush1.msra.mxu0 0.0
    %998 = vmatprep.subr.mxu0 0.0
    %999 = vmatpush1.msra.mxu0 0.0
    %1000 = vmatprep.subr.mxu0 0.0
    %1001 = vmatpush1.msra.mxu0 0.0
    %1002 = vmatprep.subr.mxu0 0.0
    %1003 = vmatpush1.msra.mxu0 0.0
    %1004 = vmatprep.subr.mxu0 0.0
    %1005 = vmatpush1.msra.mxu0 0.0
    %1006 = vmatprep.subr.mxu0 0.0
    %1007 = vmatpush1.msra.mxu0 0.0
    %1008 = vmatprep.mubr.f32.mxu0 0.0
    %v1009 = vand.u32 %v158, 4294901760
    %1010 = vmatmul.mubr.f32.gmra.mrb[0].mxu0 %v1009
    %v1011 = vpop.f32.mrb[0].mxu0
    %v1012 = vadd.f32 %v934, %v1011
    %v1013 = vpop.f32.mrb[0].mxu0
    %v1014 = vadd.f32 %v936, %v1013
    %1015 = vdwg.mxu0
    %v1016 = vand.u32 %v94, 4294901760
    %1017 = vmatprep.subr.mxu0 %v1016
    %v1018 = vand.u32 %v93, 4294901760
    %1019 = vmatpush1.msra.mxu0 %v1018
    %1020 = vmatprep.subr.mxu0 0.0
    %1021 = vmatpush1.msra.mxu0 0.0
    %1022 = vmatprep.subr.mxu0 0.0
    %1023 = vmatpush1.msra.mxu0 0.0
    %1024 = vmatprep.subr.mxu0 0.0
    %1025 = vmatpush1.msra.mxu0 0.0
    %1026 = vmatprep.subr.mxu0 0.0
    %1027 = vmatpush1.msra.mxu0 0.0
    %1028 = vmatprep.subr.mxu0 0.0
    %1029 = vmatpush1.msra.mxu0 0.0
    %1030 = vmatprep.subr.mxu0 0.0
    %1031 = vmatpush1.msra.mxu0 0.0
    %1032 = vmatprep.subr.mxu0 0.0
    %1033 = vmatpush1.msra.mxu0 0.0
    %1034 = vmatprep.subr.mxu0 0.0
    %1035 = vmatpush1.msra.mxu0 0.0
    %1036 = vmatprep.subr.mxu0 0.0
    %1037 = vmatpush1.msra.mxu0 0.0
    %1038 = vmatprep.subr.mxu0 0.0
    %1039 = vmatpush1.msra.mxu0 0.0
    %1040 = vmatprep.subr.mxu0 0.0
    %1041 = vmatpush1.msra.mxu0 0.0
    %1042 = vmatprep.subr.mxu0 0.0
    %1043 = vmatpush1.msra.mxu0 0.0
    %1044 = vmatprep.subr.mxu0 0.0
    %1045 = vmatpush1.msra.mxu0 0.0
    %1046 = vmatprep.subr.mxu0 0.0
    %1047 = vmatpush1.msra.mxu0 0.0
    %1048 = vmatprep.subr.mxu0 0.0
    %1049 = vmatpush1.msra.mxu0 0.0
    %1050 = vmatprep.subr.mxu0 0.0
    %1051 = vmatpush1.msra.mxu0 0.0
    %1052 = vmatprep.subr.mxu0 0.0
    %1053 = vmatpush1.msra.mxu0 0.0
    %1054 = vmatprep.subr.mxu0 0.0
    %1055 = vmatpush1.msra.mxu0 0.0
    %1056 = vmatprep.subr.mxu0 0.0
    %1057 = vmatpush1.msra.mxu0 0.0
    %1058 = vmatprep.subr.mxu0 0.0
    %1059 = vmatpush1.msra.mxu0 0.0
    %1060 = vmatprep.subr.mxu0 0.0
    %1061 = vmatpush1.msra.mxu0 0.0
    %1062 = vmatprep.subr.mxu0 0.0
    %1063 = vmatpush1.msra.mxu0 0.0
    %1064 = vmatprep.subr.mxu0 0.0
    %1065 = vmatpush1.msra.mxu0 0.0
    %1066 = vmatprep.subr.mxu0 0.0
    %1067 = vmatpush1.msra.mxu0 0.0
    %1068 = vmatprep.subr.mxu0 0.0
    %1069 = vmatpush1.msra.mxu0 0.0
    %1070 = vmatprep.subr.mxu0 0.0
    %1071 = vmatpush1.msra.mxu0 0.0
    %1072 = vmatprep.subr.mxu0 0.0
    %1073 = vmatpush1.msra.mxu0 0.0
    %1074 = vmatprep.subr.mxu0 0.0
    %1075 = vmatpush1.msra.mxu0 0.0
    %1076 = vmatprep.subr.mxu0 0.0
    %1077 = vmatpush1.msra.mxu0 0.0
    %1078 = vmatprep.subr.mxu0 0.0
    %1079 = vmatpush1.msra.mxu0 0.0
    %1080 = vmatprep.subr.mxu0 0.0
    %1081 = vmatpush1.msra.mxu0 0.0
    %1082 = vmatprep.mubr.f32.mxu0 0.0
    %v1083 = vand.u32 %v158, 4294901760
    %1084 = vmatmul.mubr.f32.gmra.mrb[0].mxu0 %v1083
    %v1085 = vpop.f32.mrb[0].mxu0
    %v1086 = vadd.f32 %v1012, %v1085
    %v1087 = vpop.f32.mrb[0].mxu0
    %v1088 = vadd.f32 %v1014, %v1087
    %1089 = vdwg.mxu0
    %v1090 = vand.u32 %v96, 4294901760
    %1091 = vmatprep.subr.mxu0 %v1090
    %v1092 = vand.u32 %v95, 4294901760
    %1093 = vmatpush1.msra.mxu0 %v1092
    %1094 = vmatprep.subr.mxu0 0.0
    %1095 = vmatpush1.msra.mxu0 0.0
    %1096 = vmatprep.subr.mxu0 0.0
    %1097 = vmatpush1.msra.mxu0 0.0
    %1098 = vmatprep.subr.mxu0 0.0
    %1099 = vmatpush1.msra.mxu0 0.0
    %1100 = vmatprep.subr.mxu0 0.0
    %1101 = vmatpush1.msra.mxu0 0.0
    %1102 = vmatprep.subr.mxu0 0.0
    %1103 = vmatpush1.msra.mxu0 0.0
    %1104 = vmatprep.subr.mxu0 0.0
    %1105 = vmatpush1.msra.mxu0 0.0
    %1106 = vmatprep.subr.mxu0 0.0
    %1107 = vmatpush1.msra.mxu0 0.0
    %1108 = vmatprep.subr.mxu0 0.0
    %1109 = vmatpush1.msra.mxu0 0.0
    %1110 = vmatprep.subr.mxu0 0.0
    %1111 = vmatpush1.msra.mxu0 0.0
    %1112 = vmatprep.subr.mxu0 0.0
    %1113 = vmatpush1.msra.mxu0 0.0
    %1114 = vmatprep.subr.mxu0 0.0
    %1115 = vmatpush1.msra.mxu0 0.0
    %1116 = vmatprep.subr.mxu0 0.0
    %1117 = vmatpush1.msra.mxu0 0.0
    %1118 = vmatprep.subr.mxu0 0.0
    %1119 = vmatpush1.msra.mxu0 0.0
    %1120 = vmatprep.subr.mxu0 0.0
    %1121 = vmatpush1.msra.mxu0 0.0
    %1122 = vmatprep.subr.mxu0 0.0
    %1123 = vmatpush1.msra.mxu0 0.0
    %1124 = vmatprep.subr.mxu0 0.0
    %1125 = vmatpush1.msra.mxu0 0.0
    %1126 = vmatprep.subr.mxu0 0.0
    %1127 = vmatpush1.msra.mxu0 0.0
    %1128 = vmatprep.subr.mxu0 0.0
    %1129 = vmatpush1.msra.mxu0 0.0
    %1130 = vmatprep.subr.mxu0 0.0
    %1131 = vmatpush1.msra.mxu0 0.0
    %1132 = vmatprep.subr.mxu0 0.0
    %1133 = vmatpush1.msra.mxu0 0.0
    %1134 = vmatprep.subr.mxu0 0.0
    %1135 = vmatpush1.msra.mxu0 0.0
    %1136 = vmatprep.subr.mxu0 0.0
    %1137 = vmatpush1.msra.mxu0 0.0
    %1138 = vmatprep.subr.mxu0 0.0
    %1139 = vmatpush1.msra.mxu0 0.0
    %1140 = vmatprep.subr.mxu0 0.0
    %1141 = vmatpush1.msra.mxu0 0.0
    %1142 = vmatprep.subr.mxu0 0.0
    %1143 = vmatpush1.msra.mxu0 0.0
    %1144 = vmatprep.subr.mxu0 0.0
    %1145 = vmatpush1.msra.mxu0 0.0
    %1146 = vmatprep.subr.mxu0 0.0
    %1147 = vmatpush1.msra.mxu0 0.0
    %1148 = vmatprep.subr.mxu0 0.0
    %1149 = vmatpush1.msra.mxu0 0.0
    %1150 = vmatprep.subr.mxu0 0.0
    %1151 = vmatpush1.msra.mxu0 0.0
    %1152 = vmatprep.subr.mxu0 0.0
    %1153 = vmatpush1.msra.mxu0 0.0
    %1154 = vmatprep.subr.mxu0 0.0
    %1155 = vmatpush1.msra.mxu0 0.0
    %1156 = vmatprep.mubr.f32.mxu0 0.0
    %v1157 = vand.u32 %v158, 4294901760
    %v1158 = vsub.f32 %v158, %v1157
    %v1159 = vand.u32 %v1158, 4294901760
    %v1160 = vsub.f32 %v1158, %v1159
    %v1161 = vand.u32 %v1160, 4294901760
    %1162 = vmatmul.mubr.f32.gmra.mrb[0].mxu0 %v1161
    %v1163 = vpop.f32.mrb[0].mxu0
    %v1164 = vadd.f32 0.0, %v1163
    %v1165 = vpop.f32.mrb[0].mxu0
    %v1166 = vadd.f32 0.0, %v1165
    %1167 = vdwg.mxu0
    %v1168 = vand.u32 %v96, 4294901760
    %v1169 = vsub.f32 %v96, %v1168
    %v1170 = vand.u32 %v1169, 4294901760
    %v1171 = vsub.f32 %v1169, %v1170
    %v1172 = vand.u32 %v1171, 4294901760
    %1173 = vmatprep.subr.mxu0 %v1172
    %v1174 = vand.u32 %v95, 4294901760
    %v1175 = vsub.f32 %v95, %v1174
    %v1176 = vand.u32 %v1175, 4294901760
    %v1177 = vsub.f32 %v1175, %v1176
    %v1178 = vand.u32 %v1177, 4294901760
    %1179 = vmatpush1.msra.mxu0 %v1178
    %1180 = vmatprep.subr.mxu0 0.0
    %1181 = vmatpush1.msra.mxu0 0.0
    %1182 = vmatprep.subr.mxu0 0.0
    %1183 = vmatpush1.msra.mxu0 0.0
    %1184 = vmatprep.subr.mxu0 0.0
    %1185 = vmatpush1.msra.mxu0 0.0
    %1186 = vmatprep.subr.mxu0 0.0
    %1187 = vmatpush1.msra.mxu0 0.0
    %1188 = vmatprep.subr.mxu0 0.0
    %1189 = vmatpush1.msra.mxu0 0.0
    %1190 = vmatprep.subr.mxu0 0.0
    %1191 = vmatpush1.msra.mxu0 0.0
    %1192 = vmatprep.subr.mxu0 0.0
    %1193 = vmatpush1.msra.mxu0 0.0
    %1194 = vmatprep.subr.mxu0 0.0
    %1195 = vmatpush1.msra.mxu0 0.0
    %1196 = vmatprep.subr.mxu0 0.0
    %1197 = vmatpush1.msra.mxu0 0.0
    %1198 = vmatprep.subr.mxu0 0.0
    %1199 = vmatpush1.msra.mxu0 0.0
    %1200 = vmatprep.subr.mxu0 0.0
    %1201 = vmatpush1.msra.mxu0 0.0
    %1202 = vmatprep.subr.mxu0 0.0
    %1203 = vmatpush1.msra.mxu0 0.0
    %1204 = vmatprep.subr.mxu0 0.0
    %1205 = vmatpush1.msra.mxu0 0.0
    %1206 = vmatprep.subr.mxu0 0.0
    %1207 = vmatpush1.msra.mxu0 0.0
    %1208 = vmatprep.subr.mxu0 0.0
    %1209 = vmatpush1.msra.mxu0 0.0
    %1210 = vmatprep.subr.mxu0 0.0
    %1211 = vmatpush1.msra.mxu0 0.0
    %1212 = vmatprep.subr.mxu0 0.0
    %1213 = vmatpush1.msra.mxu0 0.0
    %1214 = vmatprep.subr.mxu0 0.0
    %1215 = vmatpush1.msra.mxu0 0.0
    %1216 = vmatprep.subr.mxu0 0.0
    %1217 = vmatpush1.msra.mxu0 0.0
    %1218 = vmatprep.subr.mxu0 0.0
    %1219 = vmatpush1.msra.mxu0 0.0
    %1220 = vmatprep.subr.mxu0 0.0
    %1221 = vmatpush1.msra.mxu0 0.0
    %1222 = vmatprep.subr.mxu0 0.0
    %1223 = vmatpush1.msra.mxu0 0.0
    %1224 = vmatprep.subr.mxu0 0.0
    %1225 = vmatpush1.msra.mxu0 0.0
    %1226 = vmatprep.subr.mxu0 0.0
    %1227 = vmatpush1.msra.mxu0 0.0
    %1228 = vmatprep.subr.mxu0 0.0
    %1229 = vmatpush1.msra.mxu0 0.0
    %1230 = vmatprep.subr.mxu0 0.0
    %1231 = vmatpush1.msra.mxu0 0.0
    %1232 = vmatprep.subr.mxu0 0.0
    %1233 = vmatpush1.msra.mxu0 0.0
    %1234 = vmatprep.subr.mxu0 0.0
    %1235 = vmatpush1.msra.mxu0 0.0
    %1236 = vmatprep.subr.mxu0 0.0
    %1237 = vmatpush1.msra.mxu0 0.0
    %1238 = vmatprep.subr.mxu0 0.0
    %1239 = vmatpush1.msra.mxu0 0.0
    %1240 = vmatprep.subr.mxu0 0.0
    %1241 = vmatpush1.msra.mxu0 0.0
    %1242 = vmatprep.mubr.f32.mxu0 0.0
    %v1243 = vand.u32 %v158, 4294901760
    %1244 = vmatmul.mubr.f32.gmra.mrb[0].mxu0 %v1243
    %v1245 = vpop.f32.mrb[0].mxu0
    %v1246 = vadd.f32 %v1164, %v1245
    %v1247 = vpop.f32.mrb[0].mxu0
    %v1248 = vadd.f32 %v1166, %v1247
    %1249 = vdwg.mxu0
    %v1250 = vand.u32 %v96, 4294901760
    %v1251 = vsub.f32 %v96, %v1250
    %1252 = vmatprep.subr.mxu0 %v1251
    %v1253 = vand.u32 %v95, 4294901760
    %v1254 = vsub.f32 %v95, %v1253
    %1255 = vmatpush1.msra.mxu0 %v1254
    %1256 = vmatprep.subr.mxu0 0.0
    %1257 = vmatpush1.msra.mxu0 0.0
    %1258 = vmatprep.subr.mxu0 0.0
    %1259 = vmatpush1.msra.mxu0 0.0
    %1260 = vmatprep.subr.mxu0 0.0
    %1261 = vmatpush1.msra.mxu0 0.0
    %1262 = vmatprep.subr.mxu0 0.0
    %1263 = vmatpush1.msra.mxu0 0.0
    %1264 = vmatprep.subr.mxu0 0.0
    %1265 = vmatpush1.msra.mxu0 0.0
    %1266 = vmatprep.subr.mxu0 0.0
    %1267 = vmatpush1.msra.mxu0 0.0
    %1268 = vmatprep.subr.mxu0 0.0
    %1269 = vmatpush1.msra.mxu0 0.0
    %1270 = vmatprep.subr.mxu0 0.0
    %1271 = vmatpush1.msra.mxu0 0.0
    %1272 = vmatprep.subr.mxu0 0.0
    %1273 = vmatpush1.msra.mxu0 0.0
    %1274 = vmatprep.subr.mxu0 0.0
    %1275 = vmatpush1.msra.mxu0 0.0
    %1276 = vmatprep.subr.mxu0 0.0
    %1277 = vmatpush1.msra.mxu0 0.0
    %1278 = vmatprep.subr.mxu0 0.0
    %1279 = vmatpush1.msra.mxu0 0.0
    %1280 = vmatprep.subr.mxu0 0.0
    %1281 = vmatpush1.msra.mxu0 0.0
    %1282 = vmatprep.subr.mxu0 0.0
    %1283 = vmatpush1.msra.mxu0 0.0
    %1284 = vmatprep.subr.mxu0 0.0
    %1285 = vmatpush1.msra.mxu0 0.0
    %1286 = vmatprep.subr.mxu0 0.0
    %1287 = vmatpush1.msra.mxu0 0.0
    %1288 = vmatprep.subr.mxu0 0.0
    %1289 = vmatpush1.msra.mxu0 0.0
    %1290 = vmatprep.subr.mxu0 0.0
    %1291 = vmatpush1.msra.mxu0 0.0
    %1292 = vmatprep.subr.mxu0 0.0
    %1293 = vmatpush1.msra.mxu0 0.0
    %1294 = vmatprep.subr.mxu0 0.0
    %1295 = vmatpush1.msra.mxu0 0.0
    %1296 = vmatprep.subr.mxu0 0.0
    %1297 = vmatpush1.msra.mxu0 0.0
    %1298 = vmatprep.subr.mxu0 0.0
    %1299 = vmatpush1.msra.mxu0 0.0
    %1300 = vmatprep.subr.mxu0 0.0
    %1301 = vmatpush1.msra.mxu0 0.0
    %1302 = vmatprep.subr.mxu0 0.0
    %1303 = vmatpush1.msra.mxu0 0.0
    %1304 = vmatprep.subr.mxu0 0.0
    %1305 = vmatpush1.msra.mxu0 0.0
    %1306 = vmatprep.subr.mxu0 0.0
    %1307 = vmatpush1.msra.mxu0 0.0
    %1308 = vmatprep.subr.mxu0 0.0
    %1309 = vmatpush1.msra.mxu0 0.0
    %1310 = vmatprep.subr.mxu0 0.0
    %1311 = vmatpush1.msra.mxu0 0.0
    %1312 = vmatprep.subr.mxu0 0.0
    %1313 = vmatpush1.msra.mxu0 0.0
    %1314 = vmatprep.subr.mxu0 0.0
    %1315 = vmatpush1.msra.mxu0 0.0
    %1316 = vmatprep.subr.mxu0 0.0
    %1317 = vmatpush1.msra.mxu0 0.0
    %1318 = vmatprep.mubr.f32.mxu0 0.0
    %v1319 = vand.u32 %v158, 4294901760
    %v1320 = vsub.f32 %v158, %v1319
    %1321 = vmatmul.mubr.f32.gmra.mrb[0].mxu0 %v1320
    %v1322 = vpop.f32.mrb[0].mxu0
    %v1323 = vadd.f32 %v1246, %v1322
    %v1324 = vpop.f32.mrb[0].mxu0
    %v1325 = vadd.f32 %v1248, %v1324
    %1326 = vdwg.mxu0
    %v1327 = vand.u32 %v96, 4294901760
    %1328 = vmatprep.subr.mxu0 %v1327
    %v1329 = vand.u32 %v95, 4294901760
    %1330 = vmatpush1.msra.mxu0 %v1329
    %1331 = vmatprep.subr.mxu0 0.0
    %1332 = vmatpush1.msra.mxu0 0.0
    %1333 = vmatprep.subr.mxu0 0.0
    %1334 = vmatpush1.msra.mxu0 0.0
    %1335 = vmatprep.subr.mxu0 0.0
    %1336 = vmatpush1.msra.mxu0 0.0
    %1337 = vmatprep.subr.mxu0 0.0
    %1338 = vmatpush1.msra.mxu0 0.0
    %1339 = vmatprep.subr.mxu0 0.0
    %1340 = vmatpush1.msra.mxu0 0.0
    %1341 = vmatprep.subr.mxu0 0.0
    %1342 = vmatpush1.msra.mxu0 0.0
    %1343 = vmatprep.subr.mxu0 0.0
    %1344 = vmatpush1.msra.mxu0 0.0
    %1345 = vmatprep.subr.mxu0 0.0
    %1346 = vmatpush1.msra.mxu0 0.0
    %1347 = vmatprep.subr.mxu0 0.0
    %1348 = vmatpush1.msra.mxu0 0.0
    %1349 = vmatprep.subr.mxu0 0.0
    %1350 = vmatpush1.msra.mxu0 0.0
    %1351 = vmatprep.subr.mxu0 0.0
    %1352 = vmatpush1.msra.mxu0 0.0
    %1353 = vmatprep.subr.mxu0 0.0
    %1354 = vmatpush1.msra.mxu0 0.0
    %1355 = vmatprep.subr.mxu0 0.0
    %1356 = vmatpush1.msra.mxu0 0.0
    %1357 = vmatprep.subr.mxu0 0.0
    %1358 = vmatpush1.msra.mxu0 0.0
    %1359 = vmatprep.subr.mxu0 0.0
    %1360 = vmatpush1.msra.mxu0 0.0
    %1361 = vmatprep.subr.mxu0 0.0
    %1362 = vmatpush1.msra.mxu0 0.0
    %1363 = vmatprep.subr.mxu0 0.0
    %1364 = vmatpush1.msra.mxu0 0.0
    %1365 = vmatprep.subr.mxu0 0.0
    %1366 = vmatpush1.msra.mxu0 0.0
    %1367 = vmatprep.subr.mxu0 0.0
    %1368 = vmatpush1.msra.mxu0 0.0
    %1369 = vmatprep.subr.mxu0 0.0
    %1370 = vmatpush1.msra.mxu0 0.0
    %1371 = vmatprep.subr.mxu0 0.0
    %1372 = vmatpush1.msra.mxu0 0.0
    %1373 = vmatprep.subr.mxu0 0.0
    %1374 = vmatpush1.msra.mxu0 0.0
    %1375 = vmatprep.subr.mxu0 0.0
    %1376 = vmatpush1.msra.mxu0 0.0
    %1377 = vmatprep.subr.mxu0 0.0
    %1378 = vmatpush1.msra.mxu0 0.0
    %1379 = vmatprep.subr.mxu0 0.0
    %1380 = vmatpush1.msra.mxu0 0.0
    %1381 = vmatprep.subr.mxu0 0.0
    %1382 = vmatpush1.msra.mxu0 0.0
    %1383 = vmatprep.subr.mxu0 0.0
    %1384 = vmatpush1.msra.mxu0 0.0
    %1385 = vmatprep.subr.mxu0 0.0
    %1386 = vmatpush1.msra.mxu0 0.0
    %1387 = vmatprep.subr.mxu0 0.0
    %1388 = vmatpush1.msra.mxu0 0.0
    %1389 = vmatprep.subr.mxu0 0.0
    %1390 = vmatpush1.msra.mxu0 0.0
    %1391 = vmatprep.subr.mxu0 0.0
    %1392 = vmatpush1.msra.mxu0 0.0
    %1393 = vmatprep.mubr.f32.mxu0 0.0
    %v1394 = vand.u32 %v158, 4294901760
    %v1395 = vsub.f32 %v158, %v1394
    %v1396 = vand.u32 %v1395, 4294901760
    %1397 = vmatmul.mubr.f32.gmra.mrb[0].mxu0 %v1396
    %v1398 = vpop.f32.mrb[0].mxu0
    %v1399 = vadd.f32 %v1323, %v1398
    %v1400 = vpop.f32.mrb[0].mxu0
    %v1401 = vadd.f32 %v1325, %v1400
    %1402 = vdwg.mxu0
    %v1403 = vand.u32 %v96, 4294901760
    %v1404 = vsub.f32 %v96, %v1403
    %v1405 = vand.u32 %v1404, 4294901760
    %1406 = vmatprep.subr.mxu0 %v1405
    %v1407 = vand.u32 %v95, 4294901760
    %v1408 = vsub.f32 %v95, %v1407
    %v1409 = vand.u32 %v1408, 4294901760
    %1410 = vmatpush1.msra.mxu0 %v1409
    %1411 = vmatprep.subr.mxu0 0.0
    %1412 = vmatpush1.msra.mxu0 0.0
    %1413 = vmatprep.subr.mxu0 0.0
    %1414 = vmatpush1.msra.mxu0 0.0
    %1415 = vmatprep.subr.mxu0 0.0
    %1416 = vmatpush1.msra.mxu0 0.0
    %1417 = vmatprep.subr.mxu0 0.0
    %1418 = vmatpush1.msra.mxu0 0.0
    %1419 = vmatprep.subr.mxu0 0.0
    %1420 = vmatpush1.msra.mxu0 0.0
    %1421 = vmatprep.subr.mxu0 0.0
    %1422 = vmatpush1.msra.mxu0 0.0
    %1423 = vmatprep.subr.mxu0 0.0
    %1424 = vmatpush1.msra.mxu0 0.0
    %1425 = vmatprep.subr.mxu0 0.0
    %1426 = vmatpush1.msra.mxu0 0.0
    %1427 = vmatprep.subr.mxu0 0.0
    %1428 = vmatpush1.msra.mxu0 0.0
    %1429 = vmatprep.subr.mxu0 0.0
    %1430 = vmatpush1.msra.mxu0 0.0
    %1431 = vmatprep.subr.mxu0 0.0
    %1432 = vmatpush1.msra.mxu0 0.0
    %1433 = vmatprep.subr.mxu0 0.0
    %1434 = vmatpush1.msra.mxu0 0.0
    %1435 = vmatprep.subr.mxu0 0.0
    %1436 = vmatpush1.msra.mxu0 0.0
    %1437 = vmatprep.subr.mxu0 0.0
    %1438 = vmatpush1.msra.mxu0 0.0
    %1439 = vmatprep.subr.mxu0 0.0
    %1440 = vmatpush1.msra.mxu0 0.0
    %1441 = vmatprep.subr.mxu0 0.0
    %1442 = vmatpush1.msra.mxu0 0.0
    %1443 = vmatprep.subr.mxu0 0.0
    %1444 = vmatpush1.msra.mxu0 0.0
    %1445 = vmatprep.subr.mxu0 0.0
    %1446 = vmatpush1.msra.mxu0 0.0
    %1447 = vmatprep.subr.mxu0 0.0
    %1448 = vmatpush1.msra.mxu0 0.0
    %1449 = vmatprep.subr.mxu0 0.0
    %1450 = vmatpush1.msra.mxu0 0.0
    %1451 = vmatprep.subr.mxu0 0.0
    %1452 = vmatpush1.msra.mxu0 0.0
    %1453 = vmatprep.subr.mxu0 0.0
    %1454 = vmatpush1.msra.mxu0 0.0
    %1455 = vmatprep.subr.mxu0 0.0
    %1456 = vmatpush1.msra.mxu0 0.0
    %1457 = vmatprep.subr.mxu0 0.0
    %1458 = vmatpush1.msra.mxu0 0.0
    %1459 = vmatprep.subr.mxu0 0.0
    %1460 = vmatpush1.msra.mxu0 0.0
    %1461 = vmatprep.subr.mxu0 0.0
    %1462 = vmatpush1.msra.mxu0 0.0
    %1463 = vmatprep.subr.mxu0 0.0
    %1464 = vmatpush1.msra.mxu0 0.0
    %1465 = vmatprep.subr.mxu0 0.0
    %1466 = vmatpush1.msra.mxu0 0.0
    %1467 = vmatprep.subr.mxu0 0.0
    %1468 = vmatpush1.msra.mxu0 0.0
    %1469 = vmatprep.subr.mxu0 0.0
    %1470 = vmatpush1.msra.mxu0 0.0
    %1471 = vmatprep.subr.mxu0 0.0
    %1472 = vmatpush1.msra.mxu0 0.0
    %1473 = vmatprep.mubr.f32.mxu0 0.0
    %v1474 = vand.u32 %v158, 4294901760
    %1475 = vmatmul.mubr.f32.gmra.mrb[0].mxu0 %v1474
    %v1476 = vpop.f32.mrb[0].mxu0
    %v1477 = vadd.f32 %v1399, %v1476
    %v1478 = vpop.f32.mrb[0].mxu0
    %v1479 = vadd.f32 %v1401, %v1478
    %1480 = vdwg.mxu0
    %v1481 = vand.u32 %v96, 4294901760
    %1482 = vmatprep.subr.mxu0 %v1481
    %v1483 = vand.u32 %v95, 4294901760
    %1484 = vmatpush1.msra.mxu0 %v1483
    %1485 = vmatprep.subr.mxu0 0.0
    %1486 = vmatpush1.msra.mxu0 0.0
    %1487 = vmatprep.subr.mxu0 0.0
    %1488 = vmatpush1.msra.mxu0 0.0
    %1489 = vmatprep.subr.mxu0 0.0
    %1490 = vmatpush1.msra.mxu0 0.0
    %1491 = vmatprep.subr.mxu0 0.0
    %1492 = vmatpush1.msra.mxu0 0.0
    %1493 = vmatprep.subr.mxu0 0.0
    %1494 = vmatpush1.msra.mxu0 0.0
    %1495 = vmatprep.subr.mxu0 0.0
    %1496 = vmatpush1.msra.mxu0 0.0
    %1497 = vmatprep.subr.mxu0 0.0
    %1498 = vmatpush1.msra.mxu0 0.0
    %1499 = vmatprep.subr.mxu0 0.0
    %1500 = vmatpush1.msra.mxu0 0.0
    %1501 = vmatprep.subr.mxu0 0.0
    %1502 = vmatpush1.msra.mxu0 0.0
    %1503 = vmatprep.subr.mxu0 0.0
    %1504 = vmatpush1.msra.mxu0 0.0
    %1505 = vmatprep.subr.mxu0 0.0
    %1506 = vmatpush1.msra.mxu0 0.0
    %1507 = vmatprep.subr.mxu0 0.0
    %1508 = vmatpush1.msra.mxu0 0.0
    %1509 = vmatprep.subr.mxu0 0.0
    %1510 = vmatpush1.msra.mxu0 0.0
    %1511 = vmatprep.subr.mxu0 0.0
    %1512 = vmatpush1.msra.mxu0 0.0
    %1513 = vmatprep.subr.mxu0 0.0
    %1514 = vmatpush1.msra.mxu0 0.0
    %1515 = vmatprep.subr.mxu0 0.0
    %1516 = vmatpush1.msra.mxu0 0.0
    %1517 = vmatprep.subr.mxu0 0.0
    %1518 = vmatpush1.msra.mxu0 0.0
    %1519 = vmatprep.subr.mxu0 0.0
    %1520 = vmatpush1.msra.mxu0 0.0
    %1521 = vmatprep.subr.mxu0 0.0
    %1522 = vmatpush1.msra.mxu0 0.0
    %1523 = vmatprep.subr.mxu0 0.0
    %1524 = vmatpush1.msra.mxu0 0.0
    %1525 = vmatprep.subr.mxu0 0.0
    %1526 = vmatpush1.msra.mxu0 0.0
    %1527 = vmatprep.subr.mxu0 0.0
    %1528 = vmatpush1.msra.mxu0 0.0
    %1529 = vmatprep.subr.mxu0 0.0
    %1530 = vmatpush1.msra.mxu0 0.0
    %1531 = vmatprep.subr.mxu0 0.0
    %1532 = vmatpush1.msra.mxu0 0.0
    %1533 = vmatprep.subr.mxu0 0.0
    %1534 = vmatpush1.msra.mxu0 0.0
    %1535 = vmatprep.subr.mxu0 0.0
    %1536 = vmatpush1.msra.mxu0 0.0
    %1537 = vmatprep.subr.mxu0 0.0
    %1538 = vmatpush1.msra.mxu0 0.0
    %1539 = vmatprep.subr.mxu0 0.0
    %1540 = vmatpush1.msra.mxu0 0.0
    %1541 = vmatprep.subr.mxu0 0.0
    %1542 = vmatpush1.msra.mxu0 0.0
    %1543 = vmatprep.subr.mxu0 0.0
    %1544 = vmatpush1.msra.mxu0 0.0
    %1545 = vmatprep.subr.mxu0 0.0
    %1546 = vmatpush1.msra.mxu0 0.0
    %1547 = vmatprep.mubr.f32.mxu0 0.0
    %v1548 = vand.u32 %v158, 4294901760
    %1549 = vmatmul.mubr.f32.gmra.mrb[0].mxu0 %v1548
    %v1550 = vpop.f32.mrb[0].mxu0
    %v1551 = vadd.f32 %v1477, %v1550
    %v1552 = vpop.f32.mrb[0].mxu0
    %v1553 = vadd.f32 %v1479, %v1552
    %1554 = vdwg.mxu0
    %v1555 = vand.u32 %v98, 4294901760
    %1556 = vmatprep.subr.mxu0 %v1555
    %v1557 = vand.u32 %v97, 4294901760
    %1558 = vmatpush1.msra.mxu0 %v1557
    %1559 = vmatprep.subr.mxu0 0.0
    %1560 = vmatpush1.msra.mxu0 0.0
    %1561 = vmatprep.subr.mxu0 0.0
    %1562 = vmatpush1.msra.mxu0 0.0
    %1563 = vmatprep.subr.mxu0 0.0
    %1564 = vmatpush1.msra.mxu0 0.0
    %1565 = vmatprep.subr.mxu0 0.0
    %1566 = vmatpush1.msra.mxu0 0.0
    %1567 = vmatprep.subr.mxu0 0.0
    %1568 = vmatpush1.msra.mxu0 0.0
    %1569 = vmatprep.subr.mxu0 0.0
    %1570 = vmatpush1.msra.mxu0 0.0
    %1571 = vmatprep.subr.mxu0 0.0
    %1572 = vmatpush1.msra.mxu0 0.0
    %1573 = vmatprep.subr.mxu0 0.0
    %1574 = vmatpush1.msra.mxu0 0.0
    %1575 = vmatprep.subr.mxu0 0.0
    %1576 = vmatpush1.msra.mxu0 0.0
    %1577 = vmatprep.subr.mxu0 0.0
    %1578 = vmatpush1.msra.mxu0 0.0
    %1579 = vmatprep.subr.mxu0 0.0
    %1580 = vmatpush1.msra.mxu0 0.0
    %1581 = vmatprep.subr.mxu0 0.0
    %1582 = vmatpush1.msra.mxu0 0.0
    %1583 = vmatprep.subr.mxu0 0.0
    %1584 = vmatpush1.msra.mxu0 0.0
    %1585 = vmatprep.subr.mxu0 0.0
    %1586 = vmatpush1.msra.mxu0 0.0
    %1587 = vmatprep.subr.mxu0 0.0
    %1588 = vmatpush1.msra.mxu0 0.0
    %1589 = vmatprep.subr.mxu0 0.0
    %1590 = vmatpush1.msra.mxu0 0.0
    %1591 = vmatprep.subr.mxu0 0.0
    %1592 = vmatpush1.msra.mxu0 0.0
    %1593 = vmatprep.subr.mxu0 0.0
    %1594 = vmatpush1.msra.mxu0 0.0
    %1595 = vmatprep.subr.mxu0 0.0
    %1596 = vmatpush1.msra.mxu0 0.0
    %1597 = vmatprep.subr.mxu0 0.0
    %1598 = vmatpush1.msra.mxu0 0.0
    %1599 = vmatprep.subr.mxu0 0.0
    %1600 = vmatpush1.msra.mxu0 0.0
    %1601 = vmatprep.subr.mxu0 0.0
    %1602 = vmatpush1.msra.mxu0 0.0
    %1603 = vmatprep.subr.mxu0 0.0
    %1604 = vmatpush1.msra.mxu0 0.0
    %1605 = vmatprep.subr.mxu0 0.0
    %1606 = vmatpush1.msra.mxu0 0.0
    %1607 = vmatprep.subr.mxu0 0.0
    %1608 = vmatpush1.msra.mxu0 0.0
    %1609 = vmatprep.subr.mxu0 0.0
    %1610 = vmatpush1.msra.mxu0 0.0
    %1611 = vmatprep.subr.mxu0 0.0
    %1612 = vmatpush1.msra.mxu0 0.0
    %1613 = vmatprep.subr.mxu0 0.0
    %1614 = vmatpush1.msra.mxu0 0.0
    %1615 = vmatprep.subr.mxu0 0.0
    %1616 = vmatpush1.msra.mxu0 0.0
    %1617 = vmatprep.subr.mxu0 0.0
    %1618 = vmatpush1.msra.mxu0 0.0
    %1619 = vmatprep.subr.mxu0 0.0
    %1620 = vmatpush1.msra.mxu0 0.0
    %1621 = vmatprep.mubr.f32.mxu0 0.0
    %v1622 = vand.u32 %v158, 4294901760
    %v1623 = vsub.f32 %v158, %v1622
    %v1624 = vand.u32 %v1623, 4294901760
    %v1625 = vsub.f32 %v1623, %v1624
    %v1626 = vand.u32 %v1625, 4294901760
    %1627 = vmatmul.mubr.f32.gmra.mrb[0].mxu0 %v1626
    %v1628 = vpop.f32.mrb[0].mxu0
    %v1629 = vadd.f32 0.0, %v1628
    %v1630 = vpop.f32.mrb[0].mxu0
    %v1631 = vadd.f32 0.0, %v1630
    %1632 = vdwg.mxu0
    %v1633 = vand.u32 %v98, 4294901760
    %v1634 = vsub.f32 %v98, %v1633
    %v1635 = vand.u32 %v1634, 4294901760
    %v1636 = vsub.f32 %v1634, %v1635
    %v1637 = vand.u32 %v1636, 4294901760
    %1638 = vmatprep.subr.mxu0 %v1637
    %v1639 = vand.u32 %v97, 4294901760
    %v1640 = vsub.f32 %v97, %v1639
    %v1641 = vand.u32 %v1640, 4294901760
    %v1642 = vsub.f32 %v1640, %v1641
    %v1643 = vand.u32 %v1642, 4294901760
    %1644 = vmatpush1.msra.mxu0 %v1643
    %1645 = vmatprep.subr.mxu0 0.0
    %1646 = vmatpush1.msra.mxu0 0.0
    %1647 = vmatprep.subr.mxu0 0.0
    %1648 = vmatpush1.msra.mxu0 0.0
    %1649 = vmatprep.subr.mxu0 0.0
    %1650 = vmatpush1.msra.mxu0 0.0
    %1651 = vmatprep.subr.mxu0 0.0
    %1652 = vmatpush1.msra.mxu0 0.0
    %1653 = vmatprep.subr.mxu0 0.0
    %1654 = vmatpush1.msra.mxu0 0.0
    %1655 = vmatprep.subr.mxu0 0.0
    %1656 = vmatpush1.msra.mxu0 0.0
    %1657 = vmatprep.subr.mxu0 0.0
    %1658 = vmatpush1.msra.mxu0 0.0
    %1659 = vmatprep.subr.mxu0 0.0
    %1660 = vmatpush1.msra.mxu0 0.0
    %1661 = vmatprep.subr.mxu0 0.0
    %1662 = vmatpush1.msra.mxu0 0.0
    %1663 = vmatprep.subr.mxu0 0.0
    %1664 = vmatpush1.msra.mxu0 0.0
    %1665 = vmatprep.subr.mxu0 0.0
    %1666 = vmatpush1.msra.mxu0 0.0
    %1667 = vmatprep.subr.mxu0 0.0
    %1668 = vmatpush1.msra.mxu0 0.0
    %1669 = vmatprep.subr.mxu0 0.0
    %1670 = vmatpush1.msra.mxu0 0.0
    %1671 = vmatprep.subr.mxu0 0.0
    %1672 = vmatpush1.msra.mxu0 0.0
    %1673 = vmatprep.subr.mxu0 0.0
    %1674 = vmatpush1.msra.mxu0 0.0
    %1675 = vmatprep.subr.mxu0 0.0
    %1676 = vmatpush1.msra.mxu0 0.0
    %1677 = vmatprep.subr.mxu0 0.0
    %1678 = vmatpush1.msra.mxu0 0.0
    %1679 = vmatprep.subr.mxu0 0.0
    %1680 = vmatpush1.msra.mxu0 0.0
    %1681 = vmatprep.subr.mxu0 0.0
    %1682 = vmatpush1.msra.mxu0 0.0
    %1683 = vmatprep.subr.mxu0 0.0
    %1684 = vmatpush1.msra.mxu0 0.0
    %1685 = vmatprep.subr.mxu0 0.0
    %1686 = vmatpush1.msra.mxu0 0.0
    %1687 = vmatprep.subr.mxu0 0.0
    %1688 = vmatpush1.msra.mxu0 0.0
    %1689 = vmatprep.subr.mxu0 0.0
    %1690 = vmatpush1.msra.mxu0 0.0
    %1691 = vmatprep.subr.mxu0 0.0
    %1692 = vmatpush1.msra.mxu0 0.0
    %1693 = vmatprep.subr.mxu0 0.0
    %1694 = vmatpush1.msra.mxu0 0.0
    %1695 = vmatprep.subr.mxu0 0.0
    %1696 = vmatpush1.msra.mxu0 0.0
    %1697 = vmatprep.subr.mxu0 0.0
    %1698 = vmatpush1.msra.mxu0 0.0
    %1699 = vmatprep.subr.mxu0 0.0
    %1700 = vmatpush1.msra.mxu0 0.0
    %1701 = vmatprep.subr.mxu0 0.0
    %1702 = vmatpush1.msra.mxu0 0.0
    %1703 = vmatprep.subr.mxu0 0.0
    %1704 = vmatpush1.msra.mxu0 0.0
    %1705 = vmatprep.subr.mxu0 0.0
    %1706 = vmatpush1.msra.mxu0 0.0
    %1707 = vmatprep.mubr.f32.mxu0 0.0
    %v1708 = vand.u32 %v158, 4294901760
    %1709 = vmatmul.mubr.f32.gmra.mrb[0].mxu0 %v1708
    %v1710 = vpop.f32.mrb[0].mxu0
    %v1711 = vadd.f32 %v1629, %v1710
    %v1712 = vpop.f32.mrb[0].mxu0
    %v1713 = vadd.f32 %v1631, %v1712
    %1714 = vdwg.mxu0
    %v1715 = vand.u32 %v98, 4294901760
    %v1716 = vsub.f32 %v98, %v1715
    %1717 = vmatprep.subr.mxu0 %v1716
    %v1718 = vand.u32 %v97, 4294901760
    %v1719 = vsub.f32 %v97, %v1718
    %1720 = vmatpush1.msra.mxu0 %v1719
    %1721 = vmatprep.subr.mxu0 0.0
    %1722 = vmatpush1.msra.mxu0 0.0
    %1723 = vmatprep.subr.mxu0 0.0
    %1724 = vmatpush1.msra.mxu0 0.0
    %1725 = vmatprep.subr.mxu0 0.0
    %1726 = vmatpush1.msra.mxu0 0.0
    %1727 = vmatprep.subr.mxu0 0.0
    %1728 = vmatpush1.msra.mxu0 0.0
    %1729 = vmatprep.subr.mxu0 0.0
    %1730 = vmatpush1.msra.mxu0 0.0
    %1731 = vmatprep.subr.mxu0 0.0
    %1732 = vmatpush1.msra.mxu0 0.0
    %1733 = vmatprep.subr.mxu0 0.0
    %1734 = vmatpush1.msra.mxu0 0.0
    %1735 = vmatprep.subr.mxu0 0.0
    %1736 = vmatpush1.msra.mxu0 0.0
    %1737 = vmatprep.subr.mxu0 0.0
    %1738 = vmatpush1.msra.mxu0 0.0
    %1739 = vmatprep.subr.mxu0 0.0
    %1740 = vmatpush1.msra.mxu0 0.0
    %1741 = vmatprep.subr.mxu0 0.0
    %1742 = vmatpush1.msra.mxu0 0.0
    %1743 = vmatprep.subr.mxu0 0.0
    %1744 = vmatpush1.msra.mxu0 0.0
    %1745 = vmatprep.subr.mxu0 0.0
    %1746 = vmatpush1.msra.mxu0 0.0
    %1747 = vmatprep.subr.mxu0 0.0
    %1748 = vmatpush1.msra.mxu0 0.0
    %1749 = vmatprep.subr.mxu0 0.0
    %1750 = vmatpush1.msra.mxu0 0.0
    %1751 = vmatprep.subr.mxu0 0.0
    %1752 = vmatpush1.msra.mxu0 0.0
    %1753 = vmatprep.subr.mxu0 0.0
    %1754 = vmatpush1.msra.mxu0 0.0
    %1755 = vmatprep.subr.mxu0 0.0
    %1756 = vmatpush1.msra.mxu0 0.0
    %1757 = vmatprep.subr.mxu0 0.0
    %1758 = vmatpush1.msra.mxu0 0.0
    %1759 = vmatprep.subr.mxu0 0.0
    %1760 = vmatpush1.msra.mxu0 0.0
    %1761 = vmatprep.subr.mxu0 0.0
    %1762 = vmatpush1.msra.mxu0 0.0
    %1763 = vmatprep.subr.mxu0 0.0
    %1764 = vmatpush1.msra.mxu0 0.0
    %1765 = vmatprep.subr.mxu0 0.0
    %1766 = vmatpush1.msra.mxu0 0.0
    %1767 = vmatprep.subr.mxu0 0.0
    %1768 = vmatpush1.msra.mxu0 0.0
    %1769 = vmatprep.subr.mxu0 0.0
    %1770 = vmatpush1.msra.mxu0 0.0
    %1771 = vmatprep.subr.mxu0 0.0
    %1772 = vmatpush1.msra.mxu0 0.0
    %1773 = vmatprep.subr.mxu0 0.0
    %1774 = vmatpush1.msra.mxu0 0.0
    %1775 = vmatprep.subr.mxu0 0.0
    %1776 = vmatpush1.msra.mxu0 0.0
    %1777 = vmatprep.subr.mxu0 0.0
    %1778 = vmatpush1.msra.mxu0 0.0
    %1779 = vmatprep.subr.mxu0 0.0
    %1780 = vmatpush1.msra.mxu0 0.0
    %1781 = vmatprep.subr.mxu0 0.0
    %1782 = vmatpush1.msra.mxu0 0.0
    %1783 = vmatprep.mubr.f32.mxu0 0.0
    %v1784 = vand.u32 %v158, 4294901760
    %v1785 = vsub.f32 %v158, %v1784
    %1786 = vmatmul.mubr.f32.gmra.mrb[0].mxu0 %v1785
    %v1787 = vpop.f32.mrb[0].mxu0
    %v1788 = vadd.f32 %v1711, %v1787
    %v1789 = vpop.f32.mrb[0].mxu0
    %v1790 = vadd.f32 %v1713, %v1789
    %1791 = vdwg.mxu0
    %v1792 = vand.u32 %v98, 4294901760
    %1793 = vmatprep.subr.mxu0 %v1792
    %v1794 = vand.u32 %v97, 4294901760
    %1795 = vmatpush1.msra.mxu0 %v1794
    %1796 = vmatprep.subr.mxu0 0.0
    %1797 = vmatpush1.msra.mxu0 0.0
    %1798 = vmatprep.subr.mxu0 0.0
    %1799 = vmatpush1.msra.mxu0 0.0
    %1800 = vmatprep.subr.mxu0 0.0
    %1801 = vmatpush1.msra.mxu0 0.0
    %1802 = vmatprep.subr.mxu0 0.0
    %1803 = vmatpush1.msra.mxu0 0.0
    %1804 = vmatprep.subr.mxu0 0.0
    %1805 = vmatpush1.msra.mxu0 0.0
    %1806 = vmatprep.subr.mxu0 0.0
    %1807 = vmatpush1.msra.mxu0 0.0
    %1808 = vmatprep.subr.mxu0 0.0
    %1809 = vmatpush1.msra.mxu0 0.0
    %1810 = vmatprep.subr.mxu0 0.0
    %1811 = vmatpush1.msra.mxu0 0.0
    %1812 = vmatprep.subr.mxu0 0.0
    %1813 = vmatpush1.msra.mxu0 0.0
    %1814 = vmatprep.subr.mxu0 0.0
    %1815 = vmatpush1.msra.mxu0 0.0
    %1816 = vmatprep.subr.mxu0 0.0
    %1817 = vmatpush1.msra.mxu0 0.0
    %1818 = vmatprep.subr.mxu0 0.0
    %1819 = vmatpush1.msra.mxu0 0.0
    %1820 = vmatprep.subr.mxu0 0.0
    %1821 = vmatpush1.msra.mxu0 0.0
    %1822 = vmatprep.subr.mxu0 0.0
    %1823 = vmatpush1.msra.mxu0 0.0
    %1824 = vmatprep.subr.mxu0 0.0
    %1825 = vmatpush1.msra.mxu0 0.0
    %1826 = vmatprep.subr.mxu0 0.0
    %1827 = vmatpush1.msra.mxu0 0.0
    %1828 = vmatprep.subr.mxu0 0.0
    %1829 = vmatpush1.msra.mxu0 0.0
    %1830 = vmatprep.subr.mxu0 0.0
    %1831 = vmatpush1.msra.mxu0 0.0
    %1832 = vmatprep.subr.mxu0 0.0
    %1833 = vmatpush1.msra.mxu0 0.0
    %1834 = vmatprep.subr.mxu0 0.0
    %1835 = vmatpush1.msra.mxu0 0.0
    %1836 = vmatprep.subr.mxu0 0.0
    %1837 = vmatpush1.msra.mxu0 0.0
    %1838 = vmatprep.subr.mxu0 0.0
    %1839 = vmatpush1.msra.mxu0 0.0
    %1840 = vmatprep.subr.mxu0 0.0
    %1841 = vmatpush1.msra.mxu0 0.0
    %1842 = vmatprep.subr.mxu0 0.0
    %1843 = vmatpush1.msra.mxu0 0.0
    %1844 = vmatprep.subr.mxu0 0.0
    %1845 = vmatpush1.msra.mxu0 0.0
    %1846 = vmatprep.subr.mxu0 0.0
    %1847 = vmatpush1.msra.mxu0 0.0
    %1848 = vmatprep.subr.mxu0 0.0
    %1849 = vmatpush1.msra.mxu0 0.0
    %1850 = vmatprep.subr.mxu0 0.0
    %1851 = vmatpush1.msra.mxu0 0.0
    %1852 = vmatprep.subr.mxu0 0.0
    %1853 = vmatpush1.msra.mxu0 0.0
    %1854 = vmatprep.subr.mxu0 0.0
    %1855 = vmatpush1.msra.mxu0 0.0
    %1856 = vmatprep.subr.mxu0 0.0
    %1857 = vmatpush1.msra.mxu0 0.0
    %1858 = vmatprep.mubr.f32.mxu0 0.0
    %v1859 = vand.u32 %v158, 4294901760
    %v1860 = vsub.f32 %v158, %v1859
    %v1861 = vand.u32 %v1860, 4294901760
    %1862 = vmatmul.mubr.f32.gmra.mrb[0].mxu0 %v1861
    %v1863 = vpop.f32.mrb[0].mxu0
    %v1864 = vadd.f32 %v1788, %v1863
    %v1865 = vpop.f32.mrb[0].mxu0
    %v1866 = vadd.f32 %v1790, %v1865
    %1867 = vdwg.mxu0
    %v1868 = vand.u32 %v98, 4294901760
    %v1869 = vsub.f32 %v98, %v1868
    %v1870 = vand.u32 %v1869, 4294901760
    %1871 = vmatprep.subr.mxu0 %v1870
    %v1872 = vand.u32 %v97, 4294901760
    %v1873 = vsub.f32 %v97, %v1872
    %v1874 = vand.u32 %v1873, 4294901760
    %1875 = vmatpush1.msra.mxu0 %v1874
    %1876 = vmatprep.subr.mxu0 0.0
    %1877 = vmatpush1.msra.mxu0 0.0
    %1878 = vmatprep.subr.mxu0 0.0
    %1879 = vmatpush1.msra.mxu0 0.0
    %1880 = vmatprep.subr.mxu0 0.0
    %1881 = vmatpush1.msra.mxu0 0.0
    %1882 = vmatprep.subr.mxu0 0.0
    %1883 = vmatpush1.msra.mxu0 0.0
    %1884 = vmatprep.subr.mxu0 0.0
    %1885 = vmatpush1.msra.mxu0 0.0
    %1886 = vmatprep.subr.mxu0 0.0
    %1887 = vmatpush1.msra.mxu0 0.0
    %1888 = vmatprep.subr.mxu0 0.0
    %1889 = vmatpush1.msra.mxu0 0.0
    %1890 = vmatprep.subr.mxu0 0.0
    %1891 = vmatpush1.msra.mxu0 0.0
    %1892 = vmatprep.subr.mxu0 0.0
    %1893 = vmatpush1.msra.mxu0 0.0
    %1894 = vmatprep.subr.mxu0 0.0
    %1895 = vmatpush1.msra.mxu0 0.0
    %1896 = vmatprep.subr.mxu0 0.0
    %1897 = vmatpush1.msra.mxu0 0.0
    %1898 = vmatprep.subr.mxu0 0.0
    %1899 = vmatpush1.msra.mxu0 0.0
    %1900 = vmatprep.subr.mxu0 0.0
    %1901 = vmatpush1.msra.mxu0 0.0
    %1902 = vmatprep.subr.mxu0 0.0
    %1903 = vmatpush1.msra.mxu0 0.0
    %1904 = vmatprep.subr.mxu0 0.0
    %1905 = vmatpush1.msra.mxu0 0.0
    %1906 = vmatprep.subr.mxu0 0.0
    %1907 = vmatpush1.msra.mxu0 0.0
    %1908 = vmatprep.subr.mxu0 0.0
    %1909 = vmatpush1.msra.mxu0 0.0
    %1910 = vmatprep.subr.mxu0 0.0
    %1911 = vmatpush1.msra.mxu0 0.0
    %1912 = vmatprep.subr.mxu0 0.0
    %1913 = vmatpush1.msra.mxu0 0.0
    %1914 = vmatprep.subr.mxu0 0.0
    %1915 = vmatpush1.msra.mxu0 0.0
    %1916 = vmatprep.subr.mxu0 0.0
    %1917 = vmatpush1.msra.mxu0 0.0
    %1918 = vmatprep.subr.mxu0 0.0
    %1919 = vmatpush1.msra.mxu0 0.0
    %1920 = vmatprep.subr.mxu0 0.0
    %1921 = vmatpush1.msra.mxu0 0.0
    %1922 = vmatprep.subr.mxu0 0.0
    %1923 = vmatpush1.msra.mxu0 0.0
    %1924 = vmatprep.subr.mxu0 0.0
    %1925 = vmatpush1.msra.mxu0 0.0
    %1926 = vmatprep.subr.mxu0 0.0
    %1927 = vmatpush1.msra.mxu0 0.0
    %1928 = vmatprep.subr.mxu0 0.0
    %1929 = vmatpush1.msra.mxu0 0.0
    %1930 = vmatprep.subr.mxu0 0.0
    %1931 = vmatpush1.msra.mxu0 0.0
    %1932 = vmatprep.subr.mxu0 0.0
    %1933 = vmatpush1.msra.mxu0 0.0
    %1934 = vmatprep.subr.mxu0 0.0
    %1935 = vmatpush1.msra.mxu0 0.0
    %1936 = vmatprep.subr.mxu0 0.0
    %1937 = vmatpush1.msra.mxu0 0.0
    %1938 = vmatprep.mubr.f32.mxu0 0.0
    %v1939 = vand.u32 %v158, 4294901760
    %1940 = vmatmul.mubr.f32.gmra.mrb[0].mxu0 %v1939
    %v1941 = vpop.f32.mrb[0].mxu0
    %v1942 = vadd.f32 %v1864, %v1941
    %v1943 = vpop.f32.mrb[0].mxu0
    %v1944 = vadd.f32 %v1866, %v1943
    %1945 = vdwg.mxu0
    %v1946 = vand.u32 %v98, 4294901760
    %1947 = vmatprep.subr.mxu0 %v1946
    %v1948 = vand.u32 %v97, 4294901760
    %1949 = vmatpush1.msra.mxu0 %v1948
    %1950 = vmatprep.subr.mxu0 0.0
    %1951 = vmatpush1.msra.mxu0 0.0
    %1952 = vmatprep.subr.mxu0 0.0
    %1953 = vmatpush1.msra.mxu0 0.0
    %1954 = vmatprep.subr.mxu0 0.0
    %1955 = vmatpush1.msra.mxu0 0.0
    %1956 = vmatprep.subr.mxu0 0.0
    %1957 = vmatpush1.msra.mxu0 0.0
    %1958 = vmatprep.subr.mxu0 0.0
    %1959 = vmatpush1.msra.mxu0 0.0
    %1960 = vmatprep.subr.mxu0 0.0
    %1961 = vmatpush1.msra.mxu0 0.0
    %1962 = vmatprep.subr.mxu0 0.0
    %1963 = vmatpush1.msra.mxu0 0.0
    %1964 = vmatprep.subr.mxu0 0.0
    %1965 = vmatpush1.msra.mxu0 0.0
    %1966 = vmatprep.subr.mxu0 0.0
    %1967 = vmatpush1.msra.mxu0 0.0
    %1968 = vmatprep.subr.mxu0 0.0
    %1969 = vmatpush1.msra.mxu0 0.0
    %1970 = vmatprep.subr.mxu0 0.0
    %1971 = vmatpush1.msra.mxu0 0.0
    %1972 = vmatprep.subr.mxu0 0.0
    %1973 = vmatpush1.msra.mxu0 0.0
    %1974 = vmatprep.subr.mxu0 0.0
    %1975 = vmatpush1.msra.mxu0 0.0
    %1976 = vmatprep.subr.mxu0 0.0
    %1977 = vmatpush1.msra.mxu0 0.0
    %1978 = vmatprep.subr.mxu0 0.0
    %1979 = vmatpush1.msra.mxu0 0.0
    %1980 = vmatprep.subr.mxu0 0.0
    %1981 = vmatpush1.msra.mxu0 0.0
    %1982 = vmatprep.subr.mxu0 0.0
    %1983 = vmatpush1.msra.mxu0 0.0
    %1984 = vmatprep.subr.mxu0 0.0
    %1985 = vmatpush1.msra.mxu0 0.0
    %1986 = vmatprep.subr.mxu0 0.0
    %1987 = vmatpush1.msra.mxu0 0.0
    %1988 = vmatprep.subr.mxu0 0.0
    %1989 = vmatpush1.msra.mxu0 0.0
    %1990 = vmatprep.subr.mxu0 0.0
    %1991 = vmatpush1.msra.mxu0 0.0
    %1992 = vmatprep.subr.mxu0 0.0
    %1993 = vmatpush1.msra.mxu0 0.0
    %1994 = vmatprep.subr.mxu0 0.0
    %1995 = vmatpush1.msra.mxu0 0.0
    %1996 = vmatprep.subr.mxu0 0.0
    %1997 = vmatpush1.msra.mxu0 0.0
    %1998 = vmatprep.subr.mxu0 0.0
    %1999 = vmatpush1.msra.mxu0 0.0
    %2000 = vmatprep.subr.mxu0 0.0
    %2001 = vmatpush1.msra.mxu0 0.0
    %2002 = vmatprep.subr.mxu0 0.0
    %2003 = vmatpush1.msra.mxu0 0.0
    %2004 = vmatprep.subr.mxu0 0.0
    %2005 = vmatpush1.msra.mxu0 0.0
    %2006 = vmatprep.subr.mxu0 0.0
    %2007 = vmatpush1.msra.mxu0 0.0
    %2008 = vmatprep.subr.mxu0 0.0
    %2009 = vmatpush1.msra.mxu0 0.0
    %2010 = vmatprep.subr.mxu0 0.0
    %2011 = vmatpush1.msra.mxu0 0.0
    %2012 = vmatprep.mubr.f32.mxu0 0.0
    %v2013 = vand.u32 %v158, 4294901760
    %2014 = vmatmul.mubr.f32.gmra.mrb[0].mxu0 %v2013
    %v2015 = vpop.f32.mrb[0].mxu0
    %v2016 = vadd.f32 %v1942, %v2015
    %v2017 = vpop.f32.mrb[0].mxu0
    %v2018 = vadd.f32 %v1944, %v2017
    %2019 = vdwg.mxu0
    %v2020 = vmul.f32 %v147, %v621
    %v2021 = vmul.f32 %v148, %v623
    %v2022 = vmul.f32 %v149, %v1086
    %v2023 = vmul.f32 %v150, %v1088
    %v2024 = vmul.f32 %v151, %v1551
    %v2025 = vmul.f32 %v152, %v1553
    %v2026 = vmul.f32 %v153, %v2016
    %v2027 = vmul.f32 %v154, %v2018
    %v2028 = vrot.slane %v2020, 4
    %v2029 = vadd.f32 %v2020, %v2028
    %v2030 = vrot.slane %v2029, 2
    %v2031 = vadd.f32 %v2029, %v2030
    %v2032 = vrot.slane %v2031, 1
    %v2033 = vadd.f32 %v2031, %v2032
    %v2034 = vrot.slane %v2021, 4
    %v2035 = vadd.f32 %v2021, %v2034
    %v2036 = vrot.slane %v2035, 2
    %v2037 = vadd.f32 %v2035, %v2036
    %v2038 = vrot.slane %v2037, 1
    %v2039 = vadd.f32 %v2037, %v2038
    %v2040 = vrot.slane %v2022, 4
    %v2041 = vadd.f32 %v2022, %v2040
    %v2042 = vrot.slane %v2041, 2
    %v2043 = vadd.f32 %v2041, %v2042
    %v2044 = vrot.slane %v2043, 1
    %v2045 = vadd.f32 %v2043, %v2044
    %v2046 = vrot.slane %v2023, 4
    %v2047 = vadd.f32 %v2023, %v2046
    %v2048 = vrot.slane %v2047, 2
    %v2049 = vadd.f32 %v2047, %v2048
    %v2050 = vrot.slane %v2049, 1
    %v2051 = vadd.f32 %v2049, %v2050
    %v2052 = vrot.slane %v2024, 4
    %v2053 = vadd.f32 %v2024, %v2052
    %v2054 = vrot.slane %v2053, 2
    %v2055 = vadd.f32 %v2053, %v2054
    %v2056 = vrot.slane %v2055, 1
    %v2057 = vadd.f32 %v2055, %v2056
    %v2058 = vrot.slane %v2025, 4
    %v2059 = vadd.f32 %v2025, %v2058
    %v2060 = vrot.slane %v2059, 2
    %v2061 = vadd.f32 %v2059, %v2060
    %v2062 = vrot.slane %v2061, 1
    %v2063 = vadd.f32 %v2061, %v2062
    %v2064 = vrot.slane %v2026, 4
    %v2065 = vadd.f32 %v2026, %v2064
    %v2066 = vrot.slane %v2065, 2
    %v2067 = vadd.f32 %v2065, %v2066
    %v2068 = vrot.slane %v2067, 1
    %v2069 = vadd.f32 %v2067, %v2068
    %v2070 = vrot.slane %v2027, 4
    %v2071 = vadd.f32 %v2027, %v2070
    %v2072 = vrot.slane %v2071, 2
    %v2073 = vadd.f32 %v2071, %v2072
    %v2074 = vrot.slane %v2073, 1
    %v2075 = vadd.f32 %v2073, %v2074
    %v2084 = vcombine.low %v2033, %v2039
    %v2085 = vcombine.low %v2045, %v2051
    %v2086 = vcombine.low %v2057, %v2063
    %v2087 = vcombine.low %v2069, %v2075
    %v2089 = vunpack.c.l.s4 1966171168
    %v2090 = vunpack.c.0.s8 %v2089
    %v2091 = vlaneseq
    %v2092 = vshrl.u32 %v2091, 7
    %v2093 = vsub.s32 %v2090, %v2092
    %v2094 = vrot.slane %v2084, %v2093
    %v2096 = vunpack.c.l.s4 1966171168
    %v2097 = vunpack.c.0.s8 %v2096
    %v2098 = vlaneseq
    %v2099 = vshrl.u32 %v2098, 7
    %v2100 = vsub.s32 %v2097, %v2099
    %v2101 = vrot.slane %v2085, %v2100
    %v2103 = vunpack.c.l.s4 1966171168
    %v2104 = vunpack.c.0.s8 %v2103
    %v2105 = vlaneseq
    %v2106 = vshrl.u32 %v2105, 7
    %v2107 = vsub.s32 %v2104, %v2106
    %v2108 = vrot.slane %v2086, %v2107
    %v2110 = vunpack.c.l.s4 1966171168
    %v2111 = vunpack.c.0.s8 %v2110
    %v2112 = vlaneseq
    %v2113 = vshrl.u32 %v2112, 7
    %v2114 = vsub.s32 %v2111, %v2113
    %v2115 = vrot.slane %v2087, %v2114
    %v2116 = vcombine.low %v2094, %v2101
    %v2117 = vcombine.low %v2108, %v2115
    %v2119 = vunpack.c.l.s4 1966171168
    %v2120 = vunpack.c.0.s8 %v2119
    %v2121 = vlaneseq
    %v2122 = vshrl.u32 %v2121, 7
    %v2123 = vsub.s32 %v2120, %v2122
    %v2124 = vrot.slane %v2116, %v2123
    %v2126 = vunpack.c.l.s4 1966171168
    %v2127 = vunpack.c.0.s8 %v2126
    %v2128 = vlaneseq
    %v2129 = vshrl.u32 %v2128, 7
    %v2130 = vsub.s32 %v2127, %v2129
    %v2131 = vrot.slane %v2117, %v2130
    %v2132 = vcombine.low %v2124, %v2131
    %2134 = vst [vmem:[#allocation7] ss:$2 sm:$0xff] %v2132
    %s2135 = scalar_lea.vmem [#allocation2], 1
    %v2136 = vld [vmem:[%s2135] ss:$4 sm:$0xff]
    %s2137 = scalar_lea.vmem [#allocation2], 3
    %v2138 = vld [vmem:[%s2137] ss:$4 sm:$0xff]
    %v2139 = vlaneseq
    %v2140 = vshrl.u32 %v2139, 7
    %v2141 = vsub.s32 0, %v2140
    %v2142 = vrot.slane %v2138, %v2141
    %v2143 = vlaneseq
    %v2144 = vshrl.u32 %v2143, 7
    %v2145 = vsub.s32 1, %v2144
    %v2146 = vrot.slane %v2138, %v2145
    %v2147 = vlaneseq
    %v2148 = vshrl.u32 %v2147, 7
    %v2149 = vsub.s32 2, %v2148
    %v2150 = vrot.slane %v2138, %v2149
    %v2151 = vlaneseq
    %v2152 = vshrl.u32 %v2151, 7
    %v2153 = vsub.s32 3, %v2152
    %v2154 = vrot.slane %v2138, %v2153
    %v2155 = vlaneseq
    %v2156 = vshrl.u32 %v2155, 7
    %v2157 = vsub.s32 4, %v2156
    %v2158 = vrot.slane %v2138, %v2157
    %v2159 = vlaneseq
    %v2160 = vshrl.u32 %v2159, 7
    %v2161 = vsub.s32 5, %v2160
    %v2162 = vrot.slane %v2138, %v2161
    %v2163 = vlaneseq
    %v2164 = vshrl.u32 %v2163, 7
    %v2165 = vsub.s32 6, %v2164
    %v2166 = vrot.slane %v2138, %v2165
    %v2167 = vlaneseq
    %v2168 = vshrl.u32 %v2167, 7
    %v2169 = vsub.s32 7, %v2168
    %v2170 = vrot.slane %v2138, %v2169
    %vm2171 = vcmp.eq.s32.totalorder %v39, %v2142
    %vm2172 = vcmp.eq.s32.totalorder %v39, %v2146
    %vm2173 = vcmp.eq.s32.totalorder %v39, %v2150
    %vm2174 = vcmp.eq.s32.totalorder %v39, %v2154
    %vm2175 = vcmp.eq.s32.totalorder %v39, %v2158
    %vm2176 = vcmp.eq.s32.totalorder %v39, %v2162
    %vm2177 = vcmp.eq.s32.totalorder %v39, %v2166
    %vm2178 = vcmp.eq.s32.totalorder %v39, %v2170
    %v2179 = vsel %vm2171, 1, 0
    %v2180 = vsel %vm2172, 1, 0
    %v2181 = vsel %vm2173, 1, 0
    %v2182 = vsel %vm2174, 1, 0
    %v2183 = vsel %vm2175, 1, 0
    %v2184 = vsel %vm2176, 1, 0
    %v2185 = vsel %vm2177, 1, 0
    %v2186 = vsel %vm2178, 1, 0
    %v2187 = vcvt.s32.f32 %v2179
    %v2188 = vcvt.s32.f32 %v2180
    %v2189 = vcvt.s32.f32 %v2181
    %v2190 = vcvt.s32.f32 %v2182
    %v2191 = vcvt.s32.f32 %v2183
    %v2192 = vcvt.s32.f32 %v2184
    %v2193 = vcvt.s32.f32 %v2185
    %v2194 = vcvt.s32.f32 %v2186
    %v2195 = vlaneseq
    %v2196 = vshrl.u32 %v2195, 7
    %v2197 = vsub.s32 0, %v2196
    %v2198 = vrot.slane %v2136, %v2197
    %v2199 = vlaneseq
    %v2200 = vshrl.u32 %v2199, 7
    %v2201 = vsub.s32 1, %v2200
    %v2202 = vrot.slane %v2136, %v2201
    %v2203 = vlaneseq
    %v2204 = vshrl.u32 %v2203, 7
    %v2205 = vsub.s32 2, %v2204
    %v2206 = vrot.slane %v2136, %v2205
    %v2207 = vlaneseq
    %v2208 = vshrl.u32 %v2207, 7
    %v2209 = vsub.s32 3, %v2208
    %v2210 = vrot.slane %v2136, %v2209
    %v2211 = vlaneseq
    %v2212 = vshrl.u32 %v2211, 7
    %v2213 = vsub.s32 4, %v2212
    %v2214 = vrot.slane %v2136, %v2213
    %v2215 = vlaneseq
    %v2216 = vshrl.u32 %v2215, 7
    %v2217 = vsub.s32 5, %v2216
    %v2218 = vrot.slane %v2136, %v2217
    %v2219 = vlaneseq
    %v2220 = vshrl.u32 %v2219, 7
    %v2221 = vsub.s32 6, %v2220
    %v2222 = vrot.slane %v2136, %v2221
    %v2223 = vlaneseq
    %v2224 = vshrl.u32 %v2223, 7
    %v2225 = vsub.s32 7, %v2224
    %v2226 = vrot.slane %v2136, %v2225
    %vm2227 = vcmp.eq.s32.totalorder %v39, %v2198
    %vm2228 = vcmp.eq.s32.totalorder %v39, %v2202
    %vm2229 = vcmp.eq.s32.totalorder %v39, %v2206
    %vm2230 = vcmp.eq.s32.totalorder %v39, %v2210
    %vm2231 = vcmp.eq.s32.totalorder %v39, %v2214
    %vm2232 = vcmp.eq.s32.totalorder %v39, %v2218
    %vm2233 = vcmp.eq.s32.totalorder %v39, %v2222
    %vm2234 = vcmp.eq.s32.totalorder %v39, %v2226
    %v2235 = vsel %vm2227, 1, 0
    %v2236 = vsel %vm2228, 1, 0
    %v2237 = vsel %vm2229, 1, 0
    %v2238 = vsel %vm2230, 1, 0
    %v2239 = vsel %vm2231, 1, 0
    %v2240 = vsel %vm2232, 1, 0
    %v2241 = vsel %vm2233, 1, 0
    %v2242 = vsel %vm2234, 1, 0
    %v2243 = vcvt.s32.f32 %v2235
    %v2244 = vcvt.s32.f32 %v2236
    %v2245 = vcvt.s32.f32 %v2237
    %v2246 = vcvt.s32.f32 %v2238
    %v2247 = vcvt.s32.f32 %v2239
    %v2248 = vcvt.s32.f32 %v2240
    %v2249 = vcvt.s32.f32 %v2241
    %v2250 = vcvt.s32.f32 %v2242
    %s2251 = scalar_lea.vmem [#allocation5], 8
    %v2252 = vld [vmem:[%s2251] sm:$0xff]
    %v2254 = vsel %vm156, %v2252, 0
    %v2256 = vand.u32 %v2188, 4294901760
    %2257 = vmatprep.subr.mxu0 %v2256
    %v2258 = vand.u32 %v2187, 4294901760
    %2259 = vmatpush1.msra.mxu0 %v2258
    %2260 = vmatprep.subr.mxu0 0.0
    %2261 = vmatpush1.msra.mxu0 0.0
    %2262 = vmatprep.subr.mxu0 0.0
    %2263 = vmatpush1.msra.mxu0 0.0
    %2264 = vmatprep.subr.mxu0 0.0
    %2265 = vmatpush1.msra.mxu0 0.0
    %2266 = vmatprep.subr.mxu0 0.0
    %2267 = vmatpush1.msra.mxu0 0.0
    %2268 = vmatprep.subr.mxu0 0.0
    %2269 = vmatpush1.msra.mxu0 0.0
    %2270 = vmatprep.subr.mxu0 0.0
    %2271 = vmatpush1.msra.mxu0 0.0
    %2272 = vmatprep.subr.mxu0 0.0
    %2273 = vmatpush1.msra.mxu0 0.0
    %2274 = vmatprep.subr.mxu0 0.0
    %2275 = vmatpush1.msra.mxu0 0.0
    %2276 = vmatprep.subr.mxu0 0.0
    %2277 = vmatpush1.msra.mxu0 0.0
    %2278 = vmatprep.subr.mxu0 0.0
    %2279 = vmatpush1.msra.mxu0 0.0
    %2280 = vmatprep.subr.mxu0 0.0
    %2281 = vmatpush1.msra.mxu0 0.0
    %2282 = vmatprep.subr.mxu0 0.0
    %2283 = vmatpush1.msra.mxu0 0.0
    %2284 = vmatprep.subr.mxu0 0.0
    %2285 = vmatpush1.msra.mxu0 0.0
    %2286 = vmatprep.subr.mxu0 0.0
    %2287 = vmatpush1.msra.mxu0 0.0
    %2288 = vmatprep.subr.mxu0 0.0
    %2289 = vmatpush1.msra.mxu0 0.0
    %2290 = vmatprep.subr.mxu0 0.0
    %2291 = vmatpush1.msra.mxu0 0.0
    %2292 = vmatprep.subr.mxu0 0.0
    %2293 = vmatpush1.msra.mxu0 0.0
    %2294 = vmatprep.subr.mxu0 0.0
    %2295 = vmatpush1.msra.mxu0 0.0
    %2296 = vmatprep.subr.mxu0 0.0
    %2297 = vmatpush1.msra.mxu0 0.0
    %2298 = vmatprep.subr.mxu0 0.0
    %2299 = vmatpush1.msra.mxu0 0.0
    %2300 = vmatprep.subr.mxu0 0.0
    %2301 = vmatpush1.msra.mxu0 0.0
    %2302 = vmatprep.subr.mxu0 0.0
    %2303 = vmatpush1.msra.mxu0 0.0
    %2304 = vmatprep.subr.mxu0 0.0
    %2305 = vmatpush1.msra.mxu0 0.0
    %2306 = vmatprep.subr.mxu0 0.0
    %2307 = vmatpush1.msra.mxu0 0.0
    %2308 = vmatprep.subr.mxu0 0.0
    %2309 = vmatpush1.msra.mxu0 0.0
    %2310 = vmatprep.subr.mxu0 0.0
    %2311 = vmatpush1.msra.mxu0 0.0
    %2312 = vmatprep.subr.mxu0 0.0
    %2313 = vmatpush1.msra.mxu0 0.0
    %2314 = vmatprep.subr.mxu0 0.0
    %2315 = vmatpush1.msra.mxu0 0.0
    %2316 = vmatprep.subr.mxu0 0.0
    %2317 = vmatpush1.msra.mxu0 0.0
    %2318 = vmatprep.subr.mxu0 0.0
    %2319 = vmatpush1.msra.mxu0 0.0
    %2320 = vmatprep.subr.mxu0 0.0
    %2321 = vmatpush1.msra.mxu0 0.0
    %2322 = vmatprep.mubr.f32.mxu0 0.0
    %v2323 = vand.u32 %v2254, 4294901760
    %v2324 = vsub.f32 %v2254, %v2323
    %v2325 = vand.u32 %v2324, 4294901760
    %v2326 = vsub.f32 %v2324, %v2325
    %v2327 = vand.u32 %v2326, 4294901760
    %2328 = vmatmul.mubr.f32.gmra.mrb[0].mxu0 %v2327
    %v2329 = vpop.f32.mrb[0].mxu0
    %v2330 = vadd.f32 0.0, %v2329
    %v2331 = vpop.f32.mrb[0].mxu0
    %v2332 = vadd.f32 0.0, %v2331
    %2333 = vdwg.mxu0
    %v2334 = vand.u32 %v2188, 4294901760
    %v2335 = vsub.f32 %v2188, %v2334
    %v2336 = vand.u32 %v2335, 4294901760
    %v2337 = vsub.f32 %v2335, %v2336
    %v2338 = vand.u32 %v2337, 4294901760
    %2339 = vmatprep.subr.mxu0 %v2338
    %v2340 = vand.u32 %v2187, 4294901760
    %v2341 = vsub.f32 %v2187, %v2340
    %v2342 = vand.u32 %v2341, 4294901760
    %v2343 = vsub.f32 %v2341, %v2342
    %v2344 = vand.u32 %v2343, 4294901760
    %2345 = vmatpush1.msra.mxu0 %v2344
    %2346 = vmatprep.subr.mxu0 0.0
    %2347 = vmatpush1.msra.mxu0 0.0
    %2348 = vmatprep.subr.mxu0 0.0
    %2349 = vmatpush1.msra.mxu0 0.0
    %2350 = vmatprep.subr.mxu0 0.0
    %2351 = vmatpush1.msra.mxu0 0.0
    %2352 = vmatprep.subr.mxu0 0.0
    %2353 = vmatpush1.msra.mxu0 0.0
    %2354 = vmatprep.subr.mxu0 0.0
    %2355 = vmatpush1.msra.mxu0 0.0
    %2356 = vmatprep.subr.mxu0 0.0
    %2357 = vmatpush1.msra.mxu0 0.0
    %2358 = vmatprep.subr.mxu0 0.0
    %2359 = vmatpush1.msra.mxu0 0.0
    %2360 = vmatprep.subr.mxu0 0.0
    %2361 = vmatpush1.msra.mxu0 0.0
    %2362 = vmatprep.subr.mxu0 0.0
    %2363 = vmatpush1.msra.mxu0 0.0
    %2364 = vmatprep.subr.mxu0 0.0
    %2365 = vmatpush1.msra.mxu0 0.0
    %2366 = vmatprep.subr.mxu0 0.0
    %2367 = vmatpush1.msra.mxu0 0.0
    %2368 = vmatprep.subr.mxu0 0.0
    %2369 = vmatpush1.msra.mxu0 0.0
    %2370 = vmatprep.subr.mxu0 0.0
    %2371 = vmatpush1.msra.mxu0 0.0
    %2372 = vmatprep.subr.mxu0 0.0
    %2373 = vmatpush1.msra.mxu0 0.0
    %2374 = vmatprep.subr.mxu0 0.0
    %2375 = vmatpush1.msra.mxu0 0.0
    %2376 = vmatprep.subr.mxu0 0.0
    %2377 = vmatpush1.msra.mxu0 0.0
    %2378 = vmatprep.subr.mxu0 0.0
    %2379 = vmatpush1.msra.mxu0 0.0
    %2380 = vmatprep.subr.mxu0 0.0
    %2381 = vmatpush1.msra.mxu0 0.0
    %2382 = vmatprep.subr.mxu0 0.0
    %2383 = vmatpush1.msra.mxu0 0.0
    %2384 = vmatprep.subr.mxu0 0.0
    %2385 = vmatpush1.msra.mxu0 0.0
    %2386 = vmatprep.subr.mxu0 0.0
    %2387 = vmatpush1.msra.mxu0 0.0
    %2388 = vmatprep.subr.mxu0 0.0
    %2389 = vmatpush1.msra.mxu0 0.0
    %2390 = vmatprep.subr.mxu0 0.0
    %2391 = vmatpush1.msra.mxu0 0.0
    %2392 = vmatprep.subr.mxu0 0.0
    %2393 = vmatpush1.msra.mxu0 0.0
    %2394 = vmatprep.subr.mxu0 0.0
    %2395 = vmatpush1.msra.mxu0 0.0
    %2396 = vmatprep.subr.mxu0 0.0
    %2397 = vmatpush1.msra.mxu0 0.0
    %2398 = vmatprep.subr.mxu0 0.0
    %2399 = vmatpush1.msra.mxu0 0.0
    %2400 = vmatprep.subr.mxu0 0.0
    %2401 = vmatpush1.msra.mxu0 0.0
    %2402 = vmatprep.subr.mxu0 0.0
    %2403 = vmatpush1.msra.mxu0 0.0
    %2404 = vmatprep.subr.mxu0 0.0
    %2405 = vmatpush1.msra.mxu0 0.0
    %2406 = vmatprep.subr.mxu0 0.0
    %2407 = vmatpush1.msra.mxu0 0.0
    %2408 = vmatprep.mubr.f32.mxu0 0.0
    %v2409 = vand.u32 %v2254, 4294901760
    %2410 = vmatmul.mubr.f32.gmra.mrb[0].mxu0 %v2409
    %v2411 = vpop.f32.mrb[0].mxu0
    %v2412 = vadd.f32 %v2330, %v2411
    %v2413 = vpop.f32.mrb[0].mxu0
    %v2414 = vadd.f32 %v2332, %v2413
    %2415 = vdwg.mxu0
    %v2416 = vand.u32 %v2188, 4294901760
    %v2417 = vsub.f32 %v2188, %v2416
    %2418 = vmatprep.subr.mxu0 %v2417
    %v2419 = vand.u32 %v2187, 4294901760
    %v2420 = vsub.f32 %v2187, %v2419
    %2421 = vmatpush1.msra.mxu0 %v2420
    %2422 = vmatprep.subr.mxu0 0.0
    %2423 = vmatpush1.msra.mxu0 0.0
    %2424 = vmatprep.subr.mxu0 0.0
    %2425 = vmatpush1.msra.mxu0 0.0
    %2426 = vmatprep.subr.mxu0 0.0
    %2427 = vmatpush1.msra.mxu0 0.0
    %2428 = vmatprep.subr.mxu0 0.0
    %2429 = vmatpush1.msra.mxu0 0.0
    %2430 = vmatprep.subr.mxu0 0.0
    %2431 = vmatpush1.msra.mxu0 0.0
    %2432 = vmatprep.subr.mxu0 0.0
    %2433 = vmatpush1.msra.mxu0 0.0
    %2434 = vmatprep.subr.mxu0 0.0
    %2435 = vmatpush1.msra.mxu0 0.0
    %2436 = vmatprep.subr.mxu0 0.0
    %2437 = vmatpush1.msra.mxu0 0.0
    %2438 = vmatprep.subr.mxu0 0.0
    %2439 = vmatpush1.msra.mxu0 0.0
    %2440 = vmatprep.subr.mxu0 0.0
    %2441 = vmatpush1.msra.mxu0 0.0
    %2442 = vmatprep.subr.mxu0 0.0
    %2443 = vmatpush1.msra.mxu0 0.0
    %2444 = vmatprep.subr.mxu0 0.0
    %2445 = vmatpush1.msra.mxu0 0.0
    %2446 = vmatprep.subr.mxu0 0.0
    %2447 = vmatpush1.msra.mxu0 0.0
    %2448 = vmatprep.subr.mxu0 0.0
    %2449 = vmatpush1.msra.mxu0 0.0
    %2450 = vmatprep.subr.mxu0 0.0
    %2451 = vmatpush1.msra.mxu0 0.0
    %2452 = vmatprep.subr.mxu0 0.0
    %2453 = vmatpush1.msra.mxu0 0.0
    %2454 = vmatprep.subr.mxu0 0.0
    %2455 = vmatpush1.msra.mxu0 0.0
    %2456 = vmatprep.subr.mxu0 0.0
    %2457 = vmatpush1.msra.mxu0 0.0
    %2458 = vmatprep.subr.mxu0 0.0
    %2459 = vmatpush1.msra.mxu0 0.0
    %2460 = vmatprep.subr.mxu0 0.0
    %2461 = vmatpush1.msra.mxu0 0.0
    %2462 = vmatprep.subr.mxu0 0.0
    %2463 = vmatpush1.msra.mxu0 0.0
    %2464 = vmatprep.subr.mxu0 0.0
    %2465 = vmatpush1.msra.mxu0 0.0
    %2466 = vmatprep.subr.mxu0 0.0
    %2467 = vmatpush1.msra.mxu0 0.0
    %2468 = vmatprep.subr.mxu0 0.0
    %2469 = vmatpush1.msra.mxu0 0.0
    %2470 = vmatprep.subr.mxu0 0.0
    %2471 = vmatpush1.msra.mxu0 0.0
    %2472 = vmatprep.subr.mxu0 0.0
    %2473 = vmatpush1.msra.mxu0 0.0
    %2474 = vmatprep.subr.mxu0 0.0
    %2475 = vmatpush1.msra.mxu0 0.0
    %2476 = vmatprep.subr.mxu0 0.0
    %2477 = vmatpush1.msra.mxu0 0.0
    %2478 = vmatprep.subr.mxu0 0.0
    %2479 = vmatpush1.msra.mxu0 0.0
    %2480 = vmatprep.subr.mxu0 0.0
    %2481 = vmatpush1.msra.mxu0 0.0
    %2482 = vmatprep.subr.mxu0 0.0
    %2483 = vmatpush1.msra.mxu0 0.0
    %2484 = vmatprep.mubr.f32.mxu0 0.0
    %v2485 = vand.u32 %v2254, 4294901760
    %v2486 = vsub.f32 %v2254, %v2485
    %2487 = vmatmul.mubr.f32.gmra.mrb[0].mxu0 %v2486
    %v2488 = vpop.f32.mrb[0].mxu0
    %v2489 = vadd.f32 %v2412, %v2488
    %v2490 = vpop.f32.mrb[0].mxu0
    %v2491 = vadd.f32 %v2414, %v2490
    %2492 = vdwg.mxu0
    %v2493 = vand.u32 %v2188, 4294901760
    %2494 = vmatprep.subr.mxu0 %v2493
    %v2495 = vand.u32 %v2187, 4294901760
    %2496 = vmatpush1.msra.mxu0 %v2495
    %2497 = vmatprep.subr.mxu0 0.0
    %2498 = vmatpush1.msra.mxu0 0.0
    %2499 = vmatprep.subr.mxu0 0.0
    %2500 = vmatpush1.msra.mxu0 0.0
    %2501 = vmatprep.subr.mxu0 0.0
    %2502 = vmatpush1.msra.mxu0 0.0
    %2503 = vmatprep.subr.mxu0 0.0
    %2504 = vmatpush1.msra.mxu0 0.0
    %2505 = vmatprep.subr.mxu0 0.0
    %2506 = vmatpush1.msra.mxu0 0.0
    %2507 = vmatprep.subr.mxu0 0.0
    %2508 = vmatpush1.msra.mxu0 0.0
    %2509 = vmatprep.subr.mxu0 0.0
    %2510 = vmatpush1.msra.mxu0 0.0
    %2511 = vmatprep.subr.mxu0 0.0
    %2512 = vmatpush1.msra.mxu0 0.0
    %2513 = vmatprep.subr.mxu0 0.0
    %2514 = vmatpush1.msra.mxu0 0.0
    %2515 = vmatprep.subr.mxu0 0.0
    %2516 = vmatpush1.msra.mxu0 0.0
    %2517 = vmatprep.subr.mxu0 0.0
    %2518 = vmatpush1.msra.mxu0 0.0
    %2519 = vmatprep.subr.mxu0 0.0
    %2520 = vmatpush1.msra.mxu0 0.0
    %2521 = vmatprep.subr.mxu0 0.0
    %2522 = vmatpush1.msra.mxu0 0.0
    %2523 = vmatprep.subr.mxu0 0.0
    %2524 = vmatpush1.msra.mxu0 0.0
    %2525 = vmatprep.subr.mxu0 0.0
    %2526 = vmatpush1.msra.mxu0 0.0
    %2527 = vmatprep.subr.mxu0 0.0
    %2528 = vmatpush1.msra.mxu0 0.0
    %2529 = vmatprep.subr.mxu0 0.0
    %2530 = vmatpush1.msra.mxu0 0.0
    %2531 = vmatprep.subr.mxu0 0.0
    %2532 = vmatpush1.msra.mxu0 0.0
    %2533 = vmatprep.subr.mxu0 0.0
    %2534 = vmatpush1.msra.mxu0 0.0
    %2535 = vmatprep.subr.mxu0 0.0
    %2536 = vmatpush1.msra.mxu0 0.0
    %2537 = vmatprep.subr.mxu0 0.0
    %2538 = vmatpush1.msra.mxu0 0.0
    %2539 = vmatprep.subr.mxu0 0.0
    %2540 = vmatpush1.msra.mxu0 0.0
    %2541 = vmatprep.subr.mxu0 0.0
    %2542 = vmatpush1.msra.mxu0 0.0
    %2543 = vmatprep.subr.mxu0 0.0
    %2544 = vmatpush1.msra.mxu0 0.0
    %2545 = vmatprep.subr.mxu0 0.0
    %2546 = vmatpush1.msra.mxu0 0.0
    %2547 = vmatprep.subr.mxu0 0.0
    %2548 = vmatpush1.msra.mxu0 0.0
    %2549 = vmatprep.subr.mxu0 0.0
    %2550 = vmatpush1.msra.mxu0 0.0
    %2551 = vmatprep.subr.mxu0 0.0
    %2552 = vmatpush1.msra.mxu0 0.0
    %2553 = vmatprep.subr.mxu0 0.0
    %2554 = vmatpush1.msra.mxu0 0.0
    %2555 = vmatprep.subr.mxu0 0.0
    %2556 = vmatpush1.msra.mxu0 0.0
    %2557 = vmatprep.subr.mxu0 0.0
    %2558 = vmatpush1.msra.mxu0 0.0
    %2559 = vmatprep.mubr.f32.mxu0 0.0
    %v2560 = vand.u32 %v2254, 4294901760
    %v2561 = vsub.f32 %v2254, %v2560
    %v2562 = vand.u32 %v2561, 4294901760
    %2563 = vmatmul.mubr.f32.gmra.mrb[0].mxu0 %v2562
    %v2564 = vpop.f32.mrb[0].mxu0
    %v2565 = vadd.f32 %v2489, %v2564
    %v2566 = vpop.f32.mrb[0].mxu0
    %v2567 = vadd.f32 %v2491, %v2566
    %2568 = vdwg.mxu0
    %v2569 = vand.u32 %v2188, 4294901760
    %v2570 = vsub.f32 %v2188, %v2569
    %v2571 = vand.u32 %v2570, 4294901760
    %2572 = vmatprep.subr.mxu0 %v2571
    %v2573 = vand.u32 %v2187, 4294901760
    %v2574 = vsub.f32 %v2187, %v2573
    %v2575 = vand.u32 %v2574, 4294901760
    %2576 = vmatpush1.msra.mxu0 %v2575
    %2577 = vmatprep.subr.mxu0 0.0
    %2578 = vmatpush1.msra.mxu0 0.0
    %2579 = vmatprep.subr.mxu0 0.0
    %2580 = vmatpush1.msra.mxu0 0.0
    %2581 = vmatprep.subr.mxu0 0.0
    %2582 = vmatpush1.msra.mxu0 0.0
    %2583 = vmatprep.subr.mxu0 0.0
    %2584 = vmatpush1.msra.mxu0 0.0
    %2585 = vmatprep.subr.mxu0 0.0
    %2586 = vmatpush1.msra.mxu0 0.0
    %2587 = vmatprep.subr.mxu0 0.0
    %2588 = vmatpush1.msra.mxu0 0.0
    %2589 = vmatprep.subr.mxu0 0.0
    %2590 = vmatpush1.msra.mxu0 0.0
    %2591 = vmatprep.subr.mxu0 0.0
    %2592 = vmatpush1.msra.mxu0 0.0
    %2593 = vmatprep.subr.mxu0 0.0
    %2594 = vmatpush1.msra.mxu0 0.0
    %2595 = vmatprep.subr.mxu0 0.0
    %2596 = vmatpush1.msra.mxu0 0.0
    %2597 = vmatprep.subr.mxu0 0.0
    %2598 = vmatpush1.msra.mxu0 0.0
    %2599 = vmatprep.subr.mxu0 0.0
    %2600 = vmatpush1.msra.mxu0 0.0
    %2601 = vmatprep.subr.mxu0 0.0
    %2602 = vmatpush1.msra.mxu0 0.0
    %2603 = vmatprep.subr.mxu0 0.0
    %2604 = vmatpush1.msra.mxu0 0.0
    %2605 = vmatprep.subr.mxu0 0.0
    %2606 = vmatpush1.msra.mxu0 0.0
    %2607 = vmatprep.subr.mxu0 0.0
    %2608 = vmatpush1.msra.mxu0 0.0
    %2609 = vmatprep.subr.mxu0 0.0
    %2610 = vmatpush1.msra.mxu0 0.0
    %2611 = vmatprep.subr.mxu0 0.0
    %2612 = vmatpush1.msra.mxu0 0.0
    %2613 = vmatprep.subr.mxu0 0.0
    %2614 = vmatpush1.msra.mxu0 0.0
    %2615 = vmatprep.subr.mxu0 0.0
    %2616 = vmatpush1.msra.mxu0 0.0
    %2617 = vmatprep.subr.mxu0 0.0
    %2618 = vmatpush1.msra.mxu0 0.0
    %2619 = vmatprep.subr.mxu0 0.0
    %2620 = vmatpush1.msra.mxu0 0.0
    %2621 = vmatprep.subr.mxu0 0.0
    %2622 = vmatpush1.msra.mxu0 0.0
    %2623 = vmatprep.subr.mxu0 0.0
    %2624 = vmatpush1.msra.mxu0 0.0
    %2625 = vmatprep.subr.mxu0 0.0
    %2626 = vmatpush1.msra.mxu0 0.0
    %2627 = vmatprep.subr.mxu0 0.0
    %2628 = vmatpush1.msra.mxu0 0.0
    %2629 = vmatprep.subr.mxu0 0.0
    %2630 = vmatpush1.msra.mxu0 0.0
    %2631 = vmatprep.subr.mxu0 0.0
    %2632 = vmatpush1.msra.mxu0 0.0
    %2633 = vmatprep.subr.mxu0 0.0
    %2634 = vmatpush1.msra.mxu0 0.0
    %2635 = vmatprep.subr.mxu0 0.0
    %2636 = vmatpush1.msra.mxu0 0.0
    %2637 = vmatprep.subr.mxu0 0.0
    %2638 = vmatpush1.msra.mxu0 0.0
    %2639 = vmatprep.mubr.f32.mxu0 0.0
    %v2640 = vand.u32 %v2254, 4294901760
    %2641 = vmatmul.mubr.f32.gmra.mrb[0].mxu0 %v2640
    %v2642 = vpop.f32.mrb[0].mxu0
    %v2643 = vadd.f32 %v2565, %v2642
    %v2644 = vpop.f32.mrb[0].mxu0
    %v2645 = vadd.f32 %v2567, %v2644
    %2646 = vdwg.mxu0
    %v2647 = vand.u32 %v2188, 4294901760
    %2648 = vmatprep.subr.mxu0 %v2647
    %v2649 = vand.u32 %v2187, 4294901760
    %2650 = vmatpush1.msra.mxu0 %v2649
    %2651 = vmatprep.subr.mxu0 0.0
    %2652 = vmatpush1.msra.mxu0 0.0
    %2653 = vmatprep.subr.mxu0 0.0
    %2654 = vmatpush1.msra.mxu0 0.0
    %2655 = vmatprep.subr.mxu0 0.0
    %2656 = vmatpush1.msra.mxu0 0.0
    %2657 = vmatprep.subr.mxu0 0.0
    %2658 = vmatpush1.msra.mxu0 0.0
    %2659 = vmatprep.subr.mxu0 0.0
    %2660 = vmatpush1.msra.mxu0 0.0
    %2661 = vmatprep.subr.mxu0 0.0
    %2662 = vmatpush1.msra.mxu0 0.0
    %2663 = vmatprep.subr.mxu0 0.0
    %2664 = vmatpush1.msra.mxu0 0.0
    %2665 = vmatprep.subr.mxu0 0.0
    %2666 = vmatpush1.msra.mxu0 0.0
    %2667 = vmatprep.subr.mxu0 0.0
    %2668 = vmatpush1.msra.mxu0 0.0
    %2669 = vmatprep.subr.mxu0 0.0
    %2670 = vmatpush1.msra.mxu0 0.0
    %2671 = vmatprep.subr.mxu0 0.0
    %2672 = vmatpush1.msra.mxu0 0.0
    %2673 = vmatprep.subr.mxu0 0.0
    %2674 = vmatpush1.msra.mxu0 0.0
    %2675 = vmatprep.subr.mxu0 0.0
    %2676 = vmatpush1.msra.mxu0 0.0
    %2677 = vmatprep.subr.mxu0 0.0
    %2678 = vmatpush1.msra.mxu0 0.0
    %2679 = vmatprep.subr.mxu0 0.0
    %2680 = vmatpush1.msra.mxu0 0.0
    %2681 = vmatprep.subr.mxu0 0.0
    %2682 = vmatpush1.msra.mxu0 0.0
    %2683 = vmatprep.subr.mxu0 0.0
    %2684 = vmatpush1.msra.mxu0 0.0
    %2685 = vmatprep.subr.mxu0 0.0
    %2686 = vmatpush1.msra.mxu0 0.0
    %2687 = vmatprep.subr.mxu0 0.0
    %2688 = vmatpush1.msra.mxu0 0.0
    %2689 = vmatprep.subr.mxu0 0.0
    %2690 = vmatpush1.msra.mxu0 0.0
    %2691 = vmatprep.subr.mxu0 0.0
    %2692 = vmatpush1.msra.mxu0 0.0
    %2693 = vmatprep.subr.mxu0 0.0
    %2694 = vmatpush1.msra.mxu0 0.0
    %2695 = vmatprep.subr.mxu0 0.0
    %2696 = vmatpush1.msra.mxu0 0.0
    %2697 = vmatprep.subr.mxu0 0.0
    %2698 = vmatpush1.msra.mxu0 0.0
    %2699 = vmatprep.subr.mxu0 0.0
    %2700 = vmatpush1.msra.mxu0 0.0
    %2701 = vmatprep.subr.mxu0 0.0
    %2702 = vmatpush1.msra.mxu0 0.0
    %2703 = vmatprep.subr.mxu0 0.0
    %2704 = vmatpush1.msra.mxu0 0.0
    %2705 = vmatprep.subr.mxu0 0.0
    %2706 = vmatpush1.msra.mxu0 0.0
    %2707 = vmatprep.subr.mxu0 0.0
    %2708 = vmatpush1.msra.mxu0 0.0
    %2709 = vmatprep.subr.mxu0 0.0
    %2710 = vmatpush1.msra.mxu0 0.0
    %2711 = vmatprep.subr.mxu0 0.0
    %2712 = vmatpush1.msra.mxu0 0.0
    %2713 = vmatprep.mubr.f32.mxu0 0.0
    %v2714 = vand.u32 %v2254, 4294901760
    %2715 = vmatmul.mubr.f32.gmra.mrb[0].mxu0 %v2714
    %v2716 = vpop.f32.mrb[0].mxu0
    %v2717 = vadd.f32 %v2643, %v2716
    %v2718 = vpop.f32.mrb[0].mxu0
    %v2719 = vadd.f32 %v2645, %v2718
    %2720 = vdwg.mxu0
    %v2721 = vand.u32 %v2190, 4294901760
    %2722 = vmatprep.subr.mxu0 %v2721
    %v2723 = vand.u32 %v2189, 4294901760
    %2724 = vmatpush1.msra.mxu0 %v2723
    %2725 = vmatprep.subr.mxu0 0.0
    %2726 = vmatpush1.msra.mxu0 0.0
    %2727 = vmatprep.subr.mxu0 0.0
    %2728 = vmatpush1.msra.mxu0 0.0
    %2729 = vmatprep.subr.mxu0 0.0
    %2730 = vmatpush1.msra.mxu0 0.0
    %2731 = vmatprep.subr.mxu0 0.0
    %2732 = vmatpush1.msra.mxu0 0.0
    %2733 = vmatprep.subr.mxu0 0.0
    %2734 = vmatpush1.msra.mxu0 0.0
    %2735 = vmatprep.subr.mxu0 0.0
    %2736 = vmatpush1.msra.mxu0 0.0
    %2737 = vmatprep.subr.mxu0 0.0
    %2738 = vmatpush1.msra.mxu0 0.0
    %2739 = vmatprep.subr.mxu0 0.0
    %2740 = vmatpush1.msra.mxu0 0.0
    %2741 = vmatprep.subr.mxu0 0.0
    %2742 = vmatpush1.msra.mxu0 0.0
    %2743 = vmatprep.subr.mxu0 0.0
    %2744 = vmatpush1.msra.mxu0 0.0
    %2745 = vmatprep.subr.mxu0 0.0
    %2746 = vmatpush1.msra.mxu0 0.0
    %2747 = vmatprep.subr.mxu0 0.0
    %2748 = vmatpush1.msra.mxu0 0.0
    %2749 = vmatprep.subr.mxu0 0.0
    %2750 = vmatpush1.msra.mxu0 0.0
    %2751 = vmatprep.subr.mxu0 0.0
    %2752 = vmatpush1.msra.mxu0 0.0
    %2753 = vmatprep.subr.mxu0 0.0
    %2754 = vmatpush1.msra.mxu0 0.0
    %2755 = vmatprep.subr.mxu0 0.0
    %2756 = vmatpush1.msra.mxu0 0.0
    %2757 = vmatprep.subr.mxu0 0.0
    %2758 = vmatpush1.msra.mxu0 0.0
    %2759 = vmatprep.subr.mxu0 0.0
    %2760 = vmatpush1.msra.mxu0 0.0
    %2761 = vmatprep.subr.mxu0 0.0
    %2762 = vmatpush1.msra.mxu0 0.0
    %2763 = vmatprep.subr.mxu0 0.0
    %2764 = vmatpush1.msra.mxu0 0.0
    %2765 = vmatprep.subr.mxu0 0.0
    %2766 = vmatpush1.msra.mxu0 0.0
    %2767 = vmatprep.subr.mxu0 0.0
    %2768 = vmatpush1.msra.mxu0 0.0
    %2769 = vmatprep.subr.mxu0 0.0
    %2770 = vmatpush1.msra.mxu0 0.0
    %2771 = vmatprep.subr.mxu0 0.0
    %2772 = vmatpush1.msra.mxu0 0.0
    %2773 = vmatprep.subr.mxu0 0.0
    %2774 = vmatpush1.msra.mxu0 0.0
    %2775 = vmatprep.subr.mxu0 0.0
    %2776 = vmatpush1.msra.mxu0 0.0
    %2777 = vmatprep.subr.mxu0 0.0
    %2778 = vmatpush1.msra.mxu0 0.0
    %2779 = vmatprep.subr.mxu0 0.0
    %2780 = vmatpush1.msra.mxu0 0.0
    %2781 = vmatprep.subr.mxu0 0.0
    %2782 = vmatpush1.msra.mxu0 0.0
    %2783 = vmatprep.subr.mxu0 0.0
    %2784 = vmatpush1.msra.mxu0 0.0
    %2785 = vmatprep.subr.mxu0 0.0
    %2786 = vmatpush1.msra.mxu0 0.0
    %2787 = vmatprep.mubr.f32.mxu0 0.0
    %v2788 = vand.u32 %v2254, 4294901760
    %v2789 = vsub.f32 %v2254, %v2788
    %v2790 = vand.u32 %v2789, 4294901760
    %v2791 = vsub.f32 %v2789, %v2790
    %v2792 = vand.u32 %v2791, 4294901760
    %2793 = vmatmul.mubr.f32.gmra.mrb[0].mxu0 %v2792
    %v2794 = vpop.f32.mrb[0].mxu0
    %v2795 = vadd.f32 0.0, %v2794
    %v2796 = vpop.f32.mrb[0].mxu0
    %v2797 = vadd.f32 0.0, %v2796
    %2798 = vdwg.mxu0
    %v2799 = vand.u32 %v2190, 4294901760
    %v2800 = vsub.f32 %v2190, %v2799
    %v2801 = vand.u32 %v2800, 4294901760
    %v2802 = vsub.f32 %v2800, %v2801
    %v2803 = vand.u32 %v2802, 4294901760
    %2804 = vmatprep.subr.mxu0 %v2803
    %v2805 = vand.u32 %v2189, 4294901760
    %v2806 = vsub.f32 %v2189, %v2805
    %v2807 = vand.u32 %v2806, 4294901760
    %v2808 = vsub.f32 %v2806, %v2807
    %v2809 = vand.u32 %v2808, 4294901760
    %2810 = vmatpush1.msra.mxu0 %v2809
    %2811 = vmatprep.subr.mxu0 0.0
    %2812 = vmatpush1.msra.mxu0 0.0
    %2813 = vmatprep.subr.mxu0 0.0
    %2814 = vmatpush1.msra.mxu0 0.0
    %2815 = vmatprep.subr.mxu0 0.0
    %2816 = vmatpush1.msra.mxu0 0.0
    %2817 = vmatprep.subr.mxu0 0.0
    %2818 = vmatpush1.msra.mxu0 0.0
    %2819 = vmatprep.subr.mxu0 0.0
    %2820 = vmatpush1.msra.mxu0 0.0
    %2821 = vmatprep.subr.mxu0 0.0
    %2822 = vmatpush1.msra.mxu0 0.0
    %2823 = vmatprep.subr.mxu0 0.0
    %2824 = vmatpush1.msra.mxu0 0.0
    %2825 = vmatprep.subr.mxu0 0.0
    %2826 = vmatpush1.msra.mxu0 0.0
    %2827 = vmatprep.subr.mxu0 0.0
    %2828 = vmatpush1.msra.mxu0 0.0
    %2829 = vmatprep.subr.mxu0 0.0
    %2830 = vmatpush1.msra.mxu0 0.0
    %2831 = vmatprep.subr.mxu0 0.0
    %2832 = vmatpush1.msra.mxu0 0.0
    %2833 = vmatprep.subr.mxu0 0.0
    %2834 = vmatpush1.msra.mxu0 0.0
    %2835 = vmatprep.subr.mxu0 0.0
    %2836 = vmatpush1.msra.mxu0 0.0
    %2837 = vmatprep.subr.mxu0 0.0
    %2838 = vmatpush1.msra.mxu0 0.0
    %2839 = vmatprep.subr.mxu0 0.0
    %2840 = vmatpush1.msra.mxu0 0.0
    %2841 = vmatprep.subr.mxu0 0.0
    %2842 = vmatpush1.msra.mxu0 0.0
    %2843 = vmatprep.subr.mxu0 0.0
    %2844 = vmatpush1.msra.mxu0 0.0
    %2845 = vmatprep.subr.mxu0 0.0
    %2846 = vmatpush1.msra.mxu0 0.0
    %2847 = vmatprep.subr.mxu0 0.0
    %2848 = vmatpush1.msra.mxu0 0.0
    %2849 = vmatprep.subr.mxu0 0.0
    %2850 = vmatpush1.msra.mxu0 0.0
    %2851 = vmatprep.subr.mxu0 0.0
    %2852 = vmatpush1.msra.mxu0 0.0
    %2853 = vmatprep.subr.mxu0 0.0
    %2854 = vmatpush1.msra.mxu0 0.0
    %2855 = vmatprep.subr.mxu0 0.0
    %2856 = vmatpush1.msra.mxu0 0.0
    %2857 = vmatprep.subr.mxu0 0.0
    %2858 = vmatpush1.msra.mxu0 0.0
    %2859 = vmatprep.subr.mxu0 0.0
    %2860 = vmatpush1.msra.mxu0 0.0
    %2861 = vmatprep.subr.mxu0 0.0
    %2862 = vmatpush1.msra.mxu0 0.0
    %2863 = vmatprep.subr.mxu0 0.0
    %2864 = vmatpush1.msra.mxu0 0.0
    %2865 = vmatprep.subr.mxu0 0.0
    %2866 = vmatpush1.msra.mxu0 0.0
    %2867 = vmatprep.subr.mxu0 0.0
    %2868 = vmatpush1.msra.mxu0 0.0
    %2869 = vmatprep.subr.mxu0 0.0
    %2870 = vmatpush1.msra.mxu0 0.0
    %2871 = vmatprep.subr.mxu0 0.0
    %2872 = vmatpush1.msra.mxu0 0.0
    %2873 = vmatprep.mubr.f32.mxu0 0.0
    %v2874 = vand.u32 %v2254, 4294901760
    %2875 = vmatmul.mubr.f32.gmra.mrb[0].mxu0 %v2874
    %v2876 = vpop.f32.mrb[0].mxu0
    %v2877 = vadd.f32 %v2795, %v2876
    %v2878 = vpop.f32.mrb[0].mxu0
    %v2879 = vadd.f32 %v2797, %v2878
    %2880 = vdwg.mxu0
    %v2881 = vand.u32 %v2190, 4294901760
    %v2882 = vsub.f32 %v2190, %v2881
    %2883 = vmatprep.subr.mxu0 %v2882
    %v2884 = vand.u32 %v2189, 4294901760
    %v2885 = vsub.f32 %v2189, %v2884
    %2886 = vmatpush1.msra.mxu0 %v2885
    %2887 = vmatprep.subr.mxu0 0.0
    %2888 = vmatpush1.msra.mxu0 0.0
    %2889 = vmatprep.subr.mxu0 0.0
    %2890 = vmatpush1.msra.mxu0 0.0
    %2891 = vmatprep.subr.mxu0 0.0
    %2892 = vmatpush1.msra.mxu0 0.0
    %2893 = vmatprep.subr.mxu0 0.0
    %2894 = vmatpush1.msra.mxu0 0.0
    %2895 = vmatprep.subr.mxu0 0.0
    %2896 = vmatpush1.msra.mxu0 0.0
    %2897 = vmatprep.subr.mxu0 0.0
    %2898 = vmatpush1.msra.mxu0 0.0
    %2899 = vmatprep.subr.mxu0 0.0
    %2900 = vmatpush1.msra.mxu0 0.0
    %2901 = vmatprep.subr.mxu0 0.0
    %2902 = vmatpush1.msra.mxu0 0.0
    %2903 = vmatprep.subr.mxu0 0.0
    %2904 = vmatpush1.msra.mxu0 0.0
    %2905 = vmatprep.subr.mxu0 0.0
    %2906 = vmatpush1.msra.mxu0 0.0
    %2907 = vmatprep.subr.mxu0 0.0
    %2908 = vmatpush1.msra.mxu0 0.0
    %2909 = vmatprep.subr.mxu0 0.0
    %2910 = vmatpush1.msra.mxu0 0.0
    %2911 = vmatprep.subr.mxu0 0.0
    %2912 = vmatpush1.msra.mxu0 0.0
    %2913 = vmatprep.subr.mxu0 0.0
    %2914 = vmatpush1.msra.mxu0 0.0
    %2915 = vmatprep.subr.mxu0 0.0
    %2916 = vmatpush1.msra.mxu0 0.0
    %2917 = vmatprep.subr.mxu0 0.0
    %2918 = vmatpush1.msra.mxu0 0.0
    %2919 = vmatprep.subr.mxu0 0.0
    %2920 = vmatpush1.msra.mxu0 0.0
    %2921 = vmatprep.subr.mxu0 0.0
    %2922 = vmatpush1.msra.mxu0 0.0
    %2923 = vmatprep.subr.mxu0 0.0
    %2924 = vmatpush1.msra.mxu0 0.0
    %2925 = vmatprep.subr.mxu0 0.0
    %2926 = vmatpush1.msra.mxu0 0.0
    %2927 = vmatprep.subr.mxu0 0.0
    %2928 = vmatpush1.msra.mxu0 0.0
    %2929 = vmatprep.subr.mxu0 0.0
    %2930 = vmatpush1.msra.mxu0 0.0
    %2931 = vmatprep.subr.mxu0 0.0
    %2932 = vmatpush1.msra.mxu0 0.0
    %2933 = vmatprep.subr.mxu0 0.0
    %2934 = vmatpush1.msra.mxu0 0.0
    %2935 = vmatprep.subr.mxu0 0.0
    %2936 = vmatpush1.msra.mxu0 0.0
    %2937 = vmatprep.subr.mxu0 0.0
    %2938 = vmatpush1.msra.mxu0 0.0
    %2939 = vmatprep.subr.mxu0 0.0
    %2940 = vmatpush1.msra.mxu0 0.0
    %2941 = vmatprep.subr.mxu0 0.0
    %2942 = vmatpush1.msra.mxu0 0.0
    %2943 = vmatprep.subr.mxu0 0.0
    %2944 = vmatpush1.msra.mxu0 0.0
    %2945 = vmatprep.subr.mxu0 0.0
    %2946 = vmatpush1.msra.mxu0 0.0
    %2947 = vmatprep.subr.mxu0 0.0
    %2948 = vmatpush1.msra.mxu0 0.0
    %2949 = vmatprep.mubr.f32.mxu0 0.0
    %v2950 = vand.u32 %v2254, 4294901760
    %v2951 = vsub.f32 %v2254, %v2950
    %2952 = vmatmul.mubr.f32.gmra.mrb[0].mxu0 %v2951
    %v2953 = vpop.f32.mrb[0].mxu0
    %v2954 = vadd.f32 %v2877, %v2953
    %v2955 = vpop.f32.mrb[0].mxu0
    %v2956 = vadd.f32 %v2879, %v2955
    %2957 = vdwg.mxu0
    %v2958 = vand.u32 %v2190, 4294901760
    %2959 = vmatprep.subr.mxu0 %v2958
    %v2960 = vand.u32 %v2189, 4294901760
    %2961 = vmatpush1.msra.mxu0 %v2960
    %2962 = vmatprep.subr.mxu0 0.0
    %2963 = vmatpush1.msra.mxu0 0.0
    %2964 = vmatprep.subr.mxu0 0.0
    %2965 = vmatpush1.msra.mxu0 0.0
    %2966 = vmatprep.subr.mxu0 0.0
    %2967 = vmatpush1.msra.mxu0 0.0
    %2968 = vmatprep.subr.mxu0 0.0
    %2969 = vmatpush1.msra.mxu0 0.0
    %2970 = vmatprep.subr.mxu0 0.0
    %2971 = vmatpush1.msra.mxu0 0.0
    %2972 = vmatprep.subr.mxu0 0.0
    %2973 = vmatpush1.msra.mxu0 0.0
    %2974 = vmatprep.subr.mxu0 0.0
    %2975 = vmatpush1.msra.mxu0 0.0
    %2976 = vmatprep.subr.mxu0 0.0
    %2977 = vmatpush1.msra.mxu0 0.0
    %2978 = vmatprep.subr.mxu0 0.0
    %2979 = vmatpush1.msra.mxu0 0.0
    %2980 = vmatprep.subr.mxu0 0.0
    %2981 = vmatpush1.msra.mxu0 0.0
    %2982 = vmatprep.subr.mxu0 0.0
    %2983 = vmatpush1.msra.mxu0 0.0
    %2984 = vmatprep.subr.mxu0 0.0
    %2985 = vmatpush1.msra.mxu0 0.0
    %2986 = vmatprep.subr.mxu0 0.0
    %2987 = vmatpush1.msra.mxu0 0.0
    %2988 = vmatprep.subr.mxu0 0.0
    %2989 = vmatpush1.msra.mxu0 0.0
    %2990 = vmatprep.subr.mxu0 0.0
    %2991 = vmatpush1.msra.mxu0 0.0
    %2992 = vmatprep.subr.mxu0 0.0
    %2993 = vmatpush1.msra.mxu0 0.0
    %2994 = vmatprep.subr.mxu0 0.0
    %2995 = vmatpush1.msra.mxu0 0.0
    %2996 = vmatprep.subr.mxu0 0.0
    %2997 = vmatpush1.msra.mxu0 0.0
    %2998 = vmatprep.subr.mxu0 0.0
    %2999 = vmatpush1.msra.mxu0 0.0
    %3000 = vmatprep.subr.mxu0 0.0
    %3001 = vmatpush1.msra.mxu0 0.0
    %3002 = vmatprep.subr.mxu0 0.0
    %3003 = vmatpush1.msra.mxu0 0.0
    %3004 = vmatprep.subr.mxu0 0.0
    %3005 = vmatpush1.msra.mxu0 0.0
    %3006 = vmatprep.subr.mxu0 0.0
    %3007 = vmatpush1.msra.mxu0 0.0
    %3008 = vmatprep.subr.mxu0 0.0
    %3009 = vmatpush1.msra.mxu0 0.0
    %3010 = vmatprep.subr.mxu0 0.0
    %3011 = vmatpush1.msra.mxu0 0.0
    %3012 = vmatprep.subr.mxu0 0.0
    %3013 = vmatpush1.msra.mxu0 0.0
    %3014 = vmatprep.subr.mxu0 0.0
    %3015 = vmatpush1.msra.mxu0 0.0
    %3016 = vmatprep.subr.mxu0 0.0
    %3017 = vmatpush1.msra.mxu0 0.0
    %3018 = vmatprep.subr.mxu0 0.0
    %3019 = vmatpush1.msra.mxu0 0.0
    %3020 = vmatprep.subr.mxu0 0.0
    %3021 = vmatpush1.msra.mxu0 0.0
    %3022 = vmatprep.subr.mxu0 0.0
    %3023 = vmatpush1.msra.mxu0 0.0
    %3024 = vmatprep.mubr.f32.mxu0 0.0
    %v3025 = vand.u32 %v2254, 4294901760
    %v3026 = vsub.f32 %v2254, %v3025
    %v3027 = vand.u32 %v3026, 4294901760
    %3028 = vmatmul.mubr.f32.gmra.mrb[0].mxu0 %v3027
    %v3029 = vpop.f32.mrb[0].mxu0
    %v3030 = vadd.f32 %v2954, %v3029
    %v3031 = vpop.f32.mrb[0].mxu0
    %v3032 = vadd.f32 %v2956, %v3031
    %3033 = vdwg.mxu0
    %v3034 = vand.u32 %v2190, 4294901760
    %v3035 = vsub.f32 %v2190, %v3034
    %v3036 = vand.u32 %v3035, 4294901760
    %3037 = vmatprep.subr.mxu0 %v3036
    %v3038 = vand.u32 %v2189, 4294901760
    %v3039 = vsub.f32 %v2189, %v3038
    %v3040 = vand.u32 %v3039, 4294901760
    %3041 = vmatpush1.msra.mxu0 %v3040
    %3042 = vmatprep.subr.mxu0 0.0
    %3043 = vmatpush1.msra.mxu0 0.0
    %3044 = vmatprep.subr.mxu0 0.0
    %3045 = vmatpush1.msra.mxu0 0.0
    %3046 = vmatprep.subr.mxu0 0.0
    %3047 = vmatpush1.msra.mxu0 0.0
    %3048 = vmatprep.subr.mxu0 0.0
    %3049 = vmatpush1.msra.mxu0 0.0
    %3050 = vmatprep.subr.mxu0 0.0
    %3051 = vmatpush1.msra.mxu0 0.0
    %3052 = vmatprep.subr.mxu0 0.0
    %3053 = vmatpush1.msra.mxu0 0.0
    %3054 = vmatprep.subr.mxu0 0.0
    %3055 = vmatpush1.msra.mxu0 0.0
    %3056 = vmatprep.subr.mxu0 0.0
    %3057 = vmatpush1.msra.mxu0 0.0
    %3058 = vmatprep.subr.mxu0 0.0
    %3059 = vmatpush1.msra.mxu0 0.0
    %3060 = vmatprep.subr.mxu0 0.0
    %3061 = vmatpush1.msra.mxu0 0.0
    %3062 = vmatprep.subr.mxu0 0.0
    %3063 = vmatpush1.msra.mxu0 0.0
    %3064 = vmatprep.subr.mxu0 0.0
    %3065 = vmatpush1.msra.mxu0 0.0
    %3066 = vmatprep.subr.mxu0 0.0
    %3067 = vmatpush1.msra.mxu0 0.0
    %3068 = vmatprep.subr.mxu0 0.0
    %3069 = vmatpush1.msra.mxu0 0.0
    %3070 = vmatprep.subr.mxu0 0.0
    %3071 = vmatpush1.msra.mxu0 0.0
    %3072 = vmatprep.subr.mxu0 0.0
    %3073 = vmatpush1.msra.mxu0 0.0
    %3074 = vmatprep.subr.mxu0 0.0
    %3075 = vmatpush1.msra.mxu0 0.0
    %3076 = vmatprep.subr.mxu0 0.0
    %3077 = vmatpush1.msra.mxu0 0.0
    %3078 = vmatprep.subr.mxu0 0.0
    %3079 = vmatpush1.msra.mxu0 0.0
    %3080 = vmatprep.subr.mxu0 0.0
    %3081 = vmatpush1.msra.mxu0 0.0
    %3082 = vmatprep.subr.mxu0 0.0
    %3083 = vmatpush1.msra.mxu0 0.0
    %3084 = vmatprep.subr.mxu0 0.0
    %3085 = vmatpush1.msra.mxu0 0.0
    %3086 = vmatprep.subr.mxu0 0.0
    %3087 = vmatpush1.msra.mxu0 0.0
    %3088 = vmatprep.subr.mxu0 0.0
    %3089 = vmatpush1.msra.mxu0 0.0
    %3090 = vmatprep.subr.mxu0 0.0
    %3091 = vmatpush1.msra.mxu0 0.0
    %3092 = vmatprep.subr.mxu0 0.0
    %3093 = vmatpush1.msra.mxu0 0.0
    %3094 = vmatprep.subr.mxu0 0.0
    %3095 = vmatpush1.msra.mxu0 0.0
    %3096 = vmatprep.subr.mxu0 0.0
    %3097 = vmatpush1.msra.mxu0 0.0
    %3098 = vmatprep.subr.mxu0 0.0
    %3099 = vmatpush1.msra.mxu0 0.0
    %3100 = vmatprep.subr.mxu0 0.0
    %3101 = vmatpush1.msra.mxu0 0.0
    %3102 = vmatprep.subr.mxu0 0.0
    %3103 = vmatpush1.msra.mxu0 0.0
    %3104 = vmatprep.mubr.f32.mxu0 0.0
    %v3105 = vand.u32 %v2254, 4294901760
    %3106 = vmatmul.mubr.f32.gmra.mrb[0].mxu0 %v3105
    %v3107 = vpop.f32.mrb[0].mxu0
    %v3108 = vadd.f32 %v3030, %v3107
    %v3109 = vpop.f32.mrb[0].mxu0
    %v3110 = vadd.f32 %v3032, %v3109
    %3111 = vdwg.mxu0
    %v3112 = vand.u32 %v2190, 4294901760
    %3113 = vmatprep.subr.mxu0 %v3112
    %v3114 = vand.u32 %v2189, 4294901760
    %3115 = vmatpush1.msra.mxu0 %v3114
    %3116 = vmatprep.subr.mxu0 0.0
    %3117 = vmatpush1.msra.mxu0 0.0
    %3118 = vmatprep.subr.mxu0 0.0
    %3119 = vmatpush1.msra.mxu0 0.0
    %3120 = vmatprep.subr.mxu0 0.0
    %3121 = vmatpush1.msra.mxu0 0.0
    %3122 = vmatprep.subr.mxu0 0.0
    %3123 = vmatpush1.msra.mxu0 0.0
    %3124 = vmatprep.subr.mxu0 0.0
    %3125 = vmatpush1.msra.mxu0 0.0
    %3126 = vmatprep.subr.mxu0 0.0
    %3127 = vmatpush1.msra.mxu0 0.0
    %3128 = vmatprep.subr.mxu0 0.0
    %3129 = vmatpush1.msra.mxu0 0.0
    %3130 = vmatprep.subr.mxu0 0.0
    %3131 = vmatpush1.msra.mxu0 0.0
    %3132 = vmatprep.subr.mxu0 0.0
    %3133 = vmatpush1.msra.mxu0 0.0
    %3134 = vmatprep.subr.mxu0 0.0
    %3135 = vmatpush1.msra.mxu0 0.0
    %3136 = vmatprep.subr.mxu0 0.0
    %3137 = vmatpush1.msra.mxu0 0.0
    %3138 = vmatprep.subr.mxu0 0.0
    %3139 = vmatpush1.msra.mxu0 0.0
    %3140 = vmatprep.subr.mxu0 0.0
    %3141 = vmatpush1.msra.mxu0 0.0
    %3142 = vmatprep.subr.mxu0 0.0
    %3143 = vmatpush1.msra.mxu0 0.0
    %3144 = vmatprep.subr.mxu0 0.0
    %3145 = vmatpush1.msra.mxu0 0.0
    %3146 = vmatprep.subr.mxu0 0.0
    %3147 = vmatpush1.msra.mxu0 0.0
    %3148 = vmatprep.subr.mxu0 0.0
    %3149 = vmatpush1.msra.mxu0 0.0
    %3150 = vmatprep.subr.mxu0 0.0
    %3151 = vmatpush1.msra.mxu0 0.0
    %3152 = vmatprep.subr.mxu0 0.0
    %3153 = vmatpush1.msra.mxu0 0.0
    %3154 = vmatprep.subr.mxu0 0.0
    %3155 = vmatpush1.msra.mxu0 0.0
    %3156 = vmatprep.subr.mxu0 0.0
    %3157 = vmatpush1.msra.mxu0 0.0
    %3158 = vmatprep.subr.mxu0 0.0
    %3159 = vmatpush1.msra.mxu0 0.0
    %3160 = vmatprep.subr.mxu0 0.0
    %3161 = vmatpush1.msra.mxu0 0.0
    %3162 = vmatprep.subr.mxu0 0.0
    %3163 = vmatpush1.msra.mxu0 0.0
    %3164 = vmatprep.subr.mxu0 0.0
    %3165 = vmatpush1.msra.mxu0 0.0
    %3166 = vmatprep.subr.mxu0 0.0
    %3167 = vmatpush1.msra.mxu0 0.0
    %3168 = vmatprep.subr.mxu0 0.0
    %3169 = vmatpush1.msra.mxu0 0.0
    %3170 = vmatprep.subr.mxu0 0.0
    %3171 = vmatpush1.msra.mxu0 0.0
    %3172 = vmatprep.subr.mxu0 0.0
    %3173 = vmatpush1.msra.mxu0 0.0
    %3174 = vmatprep.subr.mxu0 0.0
    %3175 = vmatpush1.msra.mxu0 0.0
    %3176 = vmatprep.subr.mxu0 0.0
    %3177 = vmatpush1.msra.mxu0 0.0
    %3178 = vmatprep.mubr.f32.mxu0 0.0
    %v3179 = vand.u32 %v2254, 4294901760
    %3180 = vmatmul.mubr.f32.gmra.mrb[0].mxu0 %v3179
    %v3181 = vpop.f32.mrb[0].mxu0
    %v3182 = vadd.f32 %v3108, %v3181
    %v3183 = vpop.f32.mrb[0].mxu0
    %v3184 = vadd.f32 %v3110, %v3183
    %3185 = vdwg.mxu0
    %v3186 = vand.u32 %v2192, 4294901760
    %3187 = vmatprep.subr.mxu0 %v3186
    %v3188 = vand.u32 %v2191, 4294901760
    %3189 = vmatpush1.msra.mxu0 %v3188
    %3190 = vmatprep.subr.mxu0 0.0
    %3191 = vmatpush1.msra.mxu0 0.0
    %3192 = vmatprep.subr.mxu0 0.0
    %3193 = vmatpush1.msra.mxu0 0.0
    %3194 = vmatprep.subr.mxu0 0.0
    %3195 = vmatpush1.msra.mxu0 0.0
    %3196 = vmatprep.subr.mxu0 0.0
    %3197 = vmatpush1.msra.mxu0 0.0
    %3198 = vmatprep.subr.mxu0 0.0
    %3199 = vmatpush1.msra.mxu0 0.0
    %3200 = vmatprep.subr.mxu0 0.0
    %3201 = vmatpush1.msra.mxu0 0.0
    %3202 = vmatprep.subr.mxu0 0.0
    %3203 = vmatpush1.msra.mxu0 0.0
    %3204 = vmatprep.subr.mxu0 0.0
    %3205 = vmatpush1.msra.mxu0 0.0
    %3206 = vmatprep.subr.mxu0 0.0
    %3207 = vmatpush1.msra.mxu0 0.0
    %3208 = vmatprep.subr.mxu0 0.0
    %3209 = vmatpush1.msra.mxu0 0.0
    %3210 = vmatprep.subr.mxu0 0.0
    %3211 = vmatpush1.msra.mxu0 0.0
    %3212 = vmatprep.subr.mxu0 0.0
    %3213 = vmatpush1.msra.mxu0 0.0
    %3214 = vmatprep.subr.mxu0 0.0
    %3215 = vmatpush1.msra.mxu0 0.0
    %3216 = vmatprep.subr.mxu0 0.0
    %3217 = vmatpush1.msra.mxu0 0.0
    %3218 = vmatprep.subr.mxu0 0.0
    %3219 = vmatpush1.msra.mxu0 0.0
    %3220 = vmatprep.subr.mxu0 0.0
    %3221 = vmatpush1.msra.mxu0 0.0
    %3222 = vmatprep.subr.mxu0 0.0
    %3223 = vmatpush1.msra.mxu0 0.0
    %3224 = vmatprep.subr.mxu0 0.0
    %3225 = vmatpush1.msra.mxu0 0.0
    %3226 = vmatprep.subr.mxu0 0.0
    %3227 = vmatpush1.msra.mxu0 0.0
    %3228 = vmatprep.subr.mxu0 0.0
    %3229 = vmatpush1.msra.mxu0 0.0
    %3230 = vmatprep.subr.mxu0 0.0
    %3231 = vmatpush1.msra.mxu0 0.0
    %3232 = vmatprep.subr.mxu0 0.0
    %3233 = vmatpush1.msra.mxu0 0.0
    %3234 = vmatprep.subr.mxu0 0.0
    %3235 = vmatpush1.msra.mxu0 0.0
    %3236 = vmatprep.subr.mxu0 0.0
    %3237 = vmatpush1.msra.mxu0 0.0
    %3238 = vmatprep.subr.mxu0 0.0
    %3239 = vmatpush1.msra.mxu0 0.0
    %3240 = vmatprep.subr.mxu0 0.0
    %3241 = vmatpush1.msra.mxu0 0.0
    %3242 = vmatprep.subr.mxu0 0.0
    %3243 = vmatpush1.msra.mxu0 0.0
    %3244 = vmatprep.subr.mxu0 0.0
    %3245 = vmatpush1.msra.mxu0 0.0
    %3246 = vmatprep.subr.mxu0 0.0
    %3247 = vmatpush1.msra.mxu0 0.0
    %3248 = vmatprep.subr.mxu0 0.0
    %3249 = vmatpush1.msra.mxu0 0.0
    %3250 = vmatprep.subr.mxu0 0.0
    %3251 = vmatpush1.msra.mxu0 0.0
    %3252 = vmatprep.mubr.f32.mxu0 0.0
    %v3253 = vand.u32 %v2254, 4294901760
    %v3254 = vsub.f32 %v2254, %v3253
    %v3255 = vand.u32 %v3254, 4294901760
    %v3256 = vsub.f32 %v3254, %v3255
    %v3257 = vand.u32 %v3256, 4294901760
    %3258 = vmatmul.mubr.f32.gmra.mrb[0].mxu0 %v3257
    %v3259 = vpop.f32.mrb[0].mxu0
    %v3260 = vadd.f32 0.0, %v3259
    %v3261 = vpop.f32.mrb[0].mxu0
    %v3262 = vadd.f32 0.0, %v3261
    %3263 = vdwg.mxu0
    %v3264 = vand.u32 %v2192, 4294901760
    %v3265 = vsub.f32 %v2192, %v3264
    %v3266 = vand.u32 %v3265, 4294901760
    %v3267 = vsub.f32 %v3265, %v3266
    %v3268 = vand.u32 %v3267, 4294901760
    %3269 = vmatprep.subr.mxu0 %v3268
    %v3270 = vand.u32 %v2191, 4294901760
    %v3271 = vsub.f32 %v2191, %v3270
    %v3272 = vand.u32 %v3271, 4294901760
    %v3273 = vsub.f32 %v3271, %v3272
    %v3274 = vand.u32 %v3273, 4294901760
    %3275 = vmatpush1.msra.mxu0 %v3274
    %3276 = vmatprep.subr.mxu0 0.0
    %3277 = vmatpush1.msra.mxu0 0.0
    %3278 = vmatprep.subr.mxu0 0.0
    %3279 = vmatpush1.msra.mxu0 0.0
    %3280 = vmatprep.subr.mxu0 0.0
    %3281 = vmatpush1.msra.mxu0 0.0
    %3282 = vmatprep.subr.mxu0 0.0
    %3283 = vmatpush1.msra.mxu0 0.0
    %3284 = vmatprep.subr.mxu0 0.0
    %3285 = vmatpush1.msra.mxu0 0.0
    %3286 = vmatprep.subr.mxu0 0.0
    %3287 = vmatpush1.msra.mxu0 0.0
    %3288 = vmatprep.subr.mxu0 0.0
    %3289 = vmatpush1.msra.mxu0 0.0
    %3290 = vmatprep.subr.mxu0 0.0
    %3291 = vmatpush1.msra.mxu0 0.0
    %3292 = vmatprep.subr.mxu0 0.0
    %3293 = vmatpush1.msra.mxu0 0.0
    %3294 = vmatprep.subr.mxu0 0.0
    %3295 = vmatpush1.msra.mxu0 0.0
    %3296 = vmatprep.subr.mxu0 0.0
    %3297 = vmatpush1.msra.mxu0 0.0
    %3298 = vmatprep.subr.mxu0 0.0
    %3299 = vmatpush1.msra.mxu0 0.0
    %3300 = vmatprep.subr.mxu0 0.0
    %3301 = vmatpush1.msra.mxu0 0.0
    %3302 = vmatprep.subr.mxu0 0.0
    %3303 = vmatpush1.msra.mxu0 0.0
    %3304 = vmatprep.subr.mxu0 0.0
    %3305 = vmatpush1.msra.mxu0 0.0
    %3306 = vmatprep.subr.mxu0 0.0
    %3307 = vmatpush1.msra.mxu0 0.0
    %3308 = vmatprep.subr.mxu0 0.0
    %3309 = vmatpush1.msra.mxu0 0.0
    %3310 = vmatprep.subr.mxu0 0.0
    %3311 = vmatpush1.msra.mxu0 0.0
    %3312 = vmatprep.subr.mxu0 0.0
    %3313 = vmatpush1.msra.mxu0 0.0
    %3314 = vmatprep.subr.mxu0 0.0
    %3315 = vmatpush1.msra.mxu0 0.0
    %3316 = vmatprep.subr.mxu0 0.0
    %3317 = vmatpush1.msra.mxu0 0.0
    %3318 = vmatprep.subr.mxu0 0.0
    %3319 = vmatpush1.msra.mxu0 0.0
    %3320 = vmatprep.subr.mxu0 0.0
    %3321 = vmatpush1.msra.mxu0 0.0
    %3322 = vmatprep.subr.mxu0 0.0
    %3323 = vmatpush1.msra.mxu0 0.0
    %3324 = vmatprep.subr.mxu0 0.0
    %3325 = vmatpush1.msra.mxu0 0.0
    %3326 = vmatprep.subr.mxu0 0.0
    %3327 = vmatpush1.msra.mxu0 0.0
    %3328 = vmatprep.subr.mxu0 0.0
    %3329 = vmatpush1.msra.mxu0 0.0
    %3330 = vmatprep.subr.mxu0 0.0
    %3331 = vmatpush1.msra.mxu0 0.0
    %3332 = vmatprep.subr.mxu0 0.0
    %3333 = vmatpush1.msra.mxu0 0.0
    %3334 = vmatprep.subr.mxu0 0.0
    %3335 = vmatpush1.msra.mxu0 0.0
    %3336 = vmatprep.subr.mxu0 0.0
    %3337 = vmatpush1.msra.mxu0 0.0
    %3338 = vmatprep.mubr.f32.mxu0 0.0
    %v3339 = vand.u32 %v2254, 4294901760
    %3340 = vmatmul.mubr.f32.gmra.mrb[0].mxu0 %v3339
    %v3341 = vpop.f32.mrb[0].mxu0
    %v3342 = vadd.f32 %v3260, %v3341
    %v3343 = vpop.f32.mrb[0].mxu0
    %v3344 = vadd.f32 %v3262, %v3343
    %3345 = vdwg.mxu0
    %v3346 = vand.u32 %v2192, 4294901760
    %v3347 = vsub.f32 %v2192, %v3346
    %3348 = vmatprep.subr.mxu0 %v3347
    %v3349 = vand.u32 %v2191, 4294901760
    %v3350 = vsub.f32 %v2191, %v3349
    %3351 = vmatpush1.msra.mxu0 %v3350
    %3352 = vmatprep.subr.mxu0 0.0
    %3353 = vmatpush1.msra.mxu0 0.0
    %3354 = vmatprep.subr.mxu0 0.0
    %3355 = vmatpush1.msra.mxu0 0.0
    %3356 = vmatprep.subr.mxu0 0.0
    %3357 = vmatpush1.msra.mxu0 0.0
    %3358 = vmatprep.subr.mxu0 0.0
    %3359 = vmatpush1.msra.mxu0 0.0
    %3360 = vmatprep.subr.mxu0 0.0
    %3361 = vmatpush1.msra.mxu0 0.0
    %3362 = vmatprep.subr.mxu0 0.0
    %3363 = vmatpush1.msra.mxu0 0.0
    %3364 = vmatprep.subr.mxu0 0.0
    %3365 = vmatpush1.msra.mxu0 0.0
    %3366 = vmatprep.subr.mxu0 0.0
    %3367 = vmatpush1.msra.mxu0 0.0
    %3368 = vmatprep.subr.mxu0 0.0
    %3369 = vmatpush1.msra.mxu0 0.0
    %3370 = vmatprep.subr.mxu0 0.0
    %3371 = vmatpush1.msra.mxu0 0.0
    %3372 = vmatprep.subr.mxu0 0.0
    %3373 = vmatpush1.msra.mxu0 0.0
    %3374 = vmatprep.subr.mxu0 0.0
    %3375 = vmatpush1.msra.mxu0 0.0
    %3376 = vmatprep.subr.mxu0 0.0
    %3377 = vmatpush1.msra.mxu0 0.0
    %3378 = vmatprep.subr.mxu0 0.0
    %3379 = vmatpush1.msra.mxu0 0.0
    %3380 = vmatprep.subr.mxu0 0.0
    %3381 = vmatpush1.msra.mxu0 0.0
    %3382 = vmatprep.subr.mxu0 0.0
    %3383 = vmatpush1.msra.mxu0 0.0
    %3384 = vmatprep.subr.mxu0 0.0
    %3385 = vmatpush1.msra.mxu0 0.0
    %3386 = vmatprep.subr.mxu0 0.0
    %3387 = vmatpush1.msra.mxu0 0.0
    %3388 = vmatprep.subr.mxu0 0.0
    %3389 = vmatpush1.msra.mxu0 0.0
    %3390 = vmatprep.subr.mxu0 0.0
    %3391 = vmatpush1.msra.mxu0 0.0
    %3392 = vmatprep.subr.mxu0 0.0
    %3393 = vmatpush1.msra.mxu0 0.0
    %3394 = vmatprep.subr.mxu0 0.0
    %3395 = vmatpush1.msra.mxu0 0.0
    %3396 = vmatprep.subr.mxu0 0.0
    %3397 = vmatpush1.msra.mxu0 0.0
    %3398 = vmatprep.subr.mxu0 0.0
    %3399 = vmatpush1.msra.mxu0 0.0
    %3400 = vmatprep.subr.mxu0 0.0
    %3401 = vmatpush1.msra.mxu0 0.0
    %3402 = vmatprep.subr.mxu0 0.0
    %3403 = vmatpush1.msra.mxu0 0.0
    %3404 = vmatprep.subr.mxu0 0.0
    %3405 = vmatpush1.msra.mxu0 0.0
    %3406 = vmatprep.subr.mxu0 0.0
    %3407 = vmatpush1.msra.mxu0 0.0
    %3408 = vmatprep.subr.mxu0 0.0
    %3409 = vmatpush1.msra.mxu0 0.0
    %3410 = vmatprep.subr.mxu0 0.0
    %3411 = vmatpush1.msra.mxu0 0.0
    %3412 = vmatprep.subr.mxu0 0.0
    %3413 = vmatpush1.msra.mxu0 0.0
    %3414 = vmatprep.mubr.f32.mxu0 0.0
    %v3415 = vand.u32 %v2254, 4294901760
    %v3416 = vsub.f32 %v2254, %v3415
    %3417 = vmatmul.mubr.f32.gmra.mrb[0].mxu0 %v3416
    %v3418 = vpop.f32.mrb[0].mxu0
    %v3419 = vadd.f32 %v3342, %v3418
    %v3420 = vpop.f32.mrb[0].mxu0
    %v3421 = vadd.f32 %v3344, %v3420
    %3422 = vdwg.mxu0
    %v3423 = vand.u32 %v2192, 4294901760
    %3424 = vmatprep.subr.mxu0 %v3423
    %v3425 = vand.u32 %v2191, 4294901760
    %3426 = vmatpush1.msra.mxu0 %v3425
    %3427 = vmatprep.subr.mxu0 0.0
    %3428 = vmatpush1.msra.mxu0 0.0
    %3429 = vmatprep.subr.mxu0 0.0
    %3430 = vmatpush1.msra.mxu0 0.0
    %3431 = vmatprep.subr.mxu0 0.0
    %3432 = vmatpush1.msra.mxu0 0.0
    %3433 = vmatprep.subr.mxu0 0.0
    %3434 = vmatpush1.msra.mxu0 0.0
    %3435 = vmatprep.subr.mxu0 0.0
    %3436 = vmatpush1.msra.mxu0 0.0
    %3437 = vmatprep.subr.mxu0 0.0
    %3438 = vmatpush1.msra.mxu0 0.0
    %3439 = vmatprep.subr.mxu0 0.0
    %3440 = vmatpush1.msra.mxu0 0.0
    %3441 = vmatprep.subr.mxu0 0.0
    %3442 = vmatpush1.msra.mxu0 0.0
    %3443 = vmatprep.subr.mxu0 0.0
    %3444 = vmatpush1.msra.mxu0 0.0
    %3445 = vmatprep.subr.mxu0 0.0
    %3446 = vmatpush1.msra.mxu0 0.0
    %3447 = vmatprep.subr.mxu0 0.0
    %3448 = vmatpush1.msra.mxu0 0.0
    %3449 = vmatprep.subr.mxu0 0.0
    %3450 = vmatpush1.msra.mxu0 0.0
    %3451 = vmatprep.subr.mxu0 0.0
    %3452 = vmatpush1.msra.mxu0 0.0
    %3453 = vmatprep.subr.mxu0 0.0
    %3454 = vmatpush1.msra.mxu0 0.0
    %3455 = vmatprep.subr.mxu0 0.0
    %3456 = vmatpush1.msra.mxu0 0.0
    %3457 = vmatprep.subr.mxu0 0.0
    %3458 = vmatpush1.msra.mxu0 0.0
    %3459 = vmatprep.subr.mxu0 0.0
    %3460 = vmatpush1.msra.mxu0 0.0
    %3461 = vmatprep.subr.mxu0 0.0
    %3462 = vmatpush1.msra.mxu0 0.0
    %3463 = vmatprep.subr.mxu0 0.0
    %3464 = vmatpush1.msra.mxu0 0.0
    %3465 = vmatprep.subr.mxu0 0.0
    %3466 = vmatpush1.msra.mxu0 0.0
    %3467 = vmatprep.subr.mxu0 0.0
    %3468 = vmatpush1.msra.mxu0 0.0
    %3469 = vmatprep.subr.mxu0 0.0
    %3470 = vmatpush1.msra.mxu0 0.0
    %3471 = vmatprep.subr.mxu0 0.0
    %3472 = vmatpush1.msra.mxu0 0.0
    %3473 = vmatprep.subr.mxu0 0.0
    %3474 = vmatpush1.msra.mxu0 0.0
    %3475 = vmatprep.subr.mxu0 0.0
    %3476 = vmatpush1.msra.mxu0 0.0
    %3477 = vmatprep.subr.mxu0 0.0
    %3478 = vmatpush1.msra.mxu0 0.0
    %3479 = vmatprep.subr.mxu0 0.0
    %3480 = vmatpush1.msra.mxu0 0.0
    %3481 = vmatprep.subr.mxu0 0.0
    %3482 = vmatpush1.msra.mxu0 0.0
    %3483 = vmatprep.subr.mxu0 0.0
    %3484 = vmatpush1.msra.mxu0 0.0
    %3485 = vmatprep.subr.mxu0 0.0
    %3486 = vmatpush1.msra.mxu0 0.0
    %3487 = vmatprep.subr.mxu0 0.0
    %3488 = vmatpush1.msra.mxu0 0.0
    %3489 = vmatprep.mubr.f32.mxu0 0.0
    %v3490 = vand.u32 %v2254, 4294901760
    %v3491 = vsub.f32 %v2254, %v3490
    %v3492 = vand.u32 %v3491, 4294901760
    %3493 = vmatmul.mubr.f32.gmra.mrb[0].mxu0 %v3492
    %v3494 = vpop.f32.mrb[0].mxu0
    %v3495 = vadd.f32 %v3419, %v3494
    %v3496 = vpop.f32.mrb[0].mxu0
    %v3497 = vadd.f32 %v3421, %v3496
    %3498 = vdwg.mxu0
    %v3499 = vand.u32 %v2192, 4294901760
    %v3500 = vsub.f32 %v2192, %v3499
    %v3501 = vand.u32 %v3500, 4294901760
    %3502 = vmatprep.subr.mxu0 %v3501
    %v3503 = vand.u32 %v2191, 4294901760
    %v3504 = vsub.f32 %v2191, %v3503
    %v3505 = vand.u32 %v3504, 4294901760
    %3506 = vmatpush1.msra.mxu0 %v3505
    %3507 = vmatprep.subr.mxu0 0.0
    %3508 = vmatpush1.msra.mxu0 0.0
    %3509 = vmatprep.subr.mxu0 0.0
    %3510 = vmatpush1.msra.mxu0 0.0
    %3511 = vmatprep.subr.mxu0 0.0
    %3512 = vmatpush1.msra.mxu0 0.0
    %3513 = vmatprep.subr.mxu0 0.0
    %3514 = vmatpush1.msra.mxu0 0.0
    %3515 = vmatprep.subr.mxu0 0.0
    %3516 = vmatpush1.msra.mxu0 0.0
    %3517 = vmatprep.subr.mxu0 0.0
    %3518 = vmatpush1.msra.mxu0 0.0
    %3519 = vmatprep.subr.mxu0 0.0
    %3520 = vmatpush1.msra.mxu0 0.0
    %3521 = vmatprep.subr.mxu0 0.0
    %3522 = vmatpush1.msra.mxu0 0.0
    %3523 = vmatprep.subr.mxu0 0.0
    %3524 = vmatpush1.msra.mxu0 0.0
    %3525 = vmatprep.subr.mxu0 0.0
    %3526 = vmatpush1.msra.mxu0 0.0
    %3527 = vmatprep.subr.mxu0 0.0
    %3528 = vmatpush1.msra.mxu0 0.0
    %3529 = vmatprep.subr.mxu0 0.0
    %3530 = vmatpush1.msra.mxu0 0.0
    %3531 = vmatprep.subr.mxu0 0.0
    %3532 = vmatpush1.msra.mxu0 0.0
    %3533 = vmatprep.subr.mxu0 0.0
    %3534 = vmatpush1.msra.mxu0 0.0
    %3535 = vmatprep.subr.mxu0 0.0
    %3536 = vmatpush1.msra.mxu0 0.0
    %3537 = vmatprep.subr.mxu0 0.0
    %3538 = vmatpush1.msra.mxu0 0.0
    %3539 = vmatprep.subr.mxu0 0.0
    %3540 = vmatpush1.msra.mxu0 0.0
    %3541 = vmatprep.subr.mxu0 0.0
    %3542 = vmatpush1.msra.mxu0 0.0
    %3543 = vmatprep.subr.mxu0 0.0
    %3544 = vmatpush1.msra.mxu0 0.0
    %3545 = vmatprep.subr.mxu0 0.0
    %3546 = vmatpush1.msra.mxu0 0.0
    %3547 = vmatprep.subr.mxu0 0.0
    %3548 = vmatpush1.msra.mxu0 0.0
    %3549 = vmatprep.subr.mxu0 0.0
    %3550 = vmatpush1.msra.mxu0 0.0
    %3551 = vmatprep.subr.mxu0 0.0
    %3552 = vmatpush1.msra.mxu0 0.0
    %3553 = vmatprep.subr.mxu0 0.0
    %3554 = vmatpush1.msra.mxu0 0.0
    %3555 = vmatprep.subr.mxu0 0.0
    %3556 = vmatpush1.msra.mxu0 0.0
    %3557 = vmatprep.subr.mxu0 0.0
    %3558 = vmatpush1.msra.mxu0 0.0
    %3559 = vmatprep.subr.mxu0 0.0
    %3560 = vmatpush1.msra.mxu0 0.0
    %3561 = vmatprep.subr.mxu0 0.0
    %3562 = vmatpush1.msra.mxu0 0.0
    %3563 = vmatprep.subr.mxu0 0.0
    %3564 = vmatpush1.msra.mxu0 0.0
    %3565 = vmatprep.subr.mxu0 0.0
    %3566 = vmatpush1.msra.mxu0 0.0
    %3567 = vmatprep.subr.mxu0 0.0
    %3568 = vmatpush1.msra.mxu0 0.0
    %3569 = vmatprep.mubr.f32.mxu0 0.0
    %v3570 = vand.u32 %v2254, 4294901760
    %3571 = vmatmul.mubr.f32.gmra.mrb[0].mxu0 %v3570
    %v3572 = vpop.f32.mrb[0].mxu0
    %v3573 = vadd.f32 %v3495, %v3572
    %v3574 = vpop.f32.mrb[0].mxu0
    %v3575 = vadd.f32 %v3497, %v3574
    %3576 = vdwg.mxu0
    %v3577 = vand.u32 %v2192, 4294901760
    %3578 = vmatprep.subr.mxu0 %v3577
    %v3579 = vand.u32 %v2191, 4294901760
    %3580 = vmatpush1.msra.mxu0 %v3579
    %3581 = vmatprep.subr.mxu0 0.0
    %3582 = vmatpush1.msra.mxu0 0.0
    %3583 = vmatprep.subr.mxu0 0.0
    %3584 = vmatpush1.msra.mxu0 0.0
    %3585 = vmatprep.subr.mxu0 0.0
    %3586 = vmatpush1.msra.mxu0 0.0
    %3587 = vmatprep.subr.mxu0 0.0
    %3588 = vmatpush1.msra.mxu0 0.0
    %3589 = vmatprep.subr.mxu0 0.0
    %3590 = vmatpush1.msra.mxu0 0.0
    %3591 = vmatprep.subr.mxu0 0.0
    %3592 = vmatpush1.msra.mxu0 0.0
    %3593 = vmatprep.subr.mxu0 0.0
    %3594 = vmatpush1.msra.mxu0 0.0
    %3595 = vmatprep.subr.mxu0 0.0
    %3596 = vmatpush1.msra.mxu0 0.0
    %3597 = vmatprep.subr.mxu0 0.0
    %3598 = vmatpush1.msra.mxu0 0.0
    %3599 = vmatprep.subr.mxu0 0.0
    %3600 = vmatpush1.msra.mxu0 0.0
    %3601 = vmatprep.subr.mxu0 0.0
    %3602 = vmatpush1.msra.mxu0 0.0
    %3603 = vmatprep.subr.mxu0 0.0
    %3604 = vmatpush1.msra.mxu0 0.0
    %3605 = vmatprep.subr.mxu0 0.0
    %3606 = vmatpush1.msra.mxu0 0.0
    %3607 = vmatprep.subr.mxu0 0.0
    %3608 = vmatpush1.msra.mxu0 0.0
    %3609 = vmatprep.subr.mxu0 0.0
    %3610 = vmatpush1.msra.mxu0 0.0
    %3611 = vmatprep.subr.mxu0 0.0
    %3612 = vmatpush1.msra.mxu0 0.0
    %3613 = vmatprep.subr.mxu0 0.0
    %3614 = vmatpush1.msra.mxu0 0.0
    %3615 = vmatprep.subr.mxu0 0.0
    %3616 = vmatpush1.msra.mxu0 0.0
    %3617 = vmatprep.subr.mxu0 0.0
    %3618 = vmatpush1.msra.mxu0 0.0
    %3619 = vmatprep.subr.mxu0 0.0
    %3620 = vmatpush1.msra.mxu0 0.0
    %3621 = vmatprep.subr.mxu0 0.0
    %3622 = vmatpush1.msra.mxu0 0.0
    %3623 = vmatprep.subr.mxu0 0.0
    %3624 = vmatpush1.msra.mxu0 0.0
    %3625 = vmatprep.subr.mxu0 0.0
    %3626 = vmatpush1.msra.mxu0 0.0
    %3627 = vmatprep.subr.mxu0 0.0
    %3628 = vmatpush1.msra.mxu0 0.0
    %3629 = vmatprep.subr.mxu0 0.0
    %3630 = vmatpush1.msra.mxu0 0.0
    %3631 = vmatprep.subr.mxu0 0.0
    %3632 = vmatpush1.msra.mxu0 0.0
    %3633 = vmatprep.subr.mxu0 0.0
    %3634 = vmatpush1.msra.mxu0 0.0
    %3635 = vmatprep.subr.mxu0 0.0
    %3636 = vmatpush1.msra.mxu0 0.0
    %3637 = vmatprep.subr.mxu0 0.0
    %3638 = vmatpush1.msra.mxu0 0.0
    %3639 = vmatprep.subr.mxu0 0.0
    %3640 = vmatpush1.msra.mxu0 0.0
    %3641 = vmatprep.subr.mxu0 0.0
    %3642 = vmatpush1.msra.mxu0 0.0
    %3643 = vmatprep.mubr.f32.mxu0 0.0
    %v3644 = vand.u32 %v2254, 4294901760
    %3645 = vmatmul.mubr.f32.gmra.mrb[0].mxu0 %v3644
    %v3646 = vpop.f32.mrb[0].mxu0
    %v3647 = vadd.f32 %v3573, %v3646
    %v3648 = vpop.f32.mrb[0].mxu0
    %v3649 = vadd.f32 %v3575, %v3648
    %3650 = vdwg.mxu0
    %v3651 = vand.u32 %v2194, 4294901760
    %3652 = vmatprep.subr.mxu0 %v3651
    %v3653 = vand.u32 %v2193, 4294901760
    %3654 = vmatpush1.msra.mxu0 %v3653
    %3655 = vmatprep.subr.mxu0 0.0
    %3656 = vmatpush1.msra.mxu0 0.0
    %3657 = vmatprep.subr.mxu0 0.0
    %3658 = vmatpush1.msra.mxu0 0.0
    %3659 = vmatprep.subr.mxu0 0.0
    %3660 = vmatpush1.msra.mxu0 0.0
    %3661 = vmatprep.subr.mxu0 0.0
    %3662 = vmatpush1.msra.mxu0 0.0
    %3663 = vmatprep.subr.mxu0 0.0
    %3664 = vmatpush1.msra.mxu0 0.0
    %3665 = vmatprep.subr.mxu0 0.0
    %3666 = vmatpush1.msra.mxu0 0.0
    %3667 = vmatprep.subr.mxu0 0.0
    %3668 = vmatpush1.msra.mxu0 0.0
    %3669 = vmatprep.subr.mxu0 0.0
    %3670 = vmatpush1.msra.mxu0 0.0
    %3671 = vmatprep.subr.mxu0 0.0
    %3672 = vmatpush1.msra.mxu0 0.0
    %3673 = vmatprep.subr.mxu0 0.0
    %3674 = vmatpush1.msra.mxu0 0.0
    %3675 = vmatprep.subr.mxu0 0.0
    %3676 = vmatpush1.msra.mxu0 0.0
    %3677 = vmatprep.subr.mxu0 0.0
    %3678 = vmatpush1.msra.mxu0 0.0
    %3679 = vmatprep.subr.mxu0 0.0
    %3680 = vmatpush1.msra.mxu0 0.0
    %3681 = vmatprep.subr.mxu0 0.0
    %3682 = vmatpush1.msra.mxu0 0.0
    %3683 = vmatprep.subr.mxu0 0.0
    %3684 = vmatpush1.msra.mxu0 0.0
    %3685 = vmatprep.subr.mxu0 0.0
    %3686 = vmatpush1.msra.mxu0 0.0
    %3687 = vmatprep.subr.mxu0 0.0
    %3688 = vmatpush1.msra.mxu0 0.0
    %3689 = vmatprep.subr.mxu0 0.0
    %3690 = vmatpush1.msra.mxu0 0.0
    %3691 = vmatprep.subr.mxu0 0.0
    %3692 = vmatpush1.msra.mxu0 0.0
    %3693 = vmatprep.subr.mxu0 0.0
    %3694 = vmatpush1.msra.mxu0 0.0
    %3695 = vmatprep.subr.mxu0 0.0
    %3696 = vmatpush1.msra.mxu0 0.0
    %3697 = vmatprep.subr.mxu0 0.0
    %3698 = vmatpush1.msra.mxu0 0.0
    %3699 = vmatprep.subr.mxu0 0.0
    %3700 = vmatpush1.msra.mxu0 0.0
    %3701 = vmatprep.subr.mxu0 0.0
    %3702 = vmatpush1.msra.mxu0 0.0
    %3703 = vmatprep.subr.mxu0 0.0
    %3704 = vmatpush1.msra.mxu0 0.0
    %3705 = vmatprep.subr.mxu0 0.0
    %3706 = vmatpush1.msra.mxu0 0.0
    %3707 = vmatprep.subr.mxu0 0.0
    %3708 = vmatpush1.msra.mxu0 0.0
    %3709 = vmatprep.subr.mxu0 0.0
    %3710 = vmatpush1.msra.mxu0 0.0
    %3711 = vmatprep.subr.mxu0 0.0
    %3712 = vmatpush1.msra.mxu0 0.0
    %3713 = vmatprep.subr.mxu0 0.0
    %3714 = vmatpush1.msra.mxu0 0.0
    %3715 = vmatprep.subr.mxu0 0.0
    %3716 = vmatpush1.msra.mxu0 0.0
    %3717 = vmatprep.mubr.f32.mxu0 0.0
    %v3718 = vand.u32 %v2254, 4294901760
    %v3719 = vsub.f32 %v2254, %v3718
    %v3720 = vand.u32 %v3719, 4294901760
    %v3721 = vsub.f32 %v3719, %v3720
    %v3722 = vand.u32 %v3721, 4294901760
    %3723 = vmatmul.mubr.f32.gmra.mrb[0].mxu0 %v3722
    %v3724 = vpop.f32.mrb[0].mxu0
    %v3725 = vadd.f32 0.0, %v3724
    %v3726 = vpop.f32.mrb[0].mxu0
    %v3727 = vadd.f32 0.0, %v3726
    %3728 = vdwg.mxu0
    %v3729 = vand.u32 %v2194, 4294901760
    %v3730 = vsub.f32 %v2194, %v3729
    %v3731 = vand.u32 %v3730, 4294901760
    %v3732 = vsub.f32 %v3730, %v3731
    %v3733 = vand.u32 %v3732, 4294901760
    %3734 = vmatprep.subr.mxu0 %v3733
    %v3735 = vand.u32 %v2193, 4294901760
    %v3736 = vsub.f32 %v2193, %v3735
    %v3737 = vand.u32 %v3736, 4294901760
    %v3738 = vsub.f32 %v3736, %v3737
    %v3739 = vand.u32 %v3738, 4294901760
    %3740 = vmatpush1.msra.mxu0 %v3739
    %3741 = vmatprep.subr.mxu0 0.0
    %3742 = vmatpush1.msra.mxu0 0.0
    %3743 = vmatprep.subr.mxu0 0.0
    %3744 = vmatpush1.msra.mxu0 0.0
    %3745 = vmatprep.subr.mxu0 0.0
    %3746 = vmatpush1.msra.mxu0 0.0
    %3747 = vmatprep.subr.mxu0 0.0
    %3748 = vmatpush1.msra.mxu0 0.0
    %3749 = vmatprep.subr.mxu0 0.0
    %3750 = vmatpush1.msra.mxu0 0.0
    %3751 = vmatprep.subr.mxu0 0.0
    %3752 = vmatpush1.msra.mxu0 0.0
    %3753 = vmatprep.subr.mxu0 0.0
    %3754 = vmatpush1.msra.mxu0 0.0
    %3755 = vmatprep.subr.mxu0 0.0
    %3756 = vmatpush1.msra.mxu0 0.0
    %3757 = vmatprep.subr.mxu0 0.0
    %3758 = vmatpush1.msra.mxu0 0.0
    %3759 = vmatprep.subr.mxu0 0.0
    %3760 = vmatpush1.msra.mxu0 0.0
    %3761 = vmatprep.subr.mxu0 0.0
    %3762 = vmatpush1.msra.mxu0 0.0
    %3763 = vmatprep.subr.mxu0 0.0
    %3764 = vmatpush1.msra.mxu0 0.0
    %3765 = vmatprep.subr.mxu0 0.0
    %3766 = vmatpush1.msra.mxu0 0.0
    %3767 = vmatprep.subr.mxu0 0.0
    %3768 = vmatpush1.msra.mxu0 0.0
    %3769 = vmatprep.subr.mxu0 0.0
    %3770 = vmatpush1.msra.mxu0 0.0
    %3771 = vmatprep.subr.mxu0 0.0
    %3772 = vmatpush1.msra.mxu0 0.0
    %3773 = vmatprep.subr.mxu0 0.0
    %3774 = vmatpush1.msra.mxu0 0.0
    %3775 = vmatprep.subr.mxu0 0.0
    %3776 = vmatpush1.msra.mxu0 0.0
    %3777 = vmatprep.subr.mxu0 0.0
    %3778 = vmatpush1.msra.mxu0 0.0
    %3779 = vmatprep.subr.mxu0 0.0
    %3780 = vmatpush1.msra.mxu0 0.0
    %3781 = vmatprep.subr.mxu0 0.0
    %3782 = vmatpush1.msra.mxu0 0.0
    %3783 = vmatprep.subr.mxu0 0.0
    %3784 = vmatpush1.msra.mxu0 0.0
    %3785 = vmatprep.subr.mxu0 0.0
    %3786 = vmatpush1.msra.mxu0 0.0
    %3787 = vmatprep.subr.mxu0 0.0
    %3788 = vmatpush1.msra.mxu0 0.0
    %3789 = vmatprep.subr.mxu0 0.0
    %3790 = vmatpush1.msra.mxu0 0.0
    %3791 = vmatprep.subr.mxu0 0.0
    %3792 = vmatpush1.msra.mxu0 0.0
    %3793 = vmatprep.subr.mxu0 0.0
    %3794 = vmatpush1.msra.mxu0 0.0
    %3795 = vmatprep.subr.mxu0 0.0
    %3796 = vmatpush1.msra.mxu0 0.0
    %3797 = vmatprep.subr.mxu0 0.0
    %3798 = vmatpush1.msra.mxu0 0.0
    %3799 = vmatprep.subr.mxu0 0.0
    %3800 = vmatpush1.msra.mxu0 0.0
    %3801 = vmatprep.subr.mxu0 0.0
    %3802 = vmatpush1.msra.mxu0 0.0
    %3803 = vmatprep.mubr.f32.mxu0 0.0
    %v3804 = vand.u32 %v2254, 4294901760
    %3805 = vmatmul.mubr.f32.gmra.mrb[0].mxu0 %v3804
    %v3806 = vpop.f32.mrb[0].mxu0
    %v3807 = vadd.f32 %v3725, %v3806
    %v3808 = vpop.f32.mrb[0].mxu0
    %v3809 = vadd.f32 %v3727, %v3808
    %3810 = vdwg.mxu0
    %v3811 = vand.u32 %v2194, 4294901760
    %v3812 = vsub.f32 %v2194, %v3811
    %3813 = vmatprep.subr.mxu0 %v3812
    %v3814 = vand.u32 %v2193, 4294901760
    %v3815 = vsub.f32 %v2193, %v3814
    %3816 = vmatpush1.msra.mxu0 %v3815
    %3817 = vmatprep.subr.mxu0 0.0
    %3818 = vmatpush1.msra.mxu0 0.0
    %3819 = vmatprep.subr.mxu0 0.0
    %3820 = vmatpush1.msra.mxu0 0.0
    %3821 = vmatprep.subr.mxu0 0.0
    %3822 = vmatpush1.msra.mxu0 0.0
    %3823 = vmatprep.subr.mxu0 0.0
    %3824 = vmatpush1.msra.mxu0 0.0
    %3825 = vmatprep.subr.mxu0 0.0
    %3826 = vmatpush1.msra.mxu0 0.0
    %3827 = vmatprep.subr.mxu0 0.0
    %3828 = vmatpush1.msra.mxu0 0.0
    %3829 = vmatprep.subr.mxu0 0.0
    %3830 = vmatpush1.msra.mxu0 0.0
    %3831 = vmatprep.subr.mxu0 0.0
    %3832 = vmatpush1.msra.mxu0 0.0
    %3833 = vmatprep.subr.mxu0 0.0
    %3834 = vmatpush1.msra.mxu0 0.0
    %3835 = vmatprep.subr.mxu0 0.0
    %3836 = vmatpush1.msra.mxu0 0.0
    %3837 = vmatprep.subr.mxu0 0.0
    %3838 = vmatpush1.msra.mxu0 0.0
    %3839 = vmatprep.subr.mxu0 0.0
    %3840 = vmatpush1.msra.mxu0 0.0
    %3841 = vmatprep.subr.mxu0 0.0
    %3842 = vmatpush1.msra.mxu0 0.0
    %3843 = vmatprep.subr.mxu0 0.0
    %3844 = vmatpush1.msra.mxu0 0.0
    %3845 = vmatprep.subr.mxu0 0.0
    %3846 = vmatpush1.msra.mxu0 0.0
    %3847 = vmatprep.subr.mxu0 0.0
    %3848 = vmatpush1.msra.mxu0 0.0
    %3849 = vmatprep.subr.mxu0 0.0
    %3850 = vmatpush1.msra.mxu0 0.0
    %3851 = vmatprep.subr.mxu0 0.0
    %3852 = vmatpush1.msra.mxu0 0.0
    %3853 = vmatprep.subr.mxu0 0.0
    %3854 = vmatpush1.msra.mxu0 0.0
    %3855 = vmatprep.subr.mxu0 0.0
    %3856 = vmatpush1.msra.mxu0 0.0
    %3857 = vmatprep.subr.mxu0 0.0
    %3858 = vmatpush1.msra.mxu0 0.0
    %3859 = vmatprep.subr.mxu0 0.0
    %3860 = vmatpush1.msra.mxu0 0.0
    %3861 = vmatprep.subr.mxu0 0.0
    %3862 = vmatpush1.msra.mxu0 0.0
    %3863 = vmatprep.subr.mxu0 0.0
    %3864 = vmatpush1.msra.mxu0 0.0
    %3865 = vmatprep.subr.mxu0 0.0
    %3866 = vmatpush1.msra.mxu0 0.0
    %3867 = vmatprep.subr.mxu0 0.0
    %3868 = vmatpush1.msra.mxu0 0.0
    %3869 = vmatprep.subr.mxu0 0.0
    %3870 = vmatpush1.msra.mxu0 0.0
    %3871 = vmatprep.subr.mxu0 0.0
    %3872 = vmatpush1.msra.mxu0 0.0
    %3873 = vmatprep.subr.mxu0 0.0
    %3874 = vmatpush1.msra.mxu0 0.0
    %3875 = vmatprep.subr.mxu0 0.0
    %3876 = vmatpush1.msra.mxu0 0.0
    %3877 = vmatprep.subr.mxu0 0.0
    %3878 = vmatpush1.msra.mxu0 0.0
    %3879 = vmatprep.mubr.f32.mxu0 0.0
    %v3880 = vand.u32 %v2254, 4294901760
    %v3881 = vsub.f32 %v2254, %v3880
    %3882 = vmatmul.mubr.f32.gmra.mrb[0].mxu0 %v3881
    %v3883 = vpop.f32.mrb[0].mxu0
    %v3884 = vadd.f32 %v3807, %v3883
    %v3885 = vpop.f32.mrb[0].mxu0
    %v3886 = vadd.f32 %v3809, %v3885
    %3887 = vdwg.mxu0
    %v3888 = vand.u32 %v2194, 4294901760
    %3889 = vmatprep.subr.mxu0 %v3888
    %v3890 = vand.u32 %v2193, 4294901760
    %3891 = vmatpush1.msra.mxu0 %v3890
    %3892 = vmatprep.subr.mxu0 0.0
    %3893 = vmatpush1.msra.mxu0 0.0
    %3894 = vmatprep.subr.mxu0 0.0
    %3895 = vmatpush1.msra.mxu0 0.0
    %3896 = vmatprep.subr.mxu0 0.0
    %3897 = vmatpush1.msra.mxu0 0.0
    %3898 = vmatprep.subr.mxu0 0.0
    %3899 = vmatpush1.msra.mxu0 0.0
    %3900 = vmatprep.subr.mxu0 0.0
    %3901 = vmatpush1.msra.mxu0 0.0
    %3902 = vmatprep.subr.mxu0 0.0
    %3903 = vmatpush1.msra.mxu0 0.0
    %3904 = vmatprep.subr.mxu0 0.0
    %3905 = vmatpush1.msra.mxu0 0.0
    %3906 = vmatprep.subr.mxu0 0.0
    %3907 = vmatpush1.msra.mxu0 0.0
    %3908 = vmatprep.subr.mxu0 0.0
    %3909 = vmatpush1.msra.mxu0 0.0
    %3910 = vmatprep.subr.mxu0 0.0
    %3911 = vmatpush1.msra.mxu0 0.0
    %3912 = vmatprep.subr.mxu0 0.0
    %3913 = vmatpush1.msra.mxu0 0.0
    %3914 = vmatprep.subr.mxu0 0.0
    %3915 = vmatpush1.msra.mxu0 0.0
    %3916 = vmatprep.subr.mxu0 0.0
    %3917 = vmatpush1.msra.mxu0 0.0
    %3918 = vmatprep.subr.mxu0 0.0
    %3919 = vmatpush1.msra.mxu0 0.0
    %3920 = vmatprep.subr.mxu0 0.0
    %3921 = vmatpush1.msra.mxu0 0.0
    %3922 = vmatprep.subr.mxu0 0.0
    %3923 = vmatpush1.msra.mxu0 0.0
    %3924 = vmatprep.subr.mxu0 0.0
    %3925 = vmatpush1.msra.mxu0 0.0
    %3926 = vmatprep.subr.mxu0 0.0
    %3927 = vmatpush1.msra.mxu0 0.0
    %3928 = vmatprep.subr.mxu0 0.0
    %3929 = vmatpush1.msra.mxu0 0.0
    %3930 = vmatprep.subr.mxu0 0.0
    %3931 = vmatpush1.msra.mxu0 0.0
    %3932 = vmatprep.subr.mxu0 0.0
    %3933 = vmatpush1.msra.mxu0 0.0
    %3934 = vmatprep.subr.mxu0 0.0
    %3935 = vmatpush1.msra.mxu0 0.0
    %3936 = vmatprep.subr.mxu0 0.0
    %3937 = vmatpush1.msra.mxu0 0.0
    %3938 = vmatprep.subr.mxu0 0.0
    %3939 = vmatpush1.msra.mxu0 0.0
    %3940 = vmatprep.subr.mxu0 0.0
    %3941 = vmatpush1.msra.mxu0 0.0
    %3942 = vmatprep.subr.mxu0 0.0
    %3943 = vmatpush1.msra.mxu0 0.0
    %3944 = vmatprep.subr.mxu0 0.0
    %3945 = vmatpush1.msra.mxu0 0.0
    %3946 = vmatprep.subr.mxu0 0.0
    %3947 = vmatpush1.msra.mxu0 0.0
    %3948 = vmatprep.subr.mxu0 0.0
    %3949 = vmatpush1.msra.mxu0 0.0
    %3950 = vmatprep.subr.mxu0 0.0
    %3951 = vmatpush1.msra.mxu0 0.0
    %3952 = vmatprep.subr.mxu0 0.0
    %3953 = vmatpush1.msra.mxu0 0.0
    %3954 = vmatprep.mubr.f32.mxu0 0.0
    %v3955 = vand.u32 %v2254, 4294901760
    %v3956 = vsub.f32 %v2254, %v3955
    %v3957 = vand.u32 %v3956, 4294901760
    %3958 = vmatmul.mubr.f32.gmra.mrb[0].mxu0 %v3957
    %v3959 = vpop.f32.mrb[0].mxu0
    %v3960 = vadd.f32 %v3884, %v3959
    %v3961 = vpop.f32.mrb[0].mxu0
    %v3962 = vadd.f32 %v3886, %v3961
    %3963 = vdwg.mxu0
    %v3964 = vand.u32 %v2194, 4294901760
    %v3965 = vsub.f32 %v2194, %v3964
    %v3966 = vand.u32 %v3965, 4294901760
    %3967 = vmatprep.subr.mxu0 %v3966
    %v3968 = vand.u32 %v2193, 4294901760
    %v3969 = vsub.f32 %v2193, %v3968
    %v3970 = vand.u32 %v3969, 4294901760
    %3971 = vmatpush1.msra.mxu0 %v3970
    %3972 = vmatprep.subr.mxu0 0.0
    %3973 = vmatpush1.msra.mxu0 0.0
    %3974 = vmatprep.subr.mxu0 0.0
    %3975 = vmatpush1.msra.mxu0 0.0
    %3976 = vmatprep.subr.mxu0 0.0
    %3977 = vmatpush1.msra.mxu0 0.0
    %3978 = vmatprep.subr.mxu0 0.0
    %3979 = vmatpush1.msra.mxu0 0.0
    %3980 = vmatprep.subr.mxu0 0.0
    %3981 = vmatpush1.msra.mxu0 0.0
    %3982 = vmatprep.subr.mxu0 0.0
    %3983 = vmatpush1.msra.mxu0 0.0
    %3984 = vmatprep.subr.mxu0 0.0
    %3985 = vmatpush1.msra.mxu0 0.0
    %3986 = vmatprep.subr.mxu0 0.0
    %3987 = vmatpush1.msra.mxu0 0.0
    %3988 = vmatprep.subr.mxu0 0.0
    %3989 = vmatpush1.msra.mxu0 0.0
    %3990 = vmatprep.subr.mxu0 0.0
    %3991 = vmatpush1.msra.mxu0 0.0
    %3992 = vmatprep.subr.mxu0 0.0
    %3993 = vmatpush1.msra.mxu0 0.0
    %3994 = vmatprep.subr.mxu0 0.0
    %3995 = vmatpush1.msra.mxu0 0.0
    %3996 = vmatprep.subr.mxu0 0.0
    %3997 = vmatpush1.msra.mxu0 0.0
    %3998 = vmatprep.subr.mxu0 0.0
    %3999 = vmatpush1.msra.mxu0 0.0
    %4000 = vmatprep.subr.mxu0 0.0
    %4001 = vmatpush1.msra.mxu0 0.0
    %4002 = vmatprep.subr.mxu0 0.0
    %4003 = vmatpush1.msra.mxu0 0.0
    %4004 = vmatprep.subr.mxu0 0.0
    %4005 = vmatpush1.msra.mxu0 0.0
    %4006 = vmatprep.subr.mxu0 0.0
    %4007 = vmatpush1.msra.mxu0 0.0
    %4008 = vmatprep.subr.mxu0 0.0
    %4009 = vmatpush1.msra.mxu0 0.0
    %4010 = vmatprep.subr.mxu0 0.0
    %4011 = vmatpush1.msra.mxu0 0.0
    %4012 = vmatprep.subr.mxu0 0.0
    %4013 = vmatpush1.msra.mxu0 0.0
    %4014 = vmatprep.subr.mxu0 0.0
    %4015 = vmatpush1.msra.mxu0 0.0
    %4016 = vmatprep.subr.mxu0 0.0
    %4017 = vmatpush1.msra.mxu0 0.0
    %4018 = vmatprep.subr.mxu0 0.0
    %4019 = vmatpush1.msra.mxu0 0.0
    %4020 = vmatprep.subr.mxu0 0.0
    %4021 = vmatpush1.msra.mxu0 0.0
    %4022 = vmatprep.subr.mxu0 0.0
    %4023 = vmatpush1.msra.mxu0 0.0
    %4024 = vmatprep.subr.mxu0 0.0
    %4025 = vmatpush1.msra.mxu0 0.0
    %4026 = vmatprep.subr.mxu0 0.0
    %4027 = vmatpush1.msra.mxu0 0.0
    %4028 = vmatprep.subr.mxu0 0.0
    %4029 = vmatpush1.msra.mxu0 0.0
    %4030 = vmatprep.subr.mxu0 0.0
    %4031 = vmatpush1.msra.mxu0 0.0
    %4032 = vmatprep.subr.mxu0 0.0
    %4033 = vmatpush1.msra.mxu0 0.0
    %4034 = vmatprep.mubr.f32.mxu0 0.0
    %v4035 = vand.u32 %v2254, 4294901760
    %4036 = vmatmul.mubr.f32.gmra.mrb[0].mxu0 %v4035
    %v4037 = vpop.f32.mrb[0].mxu0
    %v4038 = vadd.f32 %v3960, %v4037
    %v4039 = vpop.f32.mrb[0].mxu0
    %v4040 = vadd.f32 %v3962, %v4039
    %4041 = vdwg.mxu0
    %v4042 = vand.u32 %v2194, 4294901760
    %4043 = vmatprep.subr.mxu0 %v4042
    %v4044 = vand.u32 %v2193, 4294901760
    %4045 = vmatpush1.msra.mxu0 %v4044
    %4046 = vmatprep.subr.mxu0 0.0
    %4047 = vmatpush1.msra.mxu0 0.0
    %4048 = vmatprep.subr.mxu0 0.0
    %4049 = vmatpush1.msra.mxu0 0.0
    %4050 = vmatprep.subr.mxu0 0.0
    %4051 = vmatpush1.msra.mxu0 0.0
    %4052 = vmatprep.subr.mxu0 0.0
    %4053 = vmatpush1.msra.mxu0 0.0
    %4054 = vmatprep.subr.mxu0 0.0
    %4055 = vmatpush1.msra.mxu0 0.0
    %4056 = vmatprep.subr.mxu0 0.0
    %4057 = vmatpush1.msra.mxu0 0.0
    %4058 = vmatprep.subr.mxu0 0.0
    %4059 = vmatpush1.msra.mxu0 0.0
    %4060 = vmatprep.subr.mxu0 0.0
    %4061 = vmatpush1.msra.mxu0 0.0
    %4062 = vmatprep.subr.mxu0 0.0
    %4063 = vmatpush1.msra.mxu0 0.0
    %4064 = vmatprep.subr.mxu0 0.0
    %4065 = vmatpush1.msra.mxu0 0.0
    %4066 = vmatprep.subr.mxu0 0.0
    %4067 = vmatpush1.msra.mxu0 0.0
    %4068 = vmatprep.subr.mxu0 0.0
    %4069 = vmatpush1.msra.mxu0 0.0
    %4070 = vmatprep.subr.mxu0 0.0
    %4071 = vmatpush1.msra.mxu0 0.0
    %4072 = vmatprep.subr.mxu0 0.0
    %4073 = vmatpush1.msra.mxu0 0.0
    %4074 = vmatprep.subr.mxu0 0.0
    %4075 = vmatpush1.msra.mxu0 0.0
    %4076 = vmatprep.subr.mxu0 0.0
    %4077 = vmatpush1.msra.mxu0 0.0
    %4078 = vmatprep.subr.mxu0 0.0
    %4079 = vmatpush1.msra.mxu0 0.0
    %4080 = vmatprep.subr.mxu0 0.0
    %4081 = vmatpush1.msra.mxu0 0.0
    %4082 = vmatprep.subr.mxu0 0.0
    %4083 = vmatpush1.msra.mxu0 0.0
    %4084 = vmatprep.subr.mxu0 0.0
    %4085 = vmatpush1.msra.mxu0 0.0
    %4086 = vmatprep.subr.mxu0 0.0
    %4087 = vmatpush1.msra.mxu0 0.0
    %4088 = vmatprep.subr.mxu0 0.0
    %4089 = vmatpush1.msra.mxu0 0.0
    %4090 = vmatprep.subr.mxu0 0.0
    %4091 = vmatpush1.msra.mxu0 0.0
    %4092 = vmatprep.subr.mxu0 0.0
    %4093 = vmatpush1.msra.mxu0 0.0
    %4094 = vmatprep.subr.mxu0 0.0
    %4095 = vmatpush1.msra.mxu0 0.0
    %4096 = vmatprep.subr.mxu0 0.0
    %4097 = vmatpush1.msra.mxu0 0.0
    %4098 = vmatprep.subr.mxu0 0.0
    %4099 = vmatpush1.msra.mxu0 0.0
    %4100 = vmatprep.subr.mxu0 0.0
    %4101 = vmatpush1.msra.mxu0 0.0
    %4102 = vmatprep.subr.mxu0 0.0
    %4103 = vmatpush1.msra.mxu0 0.0
    %4104 = vmatprep.subr.mxu0 0.0
    %4105 = vmatpush1.msra.mxu0 0.0
    %4106 = vmatprep.subr.mxu0 0.0
    %4107 = vmatpush1.msra.mxu0 0.0
    %4108 = vmatprep.mubr.f32.mxu0 0.0
    %v4109 = vand.u32 %v2254, 4294901760
    %4110 = vmatmul.mubr.f32.gmra.mrb[0].mxu0 %v4109
    %v4111 = vpop.f32.mrb[0].mxu0
    %v4112 = vadd.f32 %v4038, %v4111
    %v4113 = vpop.f32.mrb[0].mxu0
    %v4114 = vadd.f32 %v4040, %v4113
    %4115 = vdwg.mxu0
    %v4116 = vmul.f32 %v2243, %v2717
    %v4117 = vmul.f32 %v2244, %v2719
    %v4118 = vmul.f32 %v2245, %v3182
    %v4119 = vmul.f32 %v2246, %v3184
    %v4120 = vmul.f32 %v2247, %v3647
    %v4121 = vmul.f32 %v2248, %v3649
    %v4122 = vmul.f32 %v2249, %v4112
    %v4123 = vmul.f32 %v2250, %v4114
    %v4124 = vrot.slane %v4116, 4
    %v4125 = vadd.f32 %v4116, %v4124
    %v4126 = vrot.slane %v4125, 2
    %v4127 = vadd.f32 %v4125, %v4126
    %v4128 = vrot.slane %v4127, 1
    %v4129 = vadd.f32 %v4127, %v4128
    %v4130 = vrot.slane %v4117, 4
    %v4131 = vadd.f32 %v4117, %v4130
    %v4132 = vrot.slane %v4131, 2
    %v4133 = vadd.f32 %v4131, %v4132
    %v4134 = vrot.slane %v4133, 1
    %v4135 = vadd.f32 %v4133, %v4134
    %v4136 = vrot.slane %v4118, 4
    %v4137 = vadd.f32 %v4118, %v4136
    %v4138 = vrot.slane %v4137, 2
    %v4139 = vadd.f32 %v4137, %v4138
    %v4140 = vrot.slane %v4139, 1
    %v4141 = vadd.f32 %v4139, %v4140
    %v4142 = vrot.slane %v4119, 4
    %v4143 = vadd.f32 %v4119, %v4142
    %v4144 = vrot.slane %v4143, 2
    %v4145 = vadd.f32 %v4143, %v4144
    %v4146 = vrot.slane %v4145, 1
    %v4147 = vadd.f32 %v4145, %v4146
    %v4148 = vrot.slane %v4120, 4
    %v4149 = vadd.f32 %v4120, %v4148
    %v4150 = vrot.slane %v4149, 2
    %v4151 = vadd.f32 %v4149, %v4150
    %v4152 = vrot.slane %v4151, 1
    %v4153 = vadd.f32 %v4151, %v4152
    %v4154 = vrot.slane %v4121, 4
    %v4155 = vadd.f32 %v4121, %v4154
    %v4156 = vrot.slane %v4155, 2
    %v4157 = vadd.f32 %v4155, %v4156
    %v4158 = vrot.slane %v4157, 1
    %v4159 = vadd.f32 %v4157, %v4158
    %v4160 = vrot.slane %v4122, 4
    %v4161 = vadd.f32 %v4122, %v4160
    %v4162 = vrot.slane %v4161, 2
    %v4163 = vadd.f32 %v4161, %v4162
    %v4164 = vrot.slane %v4163, 1
    %v4165 = vadd.f32 %v4163, %v4164
    %v4166 = vrot.slane %v4123, 4
    %v4167 = vadd.f32 %v4123, %v4166
    %v4168 = vrot.slane %v4167, 2
    %v4169 = vadd.f32 %v4167, %v4168
    %v4170 = vrot.slane %v4169, 1
    %v4171 = vadd.f32 %v4169, %v4170
    %v4180 = vcombine.low %v4129, %v4135
    %v4181 = vcombine.low %v4141, %v4147
    %v4182 = vcombine.low %v4153, %v4159
    %v4183 = vcombine.low %v4165, %v4171
    %v4185 = vunpack.c.l.s4 1966171168
    %v4186 = vunpack.c.0.s8 %v4185
    %v4187 = vlaneseq
    %v4188 = vshrl.u32 %v4187, 7
    %v4189 = vsub.s32 %v4186, %v4188
    %v4190 = vrot.slane %v4180, %v4189
    %v4192 = vunpack.c.l.s4 1966171168
    %v4193 = vunpack.c.0.s8 %v4192
    %v4194 = vlaneseq
    %v4195 = vshrl.u32 %v4194, 7
    %v4196 = vsub.s32 %v4193, %v4195
    %v4197 = vrot.slane %v4181, %v4196
    %v4199 = vunpack.c.l.s4 1966171168
    %v4200 = vunpack.c.0.s8 %v4199
    %v4201 = vlaneseq
    %v4202 = vshrl.u32 %v4201, 7
    %v4203 = vsub.s32 %v4200, %v4202
    %v4204 = vrot.slane %v4182, %v4203
    %v4206 = vunpack.c.l.s4 1966171168
    %v4207 = vunpack.c.0.s8 %v4206
    %v4208 = vlaneseq
    %v4209 = vshrl.u32 %v4208, 7
    %v4210 = vsub.s32 %v4207, %v4209
    %v4211 = vrot.slane %v4183, %v4210
    %v4212 = vcombine.low %v4190, %v4197
    %v4213 = vcombine.low %v4204, %v4211
    %v4215 = vunpack.c.l.s4 1966171168
    %v4216 = vunpack.c.0.s8 %v4215
    %v4217 = vlaneseq
    %v4218 = vshrl.u32 %v4217, 7
    %v4219 = vsub.s32 %v4216, %v4218
    %v4220 = vrot.slane %v4212, %v4219
    %v4222 = vunpack.c.l.s4 1966171168
    %v4223 = vunpack.c.0.s8 %v4222
    %v4224 = vlaneseq
    %v4225 = vshrl.u32 %v4224, 7
    %v4226 = vsub.s32 %v4223, %v4225
    %v4227 = vrot.slane %v4213, %v4226
    %v4228 = vcombine.low %v4220, %v4227
    %s4230 = scalar_lea.vmem [#allocation7], 1
    %4231 = vst [vmem:[%s4230] ss:$2 sm:$0xff] %v4228
    // Predicated region
    $region18: #{tpu_custom_call.1} parent=1 // pred_check
      _
    $region19: #{tpu_custom_call.1} parent=1 // pred_check_branch
      %4233 = sbr.rel (0) target = $region21
    $region20: #{tpu_custom_call.1} parent=1 // pred_region
      %s4235 = ssub.s32 256, 256
      %4236 = vsyncadd [#allocation4], %s4235
      %s4238 = sshll.u32 [#allocation7], 4
      %s4239 = int_to_ptr.vmem [resolvable:$true] %s4238
      %4241 = dma.vmem_to_hbm [thread:$0]  %s4239, 256, %s2, [#allocation4]
    $region21: #{tpu_custom_call.1} parent=1 // pred_fallthru
      _
    // Predicated region
    $region22: #{tpu_custom_call.1} parent=1 // pred_check
      _
    $region23: #{tpu_custom_call.1} parent=1 // pred_check_branch
      %4243 = sbr.rel (0) target = $region25
    $region24: #{tpu_custom_call.1} parent=1 // pred_region
      %4244 = dma.done [#allocation4], 256
    $region25: #{tpu_custom_call.1} parent=1 // pred_fallthru
      _
    %4245 = vsyncpa [#allocation3], 1
    %4246 = vsyncpa [#allocation6], 1
    %4247 = vsyncpa [#allocation4], 1

</llo_original>
